<compile_context>
chip_gen: v7x
topology: tpu7x:2x2x1
jax: 0.10.0
libtpu: 0.0.40
codegen_flags: <defaults>
</compile_context>

<pallas_src>
import jax
import jax.numpy as jnp
from jax import lax
from jax.experimental import pallas as pl
from jax.experimental.pallas import tpu as pltpu


IMG_PER_TILE = 8                    # images per row tile
TILE_R = IMG_PER_TILE * 196         # 1568 rows: multiple of 16 (bf16) and 8


# ----------------------------- Pallas kernels ------------------------------

def conv_pool_kernel(p_ref, w_ref, b_ref, out_ref):
    """Block-diagonal conv matmul + maxpool(2) + bias + sigmoid.

    p_ref:  (TILE_R, 128) bf16  im2col patches, 4 pool phases concatenated on lanes
    w_ref:  (128, 64)     bf16  block-diagonal conv weight (4 x 32x16 blocks)
    b_ref:  (1, 16)       f32   conv bias
    out_ref:(TILE_R, 16)  f32   pooled, sigmoid-activated features
    """
    m = jnp.dot(p_ref[...], w_ref[...], preferred_element_type=jnp.float32)  # (T,64)
    mx = jnp.maximum(jnp.maximum(m[:, 0:16], m[:, 16:32]),
                     jnp.maximum(m[:, 32:48], m[:, 48:64]))                  # maxpool
    z = mx + b_ref[...]                                                      # (T,16)
    e = jnp.exp(-z)                                                          # EUP
    out_ref[...] = pl.reciprocal(1.0 + e, approx=True)                       # sigmoid


def fc_kernel(f_ref, w_ref, b_ref, out_ref):
    """Linear layer: (N,3136) bf16 @ (3136,128) bf16 -> f32, + bias (lane-padded)."""
    out_ref[...] = (
        jnp.dot(f_ref[...], w_ref[...], preferred_element_type=jnp.float32)
        + b_ref[...]
    )


# ----------------------------- JAX glue / wrapper ---------------------------

def _im2col_pool_phases(x):
    """x: (N,1,28,28) f32 -> P: (N*196, 128) f32.

    P[n*196 + i*14 + j, p*32 + (dy*5+dx)] = x_pad[n, 2i+a+dy, 2j+b+dx], p = 2a+b
    (per-phase taps zero-padded 25 -> 32 lanes to keep 32-lane block alignment).
    """
    N = x.shape[0]
    xp = jnp.pad(x[:, 0], ((0, 0), (2, 2), (2, 2)))  # (N,32,32)
    slabs = []
    for a in range(2):
        for b in range(2):
            cols = []
            for dy in range(5):
                for dx in range(5):
                    # strides of 2 pick out conv pixels (2i+a+dy, 2j+b+dx)
                    cols.append(xp[:, a + dy:a + dy + 27:2, b + dx:b + dx + 27:2])
            blk = jnp.stack(cols, axis=-1).reshape(N * 196, 25)
            slabs.append(jnp.pad(blk, ((0, 0), (0, 7))))    # (R,32)
    return jnp.concatenate(slabs, axis=-1)                  # (R,128)


def prepare_params(w_conv, b_conv, w_fc, b_fc):
    """One-time parameter layout transforms (hoisted out of the forward pass)."""
    # conv taps (25,16), placed on the 4 diagonal blocks of a (128,64) weight
    wc25 = w_conv[:, 0].reshape(16, 25).T                       # (25,16)
    w_bd = jnp.zeros((128, 64), jnp.float32)
    for p in range(4):
        w_bd = w_bd.at[p * 32:p * 32 + 25, p * 16:(p + 1) * 16].set(wc25)
    w_bd = w_bd.astype(jnp.bfloat16)
    bc = b_conv.reshape(1, 16).astype(jnp.float32)
    # FC weight: (10, C*14*14) -> rows in (i,j,c) order, out-lanes padded 10 -> 128
    wk = jnp.transpose(w_fc.reshape(10, 16, 14, 14), (2, 3, 1, 0)).reshape(3136, 10)
    wk = jnp.pad(wk, ((0, 0), (0, 118))).astype(jnp.bfloat16)   # (3136,128)
    bk = jnp.pad(b_fc.reshape(1, 10), ((0, 0), (0, 118))).astype(jnp.float32)
    return w_bd, bc, wk, bk


def lenet_forward(x, w_bd, bc, wk, bk):
    """x: (N,1,28,28) f32; params from prepare_params."""
    N = x.shape[0]
    n_pad = (-N) % IMG_PER_TILE
    if n_pad:
        x = jnp.pad(x, ((0, n_pad), (0, 0), (0, 0), (0, 0)))
    N_pad = N + n_pad
    R_pad = N_pad * 196

    # glue: layout only (im2col + bf16 cast of the matmul operand)
    P = _im2col_pool_phases(x).astype(jnp.bfloat16)             # (R_pad, 128)

    # --- kernel A: conv (block-diag matmul) + maxpool + bias + sigmoid ---
    pooled = pl.pallas_call(
        conv_pool_kernel,
        out_shape=jax.ShapeDtypeStruct((R_pad, 16), jnp.float32),
        grid=(R_pad // TILE_R,),
        in_specs=[
            pl.BlockSpec((TILE_R, 128), lambda i: (i, 0)),
            pl.BlockSpec((128, 64), lambda i: (0, 0)),
            pl.BlockSpec((1, 16), lambda i: (0, 0)),
        ],
        out_specs=pl.BlockSpec((TILE_R, 16), lambda i: (i, 0)),
        compiler_params=pltpu.CompilerParams(
            dimension_semantics=("parallel",),        # megacore-shardable on v7x
            vmem_limit_bytes=32 * 1024 * 1024,        # explicit; tiles use ~1.5 MiB
        ),
    )(P, w_bd, bc)

    # glue: (N*196,16) -> (N,3136) is a contiguous row-major view (free in HBM)
    feats = pooled.reshape(N_pad, 3136).astype(jnp.bfloat16)

    # --- kernel B: linear with lane-dense (128-wide) output ---
    out = pl.pallas_call(
        fc_kernel,
        out_shape=jax.ShapeDtypeStruct((N_pad, 128), jnp.float32),
        grid=(1,),
        in_specs=[
            pl.BlockSpec((N_pad, 3136), lambda i: (0, 0)),
            pl.BlockSpec((3136, 128), lambda i: (0, 0)),
            pl.BlockSpec((1, 128), lambda i: (0, 0)),
        ],
        out_specs=pl.BlockSpec((N_pad, 128), lambda i: (0, 0)),
        compiler_params=pltpu.CompilerParams(dimension_semantics=("arbitrary",)),
    )(feats, wk, bk)

    return out[:N, :10]


def lenet_reference(x, w_conv, b_conv, w_fc, b_fc):
    """Pure-JAX replica of the PyTorch forward (NCHW), for a correctness check."""
    N = x.shape[0]
    y = lax.conv_general_dilated(
        x, w_conv, window_strides=(1, 1), padding=((2, 2), (2, 2)),
        dimension_numbers=("NCHW", "OIHW", "NCHW"),
        precision=lax.Precision.HIGHEST,
    ) + b_conv.reshape(1, 16, 1, 1)
    y = jax.nn.sigmoid(y)                                    # (N,16,28,28)
    y = y.reshape(N, 16, 14, 2, 14, 2).max(axis=(3, 5))       # maxpool 2x2
    flat = y.reshape(N, 16 * 14 * 14)                         # (C,H,W) flatten order
    return jnp.dot(flat, w_fc.T, precision=lax.Precision.HIGHEST) + b_fc


# --------------------------------- main -------------------------------------

if __name__ == "__main__":
    key = jax.random.PRNGKey(0)
    k_x, k_wc, k_bc, k_wf, k_bf = jax.random.split(key, 5)

    N = 2  # Linear(16*14*14, 10) pins the spatial size to 28x28
    x = jax.random.normal(k_x, (N, 1, 28, 28), jnp.float32)

    # deterministic synthetic parameters (PyTorch-convention shapes)
    w_conv = 0.1 * jax.random.normal(k_wc, (16, 1, 5, 5), jnp.float32)
    b_conv = 0.1 * jax.random.normal(k_bc, (16,), jnp.float32)
    w_fc = 0.02 * jax.random.normal(k_wf, (10, 16 * 14 * 14), jnp.float32)
    b_fc = 0.02 * jax.random.normal(k_bf, (10,), jnp.float32)

    # parameter layout transforms done once, outside the forward pass
    w_bd, bc, wk, bk = prepare_params(w_conv, b_conv, w_fc, b_fc)

    fwd = jax.jit(lenet_forward)
    out = fwd(x, w_bd, bc, wk, bk)
    out = jax.block_until_ready(out)

    ref = lenet_reference(x, w_conv, b_conv, w_fc, b_fc)
    assert out.shape == (N, 10) and out.dtype == jnp.float32
    assert jnp.allclose(out, ref, rtol=1e-2, atol=1e-2), (out, ref)

    print("KERNEL_OK")
</pallas_src>

<mosaic_0001>
module attributes {stable_mosaic.version = 11 : i64} {
  func.func @conv_pool_kernel(%arg0: i32, %arg1: memref<1568x128xbf16, #tpu.memory_space<vmem>>, %arg2: memref<128x64xbf16, #tpu.memory_space<vmem>>, %arg3: memref<1x16xf32, #tpu.memory_space<vmem>>, %arg4: memref<1568x16xf32, #tpu.memory_space<vmem>>) attributes {dimension_semantics = [#tpu.dimension_semantics<parallel>], iteration_bounds = array<i64: 1>, scalar_prefetch = 0 : i64, scratch_operands = 0 : i64, tpu.core_type = #tpu.core_type<tc>, window_params = [{transform_indices = @transform_0, window_bounds = array<i64: 1568, 128>}, {pipeline_mode = #tpu.pipeline_mode<synchronous>, transform_indices = @transform_1, window_bounds = array<i64: 128, 64>}, {pipeline_mode = #tpu.pipeline_mode<synchronous>, transform_indices = @transform_2, window_bounds = array<i64: 1, 16>}, {transform_indices = @transform_3, window_bounds = array<i64: 1568, 16>}]} {
    %c0 = arith.constant 0 : index
    %c0_0 = arith.constant 0 : index
    %0 = vector.load %arg1[%c0, %c0_0] : memref<1568x128xbf16, #tpu.memory_space<vmem>>, vector<1568x128xbf16>
    %c0_1 = arith.constant 0 : index
    %c0_2 = arith.constant 0 : index
    %1 = vector.load %arg2[%c0_1, %c0_2] : memref<128x64xbf16, #tpu.memory_space<vmem>>, vector<128x64xbf16>
    %cst = arith.constant dense<0.000000e+00> : vector<1568x64xf32>
    %2 = tpu.matmul %0, %1, %cst {dimension_numbers = #tpu.dot_dimension_numbers<[1], [0], [0], [1], [0, 0, 1, 1], [], []>} : vector<1568x128xbf16>, vector<128x64xbf16>, vector<1568x64xf32> -> vector<1568x64xf32>
    %3 = vector.extract_strided_slice %2 {offsets = [0, 0], sizes = [1568, 16], strides = [1, 1]} : vector<1568x64xf32> to vector<1568x16xf32>
    %4 = vector.extract_strided_slice %2 {offsets = [0, 16], sizes = [1568, 16], strides = [1, 1]} : vector<1568x64xf32> to vector<1568x16xf32>
    %5 = arith.maximumf %3, %4 : vector<1568x16xf32>
    %6 = vector.extract_strided_slice %2 {offsets = [0, 32], sizes = [1568, 16], strides = [1, 1]} : vector<1568x64xf32> to vector<1568x16xf32>
    %7 = vector.extract_strided_slice %2 {offsets = [0, 48], sizes = [1568, 16], strides = [1, 1]} : vector<1568x64xf32> to vector<1568x16xf32>
    %8 = arith.maximumf %6, %7 : vector<1568x16xf32>
    %9 = arith.maximumf %5, %8 : vector<1568x16xf32>
    %c0_3 = arith.constant 0 : index
    %c0_4 = arith.constant 0 : index
    %10 = vector.load %arg3[%c0_3, %c0_4] : memref<1x16xf32, #tpu.memory_space<vmem>>, vector<1x16xf32>
    %11 = vector.broadcast %10 : vector<1x16xf32> to vector<1568x16xf32>
    %12 = arith.addf %9, %11 : vector<1568x16xf32>
    %cst_5 = arith.constant 0.000000e+00 : f32
    %13 = vector.broadcast %cst_5 : f32 to vector<1568x16xf32>
    %14 = arith.subf %13, %12 : vector<1568x16xf32>
    %15 = math.exp %14 : vector<1568x16xf32>
    %cst_6 = arith.constant 1.000000e+00 : f32
    %16 = vector.broadcast %cst_6 : f32 to vector<1568x16xf32>
    %17 = arith.addf %16, %15 : vector<1568x16xf32>
    %18 = tpu.reciprocal %17 {approx = true} : vector<1568x16xf32> -> vector<1568x16xf32>
    %c0_7 = arith.constant 0 : index
    %c0_8 = arith.constant 0 : index
    %19 = vector.load %arg4[%c0_7, %c0_8] : memref<1568x16xf32, #tpu.memory_space<vmem>>, vector<1568x16xf32>
    tpu.vector_store %arg4[%c0_7, %c0_8], %18 {strides = array<i32>} : memref<1568x16xf32, #tpu.memory_space<vmem>>, vector<1568x16xf32>,
    return
  }
  func.func @transform_0(%arg0: i32) -> (i32, i32) {
    %c0_i32 = arith.constant 0 : i32
    %c0_i32_0 = arith.constant 0 : i32
    return %arg0, %c0_i32 : i32, i32
  }
  func.func @transform_1(%arg0: i32) -> (i32, i32) {
    %c0_i32 = arith.constant 0 : i32
    %c0_i32_0 = arith.constant 0 : i32
    %c0_i32_1 = arith.constant 0 : i32
    return %c0_i32, %c0_i32_0 : i32, i32
  }
  func.func @transform_2(%arg0: i32) -> (i32, i32) {
    %c0_i32 = arith.constant 0 : i32
    %c0_i32_0 = arith.constant 0 : i32
    %c0_i32_1 = arith.constant 0 : i32
    return %c0_i32, %c0_i32_0 : i32, i32
  }
  func.func @transform_3(%arg0: i32) -> (i32, i32) {
    %c0_i32 = arith.constant 0 : i32
    %c0_i32_0 = arith.constant 0 : i32
    return %arg0, %c0_i32 : i32, i32
  }
}

module attributes {stable_mosaic.version = 11 : i64} {
  func.func @fc_kernel(%arg0: i32, %arg1: memref<8x3136xbf16, #tpu.memory_space<vmem>>, %arg2: memref<3136x128xbf16, #tpu.memory_space<vmem>>, %arg3: memref<1x128xf32, #tpu.memory_space<vmem>>, %arg4: memref<8x128xf32, #tpu.memory_space<vmem>>) attributes {dimension_semantics = [#tpu.dimension_semantics<arbitrary>], iteration_bounds = array<i64: 1>, scalar_prefetch = 0 : i64, scratch_operands = 0 : i64, tpu.core_type = #tpu.core_type<tc>, window_params = [{pipeline_mode = #tpu.pipeline_mode<synchronous>, transform_indices = @transform_0, window_bounds = array<i64: 8, 3136>}, {pipeline_mode = #tpu.pipeline_mode<synchronous>, transform_indices = @transform_1, window_bounds = array<i64: 3136, 128>}, {pipeline_mode = #tpu.pipeline_mode<synchronous>, transform_indices = @transform_2, window_bounds = array<i64: 1, 128>}, {pipeline_mode = #tpu.pipeline_mode<synchronous>, transform_indices = @transform_3, window_bounds = array<i64: 8, 128>}]} {
    %c0 = arith.constant 0 : index
    %c0_0 = arith.constant 0 : index
    %0 = vector.load %arg1[%c0, %c0_0] : memref<8x3136xbf16, #tpu.memory_space<vmem>>, vector<8x3136xbf16>
    %c0_1 = arith.constant 0 : index
    %c0_2 = arith.constant 0 : index
    %1 = vector.load %arg2[%c0_1, %c0_2] : memref<3136x128xbf16, #tpu.memory_space<vmem>>, vector<3136x128xbf16>
    %cst = arith.constant dense<0.000000e+00> : vector<8x128xf32>
    %2 = tpu.matmul %0, %1, %cst {dimension_numbers = #tpu.dot_dimension_numbers<[1], [0], [0], [1], [0, 0, 1, 1], [], []>} : vector<8x3136xbf16>, vector<3136x128xbf16>, vector<8x128xf32> -> vector<8x128xf32>
    %c0_3 = arith.constant 0 : index
    %c0_4 = arith.constant 0 : index
    %3 = vector.load %arg3[%c0_3, %c0_4] : memref<1x128xf32, #tpu.memory_space<vmem>>, vector<1x128xf32>
    %4 = vector.broadcast %3 : vector<1x128xf32> to vector<8x128xf32>
    %5 = arith.addf %2, %4 : vector<8x128xf32>
    %c0_5 = arith.constant 0 : index
    %c0_6 = arith.constant 0 : index
    %6 = vector.load %arg4[%c0_5, %c0_6] : memref<8x128xf32, #tpu.memory_space<vmem>>, vector<8x128xf32>
    tpu.vector_store %arg4[%c0_5, %c0_6], %5 {strides = array<i32>} : memref<8x128xf32, #tpu.memory_space<vmem>>, vector<8x128xf32>,
    return
  }
  func.func @transform_0(%arg0: i32) -> (i32, i32) {
    %c0_i32 = arith.constant 0 : i32
    %c0_i32_0 = arith.constant 0 : i32
    %c0_i32_1 = arith.constant 0 : i32
    return %c0_i32, %c0_i32_0 : i32, i32
  }
  func.func @transform_1(%arg0: i32) -> (i32, i32) {
    %c0_i32 = arith.constant 0 : i32
    %c0_i32_0 = arith.constant 0 : i32
    %c0_i32_1 = arith.constant 0 : i32
    return %c0_i32, %c0_i32_0 : i32, i32
  }
  func.func @transform_2(%arg0: i32) -> (i32, i32) {
    %c0_i32 = arith.constant 0 : i32
    %c0_i32_0 = arith.constant 0 : i32
    %c0_i32_1 = arith.constant 0 : i32
    return %c0_i32, %c0_i32_0 : i32, i32
  }
  func.func @transform_3(%arg0: i32) -> (i32, i32) {
    %c0_i32 = arith.constant 0 : i32
    %c0_i32_0 = arith.constant 0 : i32
    %c0_i32_1 = arith.constant 0 : i32
    return %c0_i32, %c0_i32_0 : i32, i32
  }
}

</mosaic_0001>

<llo_original>
// kernel: lenet_forward.2
$region0: #{lenet_forward.2}
  #allocation0 [shape = 'u32[]', space=smem, size = 0x4, offset = 0x4, fixed_abs, tag = 'smem constant byte address 0x4 - core index']
  #allocation1 [shape = 'u32[144,128]{1,0:T(1,128)}', space=vmem, size = 0x12000, scoped, tag = 'internal scratch']
  %s0 = inlined_call_operand.vmem [shape: bf16[1568,128], index: 0, kind: input, shape index: {}]
  %s1 = inlined_call_operand.vmem [shape: bf16[128,64], index: 1, kind: input, shape index: {}]
  %s2 = inlined_call_operand.vmem [shape: f32[1,16], index: 2, kind: input, shape index: {}]
  %s3 = inlined_call_operand.vmem [shape: f32[1568,16], index: 3, kind: output, shape index: {}]
  %s4 = sld [smem:[#allocation0]]
  $region22: #{lenet_forward.2} parent=0
    _
  %s6 = ssub.s32 1, %s4
  %s7 = scalar_select 0, %s6, %s4
  // Predicated region
  $region2: #{lenet_forward.2} parent=0 // pred_check
    _
  $region3: #{lenet_forward.2} parent=0 // pred_check_branch
    %9 = sbr.rel (0) target = $region5
  $region4: #{lenet_forward.2} parent=0 // pred_region
    _
  $region5: #{lenet_forward.2} parent=0 // pred_fallthru
    _
  // Predicated region
  $region6: #{lenet_forward.2} parent=0 // pred_check
    _
  $region7: #{lenet_forward.2} parent=0 // pred_check_branch
    %11 = sbr.rel (0) target = $region9
  $region8: #{lenet_forward.2} parent=0 // pred_region
    _
  $region9: #{lenet_forward.2} parent=0 // pred_fallthru
    _
  // Predicated region
  $region10: #{lenet_forward.2} parent=0 // pred_check
    _
  $region11: #{lenet_forward.2} parent=0 // pred_check_branch
    %13 = sbr.rel (0) target = $region13
  $region12: #{lenet_forward.2} parent=0 // pred_region
    _
  $region13: #{lenet_forward.2} parent=0 // pred_fallthru
    _
  %v15 = vld [vmem:[%s0] sm:$0xf]
  %v16 = vld [vmem:[%s0 + $0x4] sm:$0xf]
  %v17 = vld [vmem:[%s0 + $0x8] sm:$0xf]
  %v18 = vld [vmem:[%s0 + $0xc] sm:$0xf]
  %v19 = vld [vmem:[%s0 + $0x10] sm:$0xf]
  %v20 = vld [vmem:[%s0 + $0x14] sm:$0xf]
  %v21 = vld [vmem:[%s0 + $0x18] sm:$0xf]
  %v22 = vld [vmem:[%s0 + $0x1c] sm:$0xf]
  %v23 = vld [vmem:[%s0 + $0x20] sm:$0xf]
  %v24 = vld [vmem:[%s0 + $0x24] sm:$0xf]
  %v25 = vld [vmem:[%s0 + $0x28] sm:$0xf]
  %v26 = vld [vmem:[%s0 + $0x2c] sm:$0xf]
  %v27 = vld [vmem:[%s0 + $0x30] sm:$0xf]
  %v28 = vld [vmem:[%s0 + $0x34] sm:$0xf]
  %v29 = vld [vmem:[%s0 + $0x38] sm:$0xf]
  %v30 = vld [vmem:[%s0 + $0x3c] sm:$0xf]
  %v31 = vld [vmem:[%s0 + $0x40] sm:$0xf]
  %v32 = vld [vmem:[%s0 + $0x44] sm:$0xf]
  %v33 = vld [vmem:[%s0 + $0x48] sm:$0xf]
  %v34 = vld [vmem:[%s0 + $0x4c] sm:$0xf]
  %v35 = vld [vmem:[%s0 + $0x50] sm:$0xf]
  %v36 = vld [vmem:[%s0 + $0x54] sm:$0xf]
  %v37 = vld [vmem:[%s0 + $0x58] sm:$0xf]
  %v38 = vld [vmem:[%s0 + $0x5c] sm:$0xf]
  %v39 = vld [vmem:[%s0 + $0x60] sm:$0xf]
  %v40 = vld [vmem:[%s0 + $0x64] sm:$0xf]
  %v41 = vld [vmem:[%s0 + $0x68] sm:$0xf]
  %v42 = vld [vmem:[%s0 + $0x6c] sm:$0xf]
  %v43 = vld [vmem:[%s0 + $0x70] sm:$0xf]
  %v44 = vld [vmem:[%s0 + $0x74] sm:$0xf]
  %v45 = vld [vmem:[%s0 + $0x78] sm:$0xf]
  %v46 = vld [vmem:[%s0 + $0x7c] sm:$0xf]
  %v47 = vld [vmem:[%s0 + $0x80] sm:$0xf]
  %v48 = vld [vmem:[%s0 + $0x84] sm:$0xf]
  %v49 = vld [vmem:[%s0 + $0x88] sm:$0xf]
  %v50 = vld [vmem:[%s0 + $0x8c] sm:$0xf]
  %v51 = vld [vmem:[%s0 + $0x90] sm:$0xf]
  %v52 = vld [vmem:[%s0 + $0x94] sm:$0xf]
  %v53 = vld [vmem:[%s0 + $0x98] sm:$0xf]
  %v54 = vld [vmem:[%s0 + $0x9c] sm:$0xf]
  %v55 = vld [vmem:[%s0 + $0xa0] sm:$0xf]
  %v56 = vld [vmem:[%s0 + $0xa4] sm:$0xf]
  %v57 = vld [vmem:[%s0 + $0xa8] sm:$0xf]
  %v58 = vld [vmem:[%s0 + $0xac] sm:$0xf]
  %v59 = vld [vmem:[%s0 + $0xb0] sm:$0xf]
  %v60 = vld [vmem:[%s0 + $0xb4] sm:$0xf]
  %v61 = vld [vmem:[%s0 + $0xb8] sm:$0xf]
  %v62 = vld [vmem:[%s0 + $0xbc] sm:$0xf]
  %v63 = vld [vmem:[%s0 + $0xc0] sm:$0xf]
  %v64 = vld [vmem:[%s0 + $0xc4] sm:$0xf]
  %v65 = vld [vmem:[%s0 + $0xc8] sm:$0xf]
  %v66 = vld [vmem:[%s0 + $0xcc] sm:$0xf]
  %v67 = vld [vmem:[%s0 + $0xd0] sm:$0xf]
  %v68 = vld [vmem:[%s0 + $0xd4] sm:$0xf]
  %v69 = vld [vmem:[%s0 + $0xd8] sm:$0xf]
  %v70 = vld [vmem:[%s0 + $0xdc] sm:$0xf]
  %v71 = vld [vmem:[%s0 + $0xe0] sm:$0xf]
  %v72 = vld [vmem:[%s0 + $0xe4] sm:$0xf]
  %v73 = vld [vmem:[%s0 + $0xe8] sm:$0xf]
  %v74 = vld [vmem:[%s0 + $0xec] sm:$0xf]
  %v75 = vld [vmem:[%s0 + $0xf0] sm:$0xf]
  %v76 = vld [vmem:[%s0 + $0xf4] sm:$0xf]
  %v77 = vld [vmem:[%s0 + $0xf8] sm:$0xf]
  %v78 = vld [vmem:[%s0 + $0xfc] sm:$0xf]
  %v79 = vld [vmem:[%s0 + $0x100] sm:$0xf]
  %v80 = vld [vmem:[%s0 + $0x104] sm:$0xf]
  %v81 = vld [vmem:[%s0 + $0x108] sm:$0xf]
  %v82 = vld [vmem:[%s0 + $0x10c] sm:$0xf]
  %v83 = vld [vmem:[%s0 + $0x110] sm:$0xf]
  %v84 = vld [vmem:[%s0 + $0x114] sm:$0xf]
  %v85 = vld [vmem:[%s0 + $0x118] sm:$0xf]
  %v86 = vld [vmem:[%s0 + $0x11c] sm:$0xf]
  %v87 = vld [vmem:[%s0 + $0x120] sm:$0xf]
  %v88 = vld [vmem:[%s0 + $0x124] sm:$0xf]
  %v89 = vld [vmem:[%s0 + $0x128] sm:$0xf]
  %v90 = vld [vmem:[%s0 + $0x12c] sm:$0xf]
  %v91 = vld [vmem:[%s0 + $0x130] sm:$0xf]
  %v92 = vld [vmem:[%s0 + $0x134] sm:$0xf]
  %v93 = vld [vmem:[%s0 + $0x138] sm:$0xf]
  %v94 = vld [vmem:[%s0 + $0x13c] sm:$0xf]
  %v95 = vld [vmem:[%s0 + $0x140] sm:$0xf]
  %v96 = vld [vmem:[%s0 + $0x144] sm:$0xf]
  %v97 = vld [vmem:[%s0 + $0x148] sm:$0xf]
  %v98 = vld [vmem:[%s0 + $0x14c] sm:$0xf]
  %v99 = vld [vmem:[%s0 + $0x150] sm:$0xf]
  %v100 = vld [vmem:[%s0 + $0x154] sm:$0xf]
  %v101 = vld [vmem:[%s0 + $0x158] sm:$0xf]
  %v102 = vld [vmem:[%s0 + $0x15c] sm:$0xf]
  %v103 = vld [vmem:[%s0 + $0x160] sm:$0xf]
  %v104 = vld [vmem:[%s0 + $0x164] sm:$0xf]
  %v105 = vld [vmem:[%s0 + $0x168] sm:$0xf]
  %v106 = vld [vmem:[%s0 + $0x16c] sm:$0xf]
  %v107 = vld [vmem:[%s0 + $0x170] sm:$0xf]
  %v108 = vld [vmem:[%s0 + $0x174] sm:$0xf]
  %v109 = vld [vmem:[%s0 + $0x178] sm:$0xf]
  %v110 = vld [vmem:[%s0 + $0x17c] sm:$0xf]
  %v111 = vld [vmem:[%s0 + $0x180] sm:$0xf]
  %v112 = vld [vmem:[%s0 + $0x184] sm:$0xf]
  %v113 = vld [vmem:[%s0 + $0x188] sm:$0xf]
  %v114 = vld [vmem:[%s0 + $0x18c] sm:$0xf]
  %v115 = vld [vmem:[%s0 + $0x190] sm:$0xf]
  %v116 = vld [vmem:[%s0 + $0x194] sm:$0xf]
  %v117 = vld [vmem:[%s0 + $0x198] sm:$0xf]
  %v118 = vld [vmem:[%s0 + $0x19c] sm:$0xf]
  %v119 = vld [vmem:[%s0 + $0x1a0] sm:$0xf]
  %v120 = vld [vmem:[%s0 + $0x1a4] sm:$0xf]
  %v121 = vld [vmem:[%s0 + $0x1a8] sm:$0xf]
  %v122 = vld [vmem:[%s0 + $0x1ac] sm:$0xf]
  %v123 = vld [vmem:[%s0 + $0x1b0] sm:$0xf]
  %v124 = vld [vmem:[%s0 + $0x1b4] sm:$0xf]
  %v125 = vld [vmem:[%s0 + $0x1b8] sm:$0xf]
  %v126 = vld [vmem:[%s0 + $0x1bc] sm:$0xf]
  %v127 = vld [vmem:[%s0 + $0x1c0] sm:$0xf]
  %v128 = vld [vmem:[%s0 + $0x1c4] sm:$0xf]
  %v129 = vld [vmem:[%s0 + $0x1c8] sm:$0xf]
  %v130 = vld [vmem:[%s0 + $0x1cc] sm:$0xf]
  %v131 = vld [vmem:[%s0 + $0x1d0] sm:$0xf]
  %v132 = vld [vmem:[%s0 + $0x1d4] sm:$0xf]
  %v133 = vld [vmem:[%s0 + $0x1d8] sm:$0xf]
  %v134 = vld [vmem:[%s0 + $0x1dc] sm:$0xf]
  %v135 = vld [vmem:[%s0 + $0x1e0] sm:$0xf]
  %v136 = vld [vmem:[%s0 + $0x1e4] sm:$0xf]
  %v137 = vld [vmem:[%s0 + $0x1e8] sm:$0xf]
  %v138 = vld [vmem:[%s0 + $0x1ec] sm:$0xf]
  %v139 = vld [vmem:[%s0 + $0x1f0] sm:$0xf]
  %v140 = vld [vmem:[%s0 + $0x1f4] sm:$0xf]
  %v141 = vld [vmem:[%s0 + $0x1f8] sm:$0xf]
  %v142 = vld [vmem:[%s0 + $0x1fc] sm:$0xf]
  %v143 = vld [vmem:[%s0 + $0x200] sm:$0xf]
  %v144 = vld [vmem:[%s0 + $0x204] sm:$0xf]
  %v145 = vld [vmem:[%s0 + $0x208] sm:$0xf]
  %v146 = vld [vmem:[%s0 + $0x20c] sm:$0xf]
  %v147 = vld [vmem:[%s0 + $0x210] sm:$0xf]
  %v148 = vld [vmem:[%s0 + $0x214] sm:$0xf]
  %v149 = vld [vmem:[%s0 + $0x218] sm:$0xf]
  %v150 = vld [vmem:[%s0 + $0x21c] sm:$0xf]
  %v151 = vld [vmem:[%s0 + $0x220] sm:$0xf]
  %v152 = vld [vmem:[%s0 + $0x224] sm:$0xf]
  %v153 = vld [vmem:[%s0 + $0x228] sm:$0xf]
  %v154 = vld [vmem:[%s0 + $0x22c] sm:$0xf]
  %v155 = vld [vmem:[%s0 + $0x230] sm:$0xf]
  %v156 = vld [vmem:[%s0 + $0x234] sm:$0xf]
  %v157 = vld [vmem:[%s0 + $0x238] sm:$0xf]
  %v158 = vld [vmem:[%s0 + $0x23c] sm:$0xf]
  %v159 = vld [vmem:[%s0 + $0x240] sm:$0xf]
  %v160 = vld [vmem:[%s0 + $0x244] sm:$0xf]
  %v161 = vld [vmem:[%s0 + $0x248] sm:$0xf]
  %v162 = vld [vmem:[%s0 + $0x24c] sm:$0xf]
  %v163 = vld [vmem:[%s0 + $0x250] sm:$0xf]
  %v164 = vld [vmem:[%s0 + $0x254] sm:$0xf]
  %v165 = vld [vmem:[%s0 + $0x258] sm:$0xf]
  %v166 = vld [vmem:[%s0 + $0x25c] sm:$0xf]
  %v167 = vld [vmem:[%s0 + $0x260] sm:$0xf]
  %v168 = vld [vmem:[%s0 + $0x264] sm:$0xf]
  %v169 = vld [vmem:[%s0 + $0x268] sm:$0xf]
  %v170 = vld [vmem:[%s0 + $0x26c] sm:$0xf]
  %v171 = vld [vmem:[%s0 + $0x270] sm:$0xf]
  %v172 = vld [vmem:[%s0 + $0x274] sm:$0xf]
  %v173 = vld [vmem:[%s0 + $0x278] sm:$0xf]
  %v174 = vld [vmem:[%s0 + $0x27c] sm:$0xf]
  %v175 = vld [vmem:[%s0 + $0x280] sm:$0xf]
  %v176 = vld [vmem:[%s0 + $0x284] sm:$0xf]
  %v177 = vld [vmem:[%s0 + $0x288] sm:$0xf]
  %v178 = vld [vmem:[%s0 + $0x28c] sm:$0xf]
  %v179 = vld [vmem:[%s0 + $0x290] sm:$0xf]
  %v180 = vld [vmem:[%s0 + $0x294] sm:$0xf]
  %v181 = vld [vmem:[%s0 + $0x298] sm:$0xf]
  %v182 = vld [vmem:[%s0 + $0x29c] sm:$0xf]
  %v183 = vld [vmem:[%s0 + $0x2a0] sm:$0xf]
  %v184 = vld [vmem:[%s0 + $0x2a4] sm:$0xf]
  %v185 = vld [vmem:[%s0 + $0x2a8] sm:$0xf]
  %v186 = vld [vmem:[%s0 + $0x2ac] sm:$0xf]
  %v187 = vld [vmem:[%s0 + $0x2b0] sm:$0xf]
  %v188 = vld [vmem:[%s0 + $0x2b4] sm:$0xf]
  %v189 = vld [vmem:[%s0 + $0x2b8] sm:$0xf]
  %v190 = vld [vmem:[%s0 + $0x2bc] sm:$0xf]
  %v191 = vld [vmem:[%s0 + $0x2c0] sm:$0xf]
  %v192 = vld [vmem:[%s0 + $0x2c4] sm:$0xf]
  %v193 = vld [vmem:[%s0 + $0x2c8] sm:$0xf]
  %v194 = vld [vmem:[%s0 + $0x2cc] sm:$0xf]
  %v195 = vld [vmem:[%s0 + $0x2d0] sm:$0xf]
  %v196 = vld [vmem:[%s0 + $0x2d4] sm:$0xf]
  %v197 = vld [vmem:[%s0 + $0x2d8] sm:$0xf]
  %v198 = vld [vmem:[%s0 + $0x2dc] sm:$0xf]
  %v199 = vld [vmem:[%s0 + $0x2e0] sm:$0xf]
  %v200 = vld [vmem:[%s0 + $0x2e4] sm:$0xf]
  %v201 = vld [vmem:[%s0 + $0x2e8] sm:$0xf]
  %v202 = vld [vmem:[%s0 + $0x2ec] sm:$0xf]
  %v203 = vld [vmem:[%s0 + $0x2f0] sm:$0xf]
  %v204 = vld [vmem:[%s0 + $0x2f4] sm:$0xf]
  %v205 = vld [vmem:[%s0 + $0x2f8] sm:$0xf]
  %v206 = vld [vmem:[%s0 + $0x2fc] sm:$0xf]
  %v207 = vld [vmem:[%s0 + $0x300] sm:$0xf]
  %v208 = vld [vmem:[%s0 + $0x304] sm:$0xf]
  %v209 = vld [vmem:[%s0 + $0x308] sm:$0xf]
  %v210 = vld [vmem:[%s0 + $0x30c] sm:$0xf]
  %v211 = vld [vmem:[%s1] sm:$0xf]
  %v212 = vld [vmem:[%s1 + $0x4] sm:$0xf]
  %v213 = vld [vmem:[%s1 + $0x8] sm:$0xf]
  %v214 = vld [vmem:[%s1 + $0xc] sm:$0xf]
  %v215 = vld [vmem:[%s1 + $0x10] sm:$0xf]
  %v216 = vld [vmem:[%s1 + $0x14] sm:$0xf]
  %v217 = vld [vmem:[%s1 + $0x18] sm:$0xf]
  %v218 = vld [vmem:[%s1 + $0x1c] sm:$0xf]
  %v219 = vld [vmem:[%s1 + $0x20] sm:$0xf]
  %v220 = vld [vmem:[%s1 + $0x24] sm:$0xf]
  %v221 = vld [vmem:[%s1 + $0x28] sm:$0xf]
  %v222 = vld [vmem:[%s1 + $0x2c] sm:$0xf]
  %v223 = vld [vmem:[%s1 + $0x30] sm:$0xf]
  %v224 = vld [vmem:[%s1 + $0x34] sm:$0xf]
  %v225 = vld [vmem:[%s1 + $0x38] sm:$0xf]
  %v226 = vld [vmem:[%s1 + $0x3c] sm:$0xf]
  %v423 = vunpack.c.l.b16 %v15
  %v424 = vunpack.c.l.b16 %v16
  %v425 = vunpack.c.l.b16 %v17
  %v426 = vunpack.c.l.b16 %v18
  %v427 = vunpack.c.l.b16 %v19
  %v428 = vunpack.c.l.b16 %v20
  %v429 = vunpack.c.l.b16 %v21
  %v430 = vunpack.c.l.b16 %v22
  %v431 = vunpack.c.l.b16 %v23
  %v432 = vunpack.c.l.b16 %v24
  %v433 = vunpack.c.l.b16 %v25
  %v434 = vunpack.c.l.b16 %v26
  %v435 = vunpack.c.l.b16 %v27
  %v436 = vunpack.c.l.b16 %v28
  %v437 = vunpack.c.l.b16 %v29
  %v438 = vunpack.c.l.b16 %v30
  %v439 = vunpack.c.l.b16 %v31
  %v440 = vunpack.c.l.b16 %v32
  %v441 = vunpack.c.l.b16 %v33
  %v442 = vunpack.c.l.b16 %v34
  %v443 = vunpack.c.l.b16 %v35
  %v444 = vunpack.c.l.b16 %v36
  %v445 = vunpack.c.l.b16 %v37
  %v446 = vunpack.c.l.b16 %v38
  %v447 = vunpack.c.l.b16 %v39
  %v448 = vunpack.c.l.b16 %v40
  %v449 = vunpack.c.l.b16 %v41
  %v450 = vunpack.c.l.b16 %v42
  %v451 = vunpack.c.l.b16 %v43
  %v452 = vunpack.c.l.b16 %v44
  %v453 = vunpack.c.l.b16 %v45
  %v454 = vunpack.c.l.b16 %v46
  %v455 = vunpack.c.l.b16 %v47
  %v456 = vunpack.c.l.b16 %v48
  %v457 = vunpack.c.l.b16 %v49
  %v458 = vunpack.c.l.b16 %v50
  %v459 = vunpack.c.l.b16 %v51
  %v460 = vunpack.c.l.b16 %v52
  %v461 = vunpack.c.l.b16 %v53
  %v462 = vunpack.c.l.b16 %v54
  %v463 = vunpack.c.l.b16 %v55
  %v464 = vunpack.c.l.b16 %v56
  %v465 = vunpack.c.l.b16 %v57
  %v466 = vunpack.c.l.b16 %v58
  %v467 = vunpack.c.l.b16 %v59
  %v468 = vunpack.c.l.b16 %v60
  %v469 = vunpack.c.l.b16 %v61
  %v470 = vunpack.c.l.b16 %v62
  %v471 = vunpack.c.l.b16 %v63
  %v472 = vunpack.c.l.b16 %v64
  %v473 = vunpack.c.l.b16 %v65
  %v474 = vunpack.c.l.b16 %v66
  %v475 = vunpack.c.l.b16 %v67
  %v476 = vunpack.c.l.b16 %v68
  %v477 = vunpack.c.l.b16 %v69
  %v478 = vunpack.c.l.b16 %v70
  %v479 = vunpack.c.l.b16 %v71
  %v480 = vunpack.c.l.b16 %v72
  %v481 = vunpack.c.l.b16 %v73
  %v482 = vunpack.c.l.b16 %v74
  %v483 = vunpack.c.l.b16 %v75
  %v484 = vunpack.c.l.b16 %v76
  %v485 = vunpack.c.l.b16 %v77
  %v486 = vunpack.c.l.b16 %v78
  %v487 = vunpack.c.l.b16 %v79
  %v488 = vunpack.c.l.b16 %v80
  %v489 = vunpack.c.l.b16 %v81
  %v490 = vunpack.c.l.b16 %v82
  %v491 = vunpack.c.l.b16 %v83
  %v492 = vunpack.c.l.b16 %v84
  %v493 = vunpack.c.l.b16 %v85
  %v494 = vunpack.c.l.b16 %v86
  %v495 = vunpack.c.l.b16 %v87
  %v496 = vunpack.c.l.b16 %v88
  %v497 = vunpack.c.l.b16 %v89
  %v498 = vunpack.c.l.b16 %v90
  %v499 = vunpack.c.l.b16 %v91
  %v500 = vunpack.c.l.b16 %v92
  %v501 = vunpack.c.l.b16 %v93
  %v502 = vunpack.c.l.b16 %v94
  %v503 = vunpack.c.l.b16 %v95
  %v504 = vunpack.c.l.b16 %v96
  %v505 = vunpack.c.l.b16 %v97
  %v506 = vunpack.c.l.b16 %v98
  %v507 = vunpack.c.l.b16 %v99
  %v508 = vunpack.c.l.b16 %v100
  %v509 = vunpack.c.l.b16 %v101
  %v510 = vunpack.c.l.b16 %v102
  %v511 = vunpack.c.l.b16 %v103
  %v512 = vunpack.c.l.b16 %v104
  %v513 = vunpack.c.l.b16 %v105
  %v514 = vunpack.c.l.b16 %v106
  %v515 = vunpack.c.l.b16 %v107
  %v516 = vunpack.c.l.b16 %v108
  %v517 = vunpack.c.l.b16 %v109
  %v518 = vunpack.c.l.b16 %v110
  %v519 = vunpack.c.l.b16 %v111
  %v520 = vunpack.c.l.b16 %v112
  %v521 = vunpack.c.l.b16 %v113
  %v522 = vunpack.c.l.b16 %v114
  %v523 = vunpack.c.l.b16 %v115
  %v524 = vunpack.c.l.b16 %v116
  %v525 = vunpack.c.l.b16 %v117
  %v526 = vunpack.c.l.b16 %v118
  %v527 = vunpack.c.l.b16 %v119
  %v528 = vunpack.c.l.b16 %v120
  %v529 = vunpack.c.l.b16 %v121
  %v530 = vunpack.c.l.b16 %v122
  %v531 = vunpack.c.l.b16 %v123
  %v532 = vunpack.c.l.b16 %v124
  %v533 = vunpack.c.l.b16 %v125
  %v534 = vunpack.c.l.b16 %v126
  %v535 = vunpack.c.l.b16 %v127
  %v536 = vunpack.c.l.b16 %v128
  %v537 = vunpack.c.l.b16 %v129
  %v538 = vunpack.c.l.b16 %v130
  %v539 = vunpack.c.l.b16 %v131
  %v540 = vunpack.c.l.b16 %v132
  %v541 = vunpack.c.l.b16 %v133
  %v542 = vunpack.c.l.b16 %v134
  %v543 = vunpack.c.l.b16 %v135
  %v544 = vunpack.c.l.b16 %v136
  %v545 = vunpack.c.l.b16 %v137
  %v546 = vunpack.c.l.b16 %v138
  %v547 = vunpack.c.l.b16 %v139
  %v548 = vunpack.c.l.b16 %v140
  %v549 = vunpack.c.l.b16 %v141
  %v550 = vunpack.c.l.b16 %v142
  %v551 = vunpack.c.l.b16 %v143
  %v552 = vunpack.c.l.b16 %v144
  %v553 = vunpack.c.l.b16 %v145
  %v554 = vunpack.c.l.b16 %v146
  %v555 = vunpack.c.l.b16 %v147
  %v556 = vunpack.c.l.b16 %v148
  %v557 = vunpack.c.l.b16 %v149
  %v558 = vunpack.c.l.b16 %v150
  %v559 = vunpack.c.l.b16 %v151
  %v560 = vunpack.c.l.b16 %v152
  %v561 = vunpack.c.l.b16 %v153
  %v562 = vunpack.c.l.b16 %v154
  %v563 = vunpack.c.l.b16 %v155
  %v564 = vunpack.c.l.b16 %v156
  %v565 = vunpack.c.l.b16 %v157
  %v566 = vunpack.c.l.b16 %v158
  %v567 = vunpack.c.l.b16 %v159
  %v568 = vunpack.c.l.b16 %v160
  %v569 = vunpack.c.l.b16 %v161
  %v570 = vunpack.c.l.b16 %v162
  %v571 = vunpack.c.l.b16 %v163
  %v572 = vunpack.c.l.b16 %v164
  %v573 = vunpack.c.l.b16 %v165
  %v574 = vunpack.c.l.b16 %v166
  %v575 = vunpack.c.l.b16 %v167
  %v576 = vunpack.c.l.b16 %v168
  %v577 = vunpack.c.l.b16 %v169
  %v578 = vunpack.c.l.b16 %v170
  %v579 = vunpack.c.l.b16 %v171
  %v580 = vunpack.c.l.b16 %v172
  %v581 = vunpack.c.l.b16 %v173
  %v582 = vunpack.c.l.b16 %v174
  %v583 = vunpack.c.l.b16 %v175
  %v584 = vunpack.c.l.b16 %v176
  %v585 = vunpack.c.l.b16 %v177
  %v586 = vunpack.c.l.b16 %v178
  %v587 = vunpack.c.l.b16 %v179
  %v588 = vunpack.c.l.b16 %v180
  %v589 = vunpack.c.l.b16 %v181
  %v590 = vunpack.c.l.b16 %v182
  %v591 = vunpack.c.l.b16 %v183
  %v592 = vunpack.c.l.b16 %v184
  %v593 = vunpack.c.l.b16 %v185
  %v594 = vunpack.c.l.b16 %v186
  %v595 = vunpack.c.l.b16 %v187
  %v596 = vunpack.c.l.b16 %v188
  %v597 = vunpack.c.l.b16 %v189
  %v598 = vunpack.c.l.b16 %v190
  %v599 = vunpack.c.l.b16 %v191
  %v600 = vunpack.c.l.b16 %v192
  %v601 = vunpack.c.l.b16 %v193
  %v602 = vunpack.c.l.b16 %v194
  %v603 = vunpack.c.l.b16 %v195
  %v604 = vunpack.c.l.b16 %v196
  %v605 = vunpack.c.l.b16 %v197
  %v606 = vunpack.c.l.b16 %v198
  %v607 = vunpack.c.l.b16 %v199
  %v608 = vunpack.c.l.b16 %v200
  %v609 = vunpack.c.l.b16 %v201
  %v610 = vunpack.c.l.b16 %v202
  %v611 = vunpack.c.l.b16 %v203
  %v612 = vunpack.c.l.b16 %v204
  %v613 = vunpack.c.l.b16 %v205
  %v614 = vunpack.c.l.b16 %v206
  %v615 = vunpack.c.l.b16 %v207
  %v616 = vunpack.c.l.b16 %v208
  %v617 = vunpack.c.l.b16 %v209
  %v618 = vunpack.c.l.b16 %v210
  %v619 = vpack.c.b16 %v424, %v423
  %v620 = vpack.c.b16 %v426, %v425
  %v621 = vpack.c.b16 %v428, %v427
  %v622 = vpack.c.b16 %v430, %v429
  %v623 = vpack.c.b16 %v432, %v431
  %v624 = vpack.c.b16 %v434, %v433
  %v625 = vpack.c.b16 %v436, %v435
  %v626 = vpack.c.b16 %v438, %v437
  %v627 = vpack.c.b16 %v440, %v439
  %v628 = vpack.c.b16 %v442, %v441
  %v629 = vpack.c.b16 %v444, %v443
  %v630 = vpack.c.b16 %v446, %v445
  %v631 = vpack.c.b16 %v448, %v447
  %v632 = vpack.c.b16 %v450, %v449
  %v633 = vpack.c.b16 %v452, %v451
  %v634 = vpack.c.b16 %v454, %v453
  %v635 = vpack.c.b16 %v456, %v455
  %v636 = vpack.c.b16 %v458, %v457
  %v637 = vpack.c.b16 %v460, %v459
  %v638 = vpack.c.b16 %v462, %v461
  %v639 = vpack.c.b16 %v464, %v463
  %v640 = vpack.c.b16 %v466, %v465
  %v641 = vpack.c.b16 %v468, %v467
  %v642 = vpack.c.b16 %v470, %v469
  %v643 = vpack.c.b16 %v472, %v471
  %v644 = vpack.c.b16 %v474, %v473
  %v645 = vpack.c.b16 %v476, %v475
  %v646 = vpack.c.b16 %v478, %v477
  %v647 = vpack.c.b16 %v480, %v479
  %v648 = vpack.c.b16 %v482, %v481
  %v649 = vpack.c.b16 %v484, %v483
  %v650 = vpack.c.b16 %v486, %v485
  %v651 = vpack.c.b16 %v488, %v487
  %v652 = vpack.c.b16 %v490, %v489
  %v653 = vpack.c.b16 %v492, %v491
  %v654 = vpack.c.b16 %v494, %v493
  %v655 = vpack.c.b16 %v496, %v495
  %v656 = vpack.c.b16 %v498, %v497
  %v657 = vpack.c.b16 %v500, %v499
  %v658 = vpack.c.b16 %v502, %v501
  %v659 = vpack.c.b16 %v504, %v503
  %v660 = vpack.c.b16 %v506, %v505
  %v661 = vpack.c.b16 %v508, %v507
  %v662 = vpack.c.b16 %v510, %v509
  %v663 = vpack.c.b16 %v512, %v511
  %v664 = vpack.c.b16 %v514, %v513
  %v665 = vpack.c.b16 %v516, %v515
  %v666 = vpack.c.b16 %v518, %v517
  %v667 = vpack.c.b16 %v520, %v519
  %v668 = vpack.c.b16 %v522, %v521
  %v669 = vpack.c.b16 %v524, %v523
  %v670 = vpack.c.b16 %v526, %v525
  %v671 = vpack.c.b16 %v528, %v527
  %v672 = vpack.c.b16 %v530, %v529
  %v673 = vpack.c.b16 %v532, %v531
  %v674 = vpack.c.b16 %v534, %v533
  %v675 = vpack.c.b16 %v536, %v535
  %v676 = vpack.c.b16 %v538, %v537
  %v677 = vpack.c.b16 %v540, %v539
  %v678 = vpack.c.b16 %v542, %v541
  %v679 = vpack.c.b16 %v544, %v543
  %v680 = vpack.c.b16 %v546, %v545
  %v681 = vpack.c.b16 %v548, %v547
  %v682 = vpack.c.b16 %v550, %v549
  %v683 = vpack.c.b16 %v552, %v551
  %v684 = vpack.c.b16 %v554, %v553
  %v685 = vpack.c.b16 %v556, %v555
  %v686 = vpack.c.b16 %v558, %v557
  %v687 = vpack.c.b16 %v560, %v559
  %v688 = vpack.c.b16 %v562, %v561
  %v689 = vpack.c.b16 %v564, %v563
  %v690 = vpack.c.b16 %v566, %v565
  %v691 = vpack.c.b16 %v568, %v567
  %v692 = vpack.c.b16 %v570, %v569
  %v693 = vpack.c.b16 %v572, %v571
  %v694 = vpack.c.b16 %v574, %v573
  %v695 = vpack.c.b16 %v576, %v575
  %v696 = vpack.c.b16 %v578, %v577
  %v697 = vpack.c.b16 %v580, %v579
  %v698 = vpack.c.b16 %v582, %v581
  %v699 = vpack.c.b16 %v584, %v583
  %v700 = vpack.c.b16 %v586, %v585
  %v701 = vpack.c.b16 %v588, %v587
  %v702 = vpack.c.b16 %v590, %v589
  %v703 = vpack.c.b16 %v592, %v591
  %v704 = vpack.c.b16 %v594, %v593
  %v705 = vpack.c.b16 %v596, %v595
  %v706 = vpack.c.b16 %v598, %v597
  %v707 = vpack.c.b16 %v600, %v599
  %v708 = vpack.c.b16 %v602, %v601
  %v709 = vpack.c.b16 %v604, %v603
  %v710 = vpack.c.b16 %v606, %v605
  %v711 = vpack.c.b16 %v608, %v607
  %v712 = vpack.c.b16 %v610, %v609
  %v713 = vpack.c.b16 %v612, %v611
  %v714 = vpack.c.b16 %v614, %v613
  %v715 = vpack.c.b16 %v616, %v615
  %v716 = vpack.c.b16 %v618, %v617
  %v831 = vunpack.c.l.b16 %v211
  %v832 = vunpack.c.l.b16 %v212
  %v833 = vunpack.c.l.b16 %v213
  %v834 = vunpack.c.l.b16 %v214
  %v835 = vunpack.c.l.b16 %v215
  %v836 = vunpack.c.l.b16 %v216
  %v837 = vunpack.c.l.b16 %v217
  %v838 = vunpack.c.l.b16 %v218
  %v839 = vunpack.c.l.b16 %v219
  %v840 = vunpack.c.l.b16 %v220
  %v841 = vunpack.c.l.b16 %v221
  %v842 = vunpack.c.l.b16 %v222
  %v843 = vunpack.c.l.b16 %v223
  %v844 = vunpack.c.l.b16 %v224
  %v845 = vunpack.c.l.b16 %v225
  %v846 = vunpack.c.l.b16 %v226
  %v847 = vpack.c.b16 %v832, %v831
  %v848 = vpack.c.b16 %v834, %v833
  %v849 = vpack.c.b16 %v836, %v835
  %v850 = vpack.c.b16 %v838, %v837
  %v851 = vpack.c.b16 %v840, %v839
  %v852 = vpack.c.b16 %v842, %v841
  %v853 = vpack.c.b16 %v844, %v843
  %v854 = vpack.c.b16 %v846, %v845
  %863 = vmatprep.subr.bf16.mxu0 0
  %864 = vmatpush1.bf16.msra.mxu0 %v847
  %865 = vmatprep.subr.bf16.mxu0 0
  %866 = vmatpush1.bf16.msra.mxu0 %v848
  %867 = vmatprep.subr.bf16.mxu0 0
  %868 = vmatpush1.bf16.msra.mxu0 %v849
  %869 = vmatprep.subr.bf16.mxu0 0
  %870 = vmatpush1.bf16.msra.mxu0 %v850
  %871 = vmatprep.subr.bf16.mxu0 0
  %872 = vmatpush1.bf16.msra.mxu0 %v851
  %873 = vmatprep.subr.bf16.mxu0 0
  %874 = vmatpush1.bf16.msra.mxu0 %v852
  %875 = vmatprep.subr.bf16.mxu0 0
  %876 = vmatpush1.bf16.msra.mxu0 %v853
  %877 = vmatprep.subr.bf16.mxu0 0
  %878 = vmatpush1.bf16.msra.mxu0 %v854
  %879 = vmatprep.subr.bf16.mxu0 0
  %880 = vmatpush1.bf16.msra.mxu0 0
  %881 = vmatprep.subr.bf16.mxu0 0
  %882 = vmatpush1.bf16.msra.mxu0 0
  %883 = vmatprep.subr.bf16.mxu0 0
  %884 = vmatpush1.bf16.msra.mxu0 0
  %885 = vmatprep.subr.bf16.mxu0 0
  %886 = vmatpush1.bf16.msra.mxu0 0
  %887 = vmatprep.subr.bf16.mxu0 0
  %888 = vmatpush1.bf16.msra.mxu0 0
  %889 = vmatprep.subr.bf16.mxu0 0
  %890 = vmatpush1.bf16.msra.mxu0 0
  %891 = vmatprep.subr.bf16.mxu0 0
  %892 = vmatpush1.bf16.msra.mxu0 0
  %893 = vmatprep.subr.bf16.mxu0 0
  %894 = vmatpush1.bf16.msra.mxu0 0
  %895 = vmatprep.mubr.bf16.mxu0 0
  %896 = vmatmul.mubr.bf16.gmra.mrb[0].mxu0 %v619
  %v897 = vpop.f32.mrb[0].mxu0
  %v898 = vadd.f32 0.0, %v897
  %v899 = vpop.f32.mrb[0].mxu0
  %v900 = vpop.f32.mrb[0].mxu0
  %v901 = vadd.f32 0.0, %v900
  %v902 = vpop.f32.mrb[0].mxu0
  %903 = vmatprep.mubr.bf16.mxu0 0
  %904 = vmatmul.mubr.bf16.gmra.mrb[0].mxu0 %v620
  %v905 = vpop.f32.mrb[0].mxu0
  %v906 = vadd.f32 0.0, %v905
  %v907 = vpop.f32.mrb[0].mxu0
  %v908 = vpop.f32.mrb[0].mxu0
  %v909 = vadd.f32 0.0, %v908
  %v910 = vpop.f32.mrb[0].mxu0
  %911 = vmatprep.mubr.bf16.mxu0 0
  %912 = vmatmul.mubr.bf16.gmra.mrb[0].mxu0 %v621
  %v913 = vpop.f32.mrb[0].mxu0
  %v914 = vadd.f32 0.0, %v913
  %v915 = vpop.f32.mrb[0].mxu0
  %v916 = vpop.f32.mrb[0].mxu0
  %v917 = vadd.f32 0.0, %v916
  %v918 = vpop.f32.mrb[0].mxu0
  %919 = vmatprep.mubr.bf16.mxu0 0
  %920 = vmatmul.mubr.bf16.gmra.mrb[0].mxu0 %v622
  %v921 = vpop.f32.mrb[0].mxu0
  %v922 = vadd.f32 0.0, %v921
  %v923 = vpop.f32.mrb[0].mxu0
  %v924 = vpop.f32.mrb[0].mxu0
  %v925 = vadd.f32 0.0, %v924
  %v926 = vpop.f32.mrb[0].mxu0
  %927 = vmatprep.mubr.bf16.mxu0 0
  %928 = vmatmul.mubr.bf16.gmra.mrb[0].mxu0 %v623
  %v929 = vpop.f32.mrb[0].mxu0
  %v930 = vadd.f32 0.0, %v929
  %v931 = vpop.f32.mrb[0].mxu0
  %v932 = vpop.f32.mrb[0].mxu0
  %v933 = vadd.f32 0.0, %v932
  %v934 = vpop.f32.mrb[0].mxu0
  %935 = vmatprep.mubr.bf16.mxu0 0
  %936 = vmatmul.mubr.bf16.gmra.mrb[0].mxu0 %v624
  %v937 = vpop.f32.mrb[0].mxu0
  %v938 = vadd.f32 0.0, %v937
  %v939 = vpop.f32.mrb[0].mxu0
  %v940 = vpop.f32.mrb[0].mxu0
  %v941 = vadd.f32 0.0, %v940
  %v942 = vpop.f32.mrb[0].mxu0
  %943 = vmatprep.mubr.bf16.mxu0 0
  %944 = vmatmul.mubr.bf16.gmra.mrb[0].mxu0 %v625
  %v945 = vpop.f32.mrb[0].mxu0
  %v946 = vadd.f32 0.0, %v945
  %v947 = vpop.f32.mrb[0].mxu0
  %v948 = vpop.f32.mrb[0].mxu0
  %v949 = vadd.f32 0.0, %v948
  %v950 = vpop.f32.mrb[0].mxu0
  %951 = vmatprep.mubr.bf16.mxu0 0
  %952 = vmatmul.mubr.bf16.gmra.mrb[0].mxu0 %v626
  %v953 = vpop.f32.mrb[0].mxu0
  %v954 = vadd.f32 0.0, %v953
  %v955 = vpop.f32.mrb[0].mxu0
  %v956 = vpop.f32.mrb[0].mxu0
  %v957 = vadd.f32 0.0, %v956
  %v958 = vpop.f32.mrb[0].mxu0
  %959 = vmatprep.mubr.bf16.mxu0 0
  %960 = vmatmul.mubr.bf16.gmra.mrb[0].mxu0 %v627
  %v961 = vpop.f32.mrb[0].mxu0
  %v962 = vadd.f32 0.0, %v961
  %v963 = vpop.f32.mrb[0].mxu0
  %v964 = vpop.f32.mrb[0].mxu0
  %v965 = vadd.f32 0.0, %v964
  %v966 = vpop.f32.mrb[0].mxu0
  %967 = vmatprep.mubr.bf16.mxu0 0
  %968 = vmatmul.mubr.bf16.gmra.mrb[0].mxu0 %v628
  %v969 = vpop.f32.mrb[0].mxu0
  %v970 = vadd.f32 0.0, %v969
  %v971 = vpop.f32.mrb[0].mxu0
  %v972 = vpop.f32.mrb[0].mxu0
  %v973 = vadd.f32 0.0, %v972
  %v974 = vpop.f32.mrb[0].mxu0
  %975 = vmatprep.mubr.bf16.mxu0 0
  %976 = vmatmul.mubr.bf16.gmra.mrb[0].mxu0 %v629
  %v977 = vpop.f32.mrb[0].mxu0
  %v978 = vadd.f32 0.0, %v977
  %v979 = vpop.f32.mrb[0].mxu0
  %v980 = vpop.f32.mrb[0].mxu0
  %v981 = vadd.f32 0.0, %v980
  %v982 = vpop.f32.mrb[0].mxu0
  %983 = vmatprep.mubr.bf16.mxu0 0
  %984 = vmatmul.mubr.bf16.gmra.mrb[0].mxu0 %v630
  %v985 = vpop.f32.mrb[0].mxu0
  %v986 = vadd.f32 0.0, %v985
  %v987 = vpop.f32.mrb[0].mxu0
  %v988 = vpop.f32.mrb[0].mxu0
  %v989 = vadd.f32 0.0, %v988
  %v990 = vpop.f32.mrb[0].mxu0
  %991 = vmatprep.mubr.bf16.mxu0 0
  %992 = vmatmul.mubr.bf16.gmra.mrb[0].mxu0 %v631
  %v993 = vpop.f32.mrb[0].mxu0
  %v994 = vadd.f32 0.0, %v993
  %v995 = vpop.f32.mrb[0].mxu0
  %v996 = vpop.f32.mrb[0].mxu0
  %v997 = vadd.f32 0.0, %v996
  %v998 = vpop.f32.mrb[0].mxu0
  %999 = vmatprep.mubr.bf16.mxu0 0
  %1000 = vmatmul.mubr.bf16.gmra.mrb[0].mxu0 %v632
  %v1001 = vpop.f32.mrb[0].mxu0
  %v1002 = vadd.f32 0.0, %v1001
  %v1003 = vpop.f32.mrb[0].mxu0
  %v1004 = vpop.f32.mrb[0].mxu0
  %v1005 = vadd.f32 0.0, %v1004
  %v1006 = vpop.f32.mrb[0].mxu0
  %1007 = vmatprep.mubr.bf16.mxu0 0
  %1008 = vmatmul.mubr.bf16.gmra.mrb[0].mxu0 %v633
  %v1009 = vpop.f32.mrb[0].mxu0
  %v1010 = vadd.f32 0.0, %v1009
  %v1011 = vpop.f32.mrb[0].mxu0
  %v1012 = vpop.f32.mrb[0].mxu0
  %v1013 = vadd.f32 0.0, %v1012
  %v1014 = vpop.f32.mrb[0].mxu0
  %1015 = vmatprep.mubr.bf16.mxu0 0
  %1016 = vmatmul.mubr.bf16.gmra.mrb[0].mxu0 %v634
  %v1017 = vpop.f32.mrb[0].mxu0
  %v1018 = vadd.f32 0.0, %v1017
  %v1019 = vpop.f32.mrb[0].mxu0
  %v1020 = vpop.f32.mrb[0].mxu0
  %v1021 = vadd.f32 0.0, %v1020
  %v1022 = vpop.f32.mrb[0].mxu0
  %1023 = vmatprep.mubr.bf16.mxu0 0
  %1024 = vmatmul.mubr.bf16.gmra.mrb[0].mxu0 %v635
  %v1025 = vpop.f32.mrb[0].mxu0
  %v1026 = vadd.f32 0.0, %v1025
  %v1027 = vpop.f32.mrb[0].mxu0
  %v1028 = vpop.f32.mrb[0].mxu0
  %v1029 = vadd.f32 0.0, %v1028
  %v1030 = vpop.f32.mrb[0].mxu0
  %1031 = vmatprep.mubr.bf16.mxu0 0
  %1032 = vmatmul.mubr.bf16.gmra.mrb[0].mxu0 %v636
  %v1033 = vpop.f32.mrb[0].mxu0
  %v1034 = vadd.f32 0.0, %v1033
  %v1035 = vpop.f32.mrb[0].mxu0
  %v1036 = vpop.f32.mrb[0].mxu0
  %v1037 = vadd.f32 0.0, %v1036
  %v1038 = vpop.f32.mrb[0].mxu0
  %1039 = vmatprep.mubr.bf16.mxu0 0
  %1040 = vmatmul.mubr.bf16.gmra.mrb[0].mxu0 %v637
  %v1041 = vpop.f32.mrb[0].mxu0
  %v1042 = vadd.f32 0.0, %v1041
  %v1043 = vpop.f32.mrb[0].mxu0
  %v1044 = vpop.f32.mrb[0].mxu0
  %v1045 = vadd.f32 0.0, %v1044
  %v1046 = vpop.f32.mrb[0].mxu0
  %1047 = vmatprep.mubr.bf16.mxu0 0
  %1048 = vmatmul.mubr.bf16.gmra.mrb[0].mxu0 %v638
  %v1049 = vpop.f32.mrb[0].mxu0
  %v1050 = vadd.f32 0.0, %v1049
  %v1051 = vpop.f32.mrb[0].mxu0
  %v1052 = vpop.f32.mrb[0].mxu0
  %v1053 = vadd.f32 0.0, %v1052
  %v1054 = vpop.f32.mrb[0].mxu0
  %1055 = vmatprep.mubr.bf16.mxu0 0
  %1056 = vmatmul.mubr.bf16.gmra.mrb[0].mxu0 %v639
  %v1057 = vpop.f32.mrb[0].mxu0
  %v1058 = vadd.f32 0.0, %v1057
  %v1059 = vpop.f32.mrb[0].mxu0
  %v1060 = vpop.f32.mrb[0].mxu0
  %v1061 = vadd.f32 0.0, %v1060
  %v1062 = vpop.f32.mrb[0].mxu0
  %1063 = vmatprep.mubr.bf16.mxu0 0
  %1064 = vmatmul.mubr.bf16.gmra.mrb[0].mxu0 %v640
  %v1065 = vpop.f32.mrb[0].mxu0
  %v1066 = vadd.f32 0.0, %v1065
  %v1067 = vpop.f32.mrb[0].mxu0
  %v1068 = vpop.f32.mrb[0].mxu0
  %v1069 = vadd.f32 0.0, %v1068
  %v1070 = vpop.f32.mrb[0].mxu0
  %1071 = vmatprep.mubr.bf16.mxu0 0
  %1072 = vmatmul.mubr.bf16.gmra.mrb[0].mxu0 %v641
  %v1073 = vpop.f32.mrb[0].mxu0
  %v1074 = vadd.f32 0.0, %v1073
  %v1075 = vpop.f32.mrb[0].mxu0
  %v1076 = vpop.f32.mrb[0].mxu0
  %v1077 = vadd.f32 0.0, %v1076
  %v1078 = vpop.f32.mrb[0].mxu0
  %1079 = vmatprep.mubr.bf16.mxu0 0
  %1080 = vmatmul.mubr.bf16.gmra.mrb[0].mxu0 %v642
  %v1081 = vpop.f32.mrb[0].mxu0
  %v1082 = vadd.f32 0.0, %v1081
  %v1083 = vpop.f32.mrb[0].mxu0
  %v1084 = vpop.f32.mrb[0].mxu0
  %v1085 = vadd.f32 0.0, %v1084
  %v1086 = vpop.f32.mrb[0].mxu0
  %1087 = vmatprep.mubr.bf16.mxu0 0
  %1088 = vmatmul.mubr.bf16.gmra.mrb[0].mxu0 %v643
  %v1089 = vpop.f32.mrb[0].mxu0
  %v1090 = vadd.f32 0.0, %v1089
  %v1091 = vpop.f32.mrb[0].mxu0
  %v1092 = vpop.f32.mrb[0].mxu0
  %v1093 = vadd.f32 0.0, %v1092
  %v1094 = vpop.f32.mrb[0].mxu0
  %1095 = vmatprep.mubr.bf16.mxu0 0
  %1096 = vmatmul.mubr.bf16.gmra.mrb[0].mxu0 %v644
  %v1097 = vpop.f32.mrb[0].mxu0
  %v1098 = vadd.f32 0.0, %v1097
  %v1099 = vpop.f32.mrb[0].mxu0
  %v1100 = vpop.f32.mrb[0].mxu0
  %v1101 = vadd.f32 0.0, %v1100
  %v1102 = vpop.f32.mrb[0].mxu0
  %1103 = vmatprep.mubr.bf16.mxu0 0
  %1104 = vmatmul.mubr.bf16.gmra.mrb[0].mxu0 %v645
  %v1105 = vpop.f32.mrb[0].mxu0
  %v1106 = vadd.f32 0.0, %v1105
  %v1107 = vpop.f32.mrb[0].mxu0
  %v1108 = vpop.f32.mrb[0].mxu0
  %v1109 = vadd.f32 0.0, %v1108
  %v1110 = vpop.f32.mrb[0].mxu0
  %1111 = vmatprep.mubr.bf16.mxu0 0
  %1112 = vmatmul.mubr.bf16.gmra.mrb[0].mxu0 %v646
  %v1113 = vpop.f32.mrb[0].mxu0
  %v1114 = vadd.f32 0.0, %v1113
  %v1115 = vpop.f32.mrb[0].mxu0
  %v1116 = vpop.f32.mrb[0].mxu0
  %v1117 = vadd.f32 0.0, %v1116
  %v1118 = vpop.f32.mrb[0].mxu0
  %1119 = vmatprep.mubr.bf16.mxu0 0
  %1120 = vmatmul.mubr.bf16.gmra.mrb[0].mxu0 %v647
  %v1121 = vpop.f32.mrb[0].mxu0
  %v1122 = vadd.f32 0.0, %v1121
  %v1123 = vpop.f32.mrb[0].mxu0
  %v1124 = vpop.f32.mrb[0].mxu0
  %v1125 = vadd.f32 0.0, %v1124
  %v1126 = vpop.f32.mrb[0].mxu0
  %1127 = vmatprep.mubr.bf16.mxu0 0
  %1128 = vmatmul.mubr.bf16.gmra.mrb[0].mxu0 %v648
  %v1129 = vpop.f32.mrb[0].mxu0
  %v1130 = vadd.f32 0.0, %v1129
  %v1131 = vpop.f32.mrb[0].mxu0
  %v1132 = vpop.f32.mrb[0].mxu0
  %v1133 = vadd.f32 0.0, %v1132
  %v1134 = vpop.f32.mrb[0].mxu0
  %1135 = vmatprep.mubr.bf16.mxu0 0
  %1136 = vmatmul.mubr.bf16.gmra.mrb[0].mxu0 %v649
  %v1137 = vpop.f32.mrb[0].mxu0
  %v1138 = vadd.f32 0.0, %v1137
  %v1139 = vpop.f32.mrb[0].mxu0
  %v1140 = vpop.f32.mrb[0].mxu0
  %v1141 = vadd.f32 0.0, %v1140
  %v1142 = vpop.f32.mrb[0].mxu0
  %1143 = vmatprep.mubr.bf16.mxu0 0
  %1144 = vmatmul.mubr.bf16.gmra.mrb[0].mxu0 %v650
  %v1145 = vpop.f32.mrb[0].mxu0
  %v1146 = vadd.f32 0.0, %v1145
  %v1147 = vpop.f32.mrb[0].mxu0
  %v1148 = vpop.f32.mrb[0].mxu0
  %v1149 = vadd.f32 0.0, %v1148
  %v1150 = vpop.f32.mrb[0].mxu0
  %1151 = vmatprep.mubr.bf16.mxu0 0
  %1152 = vmatmul.mubr.bf16.gmra.mrb[0].mxu0 %v651
  %v1153 = vpop.f32.mrb[0].mxu0
  %v1154 = vadd.f32 0.0, %v1153
  %v1155 = vpop.f32.mrb[0].mxu0
  %v1156 = vpop.f32.mrb[0].mxu0
  %v1157 = vadd.f32 0.0, %v1156
  %v1158 = vpop.f32.mrb[0].mxu0
  %1159 = vmatprep.mubr.bf16.mxu0 0
  %1160 = vmatmul.mubr.bf16.gmra.mrb[0].mxu0 %v652
  %v1161 = vpop.f32.mrb[0].mxu0
  %v1162 = vadd.f32 0.0, %v1161
  %v1163 = vpop.f32.mrb[0].mxu0
  %v1164 = vpop.f32.mrb[0].mxu0
  %v1165 = vadd.f32 0.0, %v1164
  %v1166 = vpop.f32.mrb[0].mxu0
  %1167 = vmatprep.mubr.bf16.mxu0 0
  %1168 = vmatmul.mubr.bf16.gmra.mrb[0].mxu0 %v653
  %v1169 = vpop.f32.mrb[0].mxu0
  %v1170 = vadd.f32 0.0, %v1169
  %v1171 = vpop.f32.mrb[0].mxu0
  %v1172 = vpop.f32.mrb[0].mxu0
  %v1173 = vadd.f32 0.0, %v1172
  %v1174 = vpop.f32.mrb[0].mxu0
  %1175 = vmatprep.mubr.bf16.mxu0 0
  %1176 = vmatmul.mubr.bf16.gmra.mrb[0].mxu0 %v654
  %v1177 = vpop.f32.mrb[0].mxu0
  %v1178 = vadd.f32 0.0, %v1177
  %v1179 = vpop.f32.mrb[0].mxu0
  %v1180 = vpop.f32.mrb[0].mxu0
  %v1181 = vadd.f32 0.0, %v1180
  %v1182 = vpop.f32.mrb[0].mxu0
  %1183 = vmatprep.mubr.bf16.mxu0 0
  %1184 = vmatmul.mubr.bf16.gmra.mrb[0].mxu0 %v655
  %v1185 = vpop.f32.mrb[0].mxu0
  %v1186 = vadd.f32 0.0, %v1185
  %v1187 = vpop.f32.mrb[0].mxu0
  %v1188 = vpop.f32.mrb[0].mxu0
  %v1189 = vadd.f32 0.0, %v1188
  %v1190 = vpop.f32.mrb[0].mxu0
  %1191 = vmatprep.mubr.bf16.mxu0 0
  %1192 = vmatmul.mubr.bf16.gmra.mrb[0].mxu0 %v656
  %v1193 = vpop.f32.mrb[0].mxu0
  %v1194 = vadd.f32 0.0, %v1193
  %v1195 = vpop.f32.mrb[0].mxu0
  %v1196 = vpop.f32.mrb[0].mxu0
  %v1197 = vadd.f32 0.0, %v1196
  %v1198 = vpop.f32.mrb[0].mxu0
  %1199 = vmatprep.mubr.bf16.mxu0 0
  %1200 = vmatmul.mubr.bf16.gmra.mrb[0].mxu0 %v657
  %v1201 = vpop.f32.mrb[0].mxu0
  %v1202 = vadd.f32 0.0, %v1201
  %v1203 = vpop.f32.mrb[0].mxu0
  %v1204 = vpop.f32.mrb[0].mxu0
  %v1205 = vadd.f32 0.0, %v1204
  %v1206 = vpop.f32.mrb[0].mxu0
  %1207 = vmatprep.mubr.bf16.mxu0 0
  %1208 = vmatmul.mubr.bf16.gmra.mrb[0].mxu0 %v658
  %v1209 = vpop.f32.mrb[0].mxu0
  %v1210 = vadd.f32 0.0, %v1209
  %v1211 = vpop.f32.mrb[0].mxu0
  %v1212 = vpop.f32.mrb[0].mxu0
  %v1213 = vadd.f32 0.0, %v1212
  %v1214 = vpop.f32.mrb[0].mxu0
  %1215 = vmatprep.mubr.bf16.mxu0 0
  %1216 = vmatmul.mubr.bf16.gmra.mrb[0].mxu0 %v659
  %v1217 = vpop.f32.mrb[0].mxu0
  %v1218 = vadd.f32 0.0, %v1217
  %v1219 = vpop.f32.mrb[0].mxu0
  %v1220 = vpop.f32.mrb[0].mxu0
  %v1221 = vadd.f32 0.0, %v1220
  %v1222 = vpop.f32.mrb[0].mxu0
  %1223 = vmatprep.mubr.bf16.mxu0 0
  %1224 = vmatmul.mubr.bf16.gmra.mrb[0].mxu0 %v660
  %v1225 = vpop.f32.mrb[0].mxu0
  %v1226 = vadd.f32 0.0, %v1225
  %v1227 = vpop.f32.mrb[0].mxu0
  %v1228 = vpop.f32.mrb[0].mxu0
  %v1229 = vadd.f32 0.0, %v1228
  %v1230 = vpop.f32.mrb[0].mxu0
  %1231 = vmatprep.mubr.bf16.mxu0 0
  %1232 = vmatmul.mubr.bf16.gmra.mrb[0].mxu0 %v661
  %v1233 = vpop.f32.mrb[0].mxu0
  %v1234 = vadd.f32 0.0, %v1233
  %v1235 = vpop.f32.mrb[0].mxu0
  %v1236 = vpop.f32.mrb[0].mxu0
  %v1237 = vadd.f32 0.0, %v1236
  %v1238 = vpop.f32.mrb[0].mxu0
  %1239 = vmatprep.mubr.bf16.mxu0 0
  %1240 = vmatmul.mubr.bf16.gmra.mrb[0].mxu0 %v662
  %v1241 = vpop.f32.mrb[0].mxu0
  %v1242 = vadd.f32 0.0, %v1241
  %v1243 = vpop.f32.mrb[0].mxu0
  %v1244 = vpop.f32.mrb[0].mxu0
  %v1245 = vadd.f32 0.0, %v1244
  %v1246 = vpop.f32.mrb[0].mxu0
  %1247 = vmatprep.mubr.bf16.mxu0 0
  %1248 = vmatmul.mubr.bf16.gmra.mrb[0].mxu0 %v663
  %v1249 = vpop.f32.mrb[0].mxu0
  %v1250 = vadd.f32 0.0, %v1249
  %v1251 = vpop.f32.mrb[0].mxu0
  %v1252 = vpop.f32.mrb[0].mxu0
  %v1253 = vadd.f32 0.0, %v1252
  %v1254 = vpop.f32.mrb[0].mxu0
  %1255 = vmatprep.mubr.bf16.mxu0 0
  %1256 = vmatmul.mubr.bf16.gmra.mrb[0].mxu0 %v664
  %v1257 = vpop.f32.mrb[0].mxu0
  %v1258 = vadd.f32 0.0, %v1257
  %v1259 = vpop.f32.mrb[0].mxu0
  %v1260 = vpop.f32.mrb[0].mxu0
  %v1261 = vadd.f32 0.0, %v1260
  %v1262 = vpop.f32.mrb[0].mxu0
  %1263 = vmatprep.mubr.bf16.mxu0 0
  %1264 = vmatmul.mubr.bf16.gmra.mrb[0].mxu0 %v665
  %v1265 = vpop.f32.mrb[0].mxu0
  %v1266 = vadd.f32 0.0, %v1265
  %v1267 = vpop.f32.mrb[0].mxu0
  %v1268 = vpop.f32.mrb[0].mxu0
  %v1269 = vadd.f32 0.0, %v1268
  %v1270 = vpop.f32.mrb[0].mxu0
  %1271 = vmatprep.mubr.bf16.mxu0 0
  %1272 = vmatmul.mubr.bf16.gmra.mrb[0].mxu0 %v666
  %v1273 = vpop.f32.mrb[0].mxu0
  %v1274 = vadd.f32 0.0, %v1273
  %v1275 = vpop.f32.mrb[0].mxu0
  %v1276 = vpop.f32.mrb[0].mxu0
  %v1277 = vadd.f32 0.0, %v1276
  %v1278 = vpop.f32.mrb[0].mxu0
  %1279 = vmatprep.mubr.bf16.mxu0 0
  %1280 = vmatmul.mubr.bf16.gmra.mrb[0].mxu0 %v667
  %v1281 = vpop.f32.mrb[0].mxu0
  %v1282 = vadd.f32 0.0, %v1281
  %v1283 = vpop.f32.mrb[0].mxu0
  %v1284 = vpop.f32.mrb[0].mxu0
  %v1285 = vadd.f32 0.0, %v1284
  %v1286 = vpop.f32.mrb[0].mxu0
  %1287 = vmatprep.mubr.bf16.mxu0 0
  %1288 = vmatmul.mubr.bf16.gmra.mrb[0].mxu0 %v668
  %v1289 = vpop.f32.mrb[0].mxu0
  %v1290 = vadd.f32 0.0, %v1289
  %v1291 = vpop.f32.mrb[0].mxu0
  %v1292 = vpop.f32.mrb[0].mxu0
  %v1293 = vadd.f32 0.0, %v1292
  %v1294 = vpop.f32.mrb[0].mxu0
  %1295 = vmatprep.mubr.bf16.mxu0 0
  %1296 = vmatmul.mubr.bf16.gmra.mrb[0].mxu0 %v669
  %v1297 = vpop.f32.mrb[0].mxu0
  %v1298 = vadd.f32 0.0, %v1297
  %v1299 = vpop.f32.mrb[0].mxu0
  %v1300 = vpop.f32.mrb[0].mxu0
  %v1301 = vadd.f32 0.0, %v1300
  %v1302 = vpop.f32.mrb[0].mxu0
  %1303 = vmatprep.mubr.bf16.mxu0 0
  %1304 = vmatmul.mubr.bf16.gmra.mrb[0].mxu0 %v670
  %v1305 = vpop.f32.mrb[0].mxu0
  %v1306 = vadd.f32 0.0, %v1305
  %v1307 = vpop.f32.mrb[0].mxu0
  %v1308 = vpop.f32.mrb[0].mxu0
  %v1309 = vadd.f32 0.0, %v1308
  %v1310 = vpop.f32.mrb[0].mxu0
  %1311 = vmatprep.mubr.bf16.mxu0 0
  %1312 = vmatmul.mubr.bf16.gmra.mrb[0].mxu0 %v671
  %v1313 = vpop.f32.mrb[0].mxu0
  %v1314 = vadd.f32 0.0, %v1313
  %v1315 = vpop.f32.mrb[0].mxu0
  %v1316 = vpop.f32.mrb[0].mxu0
  %v1317 = vadd.f32 0.0, %v1316
  %v1318 = vpop.f32.mrb[0].mxu0
  %1319 = vmatprep.mubr.bf16.mxu0 0
  %1320 = vmatmul.mubr.bf16.gmra.mrb[0].mxu0 %v672
  %v1321 = vpop.f32.mrb[0].mxu0
  %v1322 = vadd.f32 0.0, %v1321
  %v1323 = vpop.f32.mrb[0].mxu0
  %v1324 = vpop.f32.mrb[0].mxu0
  %v1325 = vadd.f32 0.0, %v1324
  %v1326 = vpop.f32.mrb[0].mxu0
  %1327 = vmatprep.mubr.bf16.mxu0 0
  %1328 = vmatmul.mubr.bf16.gmra.mrb[0].mxu0 %v673
  %v1329 = vpop.f32.mrb[0].mxu0
  %v1330 = vadd.f32 0.0, %v1329
  %v1331 = vpop.f32.mrb[0].mxu0
  %v1332 = vpop.f32.mrb[0].mxu0
  %v1333 = vadd.f32 0.0, %v1332
  %v1334 = vpop.f32.mrb[0].mxu0
  %1335 = vmatprep.mubr.bf16.mxu0 0
  %1336 = vmatmul.mubr.bf16.gmra.mrb[0].mxu0 %v674
  %v1337 = vpop.f32.mrb[0].mxu0
  %v1338 = vadd.f32 0.0, %v1337
  %v1339 = vpop.f32.mrb[0].mxu0
  %v1340 = vpop.f32.mrb[0].mxu0
  %v1341 = vadd.f32 0.0, %v1340
  %v1342 = vpop.f32.mrb[0].mxu0
  %1343 = vmatprep.mubr.bf16.mxu0 0
  %1344 = vmatmul.mubr.bf16.gmra.mrb[0].mxu0 %v675
  %v1345 = vpop.f32.mrb[0].mxu0
  %v1346 = vadd.f32 0.0, %v1345
  %v1347 = vpop.f32.mrb[0].mxu0
  %v1348 = vpop.f32.mrb[0].mxu0
  %v1349 = vadd.f32 0.0, %v1348
  %v1350 = vpop.f32.mrb[0].mxu0
  %1351 = vmatprep.mubr.bf16.mxu0 0
  %1352 = vmatmul.mubr.bf16.gmra.mrb[0].mxu0 %v676
  %v1353 = vpop.f32.mrb[0].mxu0
  %v1354 = vadd.f32 0.0, %v1353
  %v1355 = vpop.f32.mrb[0].mxu0
  %v1356 = vpop.f32.mrb[0].mxu0
  %v1357 = vadd.f32 0.0, %v1356
  %v1358 = vpop.f32.mrb[0].mxu0
  %1359 = vmatprep.mubr.bf16.mxu0 0
  %1360 = vmatmul.mubr.bf16.gmra.mrb[0].mxu0 %v677
  %v1361 = vpop.f32.mrb[0].mxu0
  %v1362 = vadd.f32 0.0, %v1361
  %v1363 = vpop.f32.mrb[0].mxu0
  %v1364 = vpop.f32.mrb[0].mxu0
  %v1365 = vadd.f32 0.0, %v1364
  %v1366 = vpop.f32.mrb[0].mxu0
  %1367 = vmatprep.mubr.bf16.mxu0 0
  %1368 = vmatmul.mubr.bf16.gmra.mrb[0].mxu0 %v678
  %v1369 = vpop.f32.mrb[0].mxu0
  %v1370 = vadd.f32 0.0, %v1369
  %v1371 = vpop.f32.mrb[0].mxu0
  %v1372 = vpop.f32.mrb[0].mxu0
  %v1373 = vadd.f32 0.0, %v1372
  %v1374 = vpop.f32.mrb[0].mxu0
  %1375 = vmatprep.mubr.bf16.mxu0 0
  %1376 = vmatmul.mubr.bf16.gmra.mrb[0].mxu0 %v679
  %v1377 = vpop.f32.mrb[0].mxu0
  %v1378 = vadd.f32 0.0, %v1377
  %v1379 = vpop.f32.mrb[0].mxu0
  %v1380 = vpop.f32.mrb[0].mxu0
  %v1381 = vadd.f32 0.0, %v1380
  %v1382 = vpop.f32.mrb[0].mxu0
  %1383 = vmatprep.mubr.bf16.mxu0 0
  %1384 = vmatmul.mubr.bf16.gmra.mrb[0].mxu0 %v680
  %v1385 = vpop.f32.mrb[0].mxu0
  %v1386 = vadd.f32 0.0, %v1385
  %v1387 = vpop.f32.mrb[0].mxu0
  %v1388 = vpop.f32.mrb[0].mxu0
  %v1389 = vadd.f32 0.0, %v1388
  %v1390 = vpop.f32.mrb[0].mxu0
  %1391 = vmatprep.mubr.bf16.mxu0 0
  %1392 = vmatmul.mubr.bf16.gmra.mrb[0].mxu0 %v681
  %v1393 = vpop.f32.mrb[0].mxu0
  %v1394 = vadd.f32 0.0, %v1393
  %v1395 = vpop.f32.mrb[0].mxu0
  %v1396 = vpop.f32.mrb[0].mxu0
  %v1397 = vadd.f32 0.0, %v1396
  %v1398 = vpop.f32.mrb[0].mxu0
  %1399 = vmatprep.mubr.bf16.mxu0 0
  %1400 = vmatmul.mubr.bf16.gmra.mrb[0].mxu0 %v682
  %v1401 = vpop.f32.mrb[0].mxu0
  %v1402 = vadd.f32 0.0, %v1401
  %v1403 = vpop.f32.mrb[0].mxu0
  %v1404 = vpop.f32.mrb[0].mxu0
  %v1405 = vadd.f32 0.0, %v1404
  %v1406 = vpop.f32.mrb[0].mxu0
  %1407 = vmatprep.mubr.bf16.mxu0 0
  %1408 = vmatmul.mubr.bf16.gmra.mrb[0].mxu0 %v683
  %v1409 = vpop.f32.mrb[0].mxu0
  %v1410 = vadd.f32 0.0, %v1409
  %v1411 = vpop.f32.mrb[0].mxu0
  %v1412 = vpop.f32.mrb[0].mxu0
  %v1413 = vadd.f32 0.0, %v1412
  %v1414 = vpop.f32.mrb[0].mxu0
  %1415 = vmatprep.mubr.bf16.mxu0 0
  %1416 = vmatmul.mubr.bf16.gmra.mrb[0].mxu0 %v684
  %v1417 = vpop.f32.mrb[0].mxu0
  %v1418 = vadd.f32 0.0, %v1417
  %v1419 = vpop.f32.mrb[0].mxu0
  %v1420 = vpop.f32.mrb[0].mxu0
  %v1421 = vadd.f32 0.0, %v1420
  %v1422 = vpop.f32.mrb[0].mxu0
  %1423 = vmatprep.mubr.bf16.mxu0 0
  %1424 = vmatmul.mubr.bf16.gmra.mrb[0].mxu0 %v685
  %v1425 = vpop.f32.mrb[0].mxu0
  %v1426 = vadd.f32 0.0, %v1425
  %v1427 = vpop.f32.mrb[0].mxu0
  %v1428 = vpop.f32.mrb[0].mxu0
  %v1429 = vadd.f32 0.0, %v1428
  %v1430 = vpop.f32.mrb[0].mxu0
  %1431 = vmatprep.mubr.bf16.mxu0 0
  %1432 = vmatmul.mubr.bf16.gmra.mrb[0].mxu0 %v686
  %v1433 = vpop.f32.mrb[0].mxu0
  %v1434 = vadd.f32 0.0, %v1433
  %v1435 = vpop.f32.mrb[0].mxu0
  %v1436 = vpop.f32.mrb[0].mxu0
  %v1437 = vadd.f32 0.0, %v1436
  %v1438 = vpop.f32.mrb[0].mxu0
  %1439 = vmatprep.mubr.bf16.mxu0 0
  %1440 = vmatmul.mubr.bf16.gmra.mrb[0].mxu0 %v687
  %v1441 = vpop.f32.mrb[0].mxu0
  %v1442 = vadd.f32 0.0, %v1441
  %v1443 = vpop.f32.mrb[0].mxu0
  %v1444 = vpop.f32.mrb[0].mxu0
  %v1445 = vadd.f32 0.0, %v1444
  %v1446 = vpop.f32.mrb[0].mxu0
  %1447 = vmatprep.mubr.bf16.mxu0 0
  %1448 = vmatmul.mubr.bf16.gmra.mrb[0].mxu0 %v688
  %v1449 = vpop.f32.mrb[0].mxu0
  %v1450 = vadd.f32 0.0, %v1449
  %v1451 = vpop.f32.mrb[0].mxu0
  %v1452 = vpop.f32.mrb[0].mxu0
  %v1453 = vadd.f32 0.0, %v1452
  %v1454 = vpop.f32.mrb[0].mxu0
  %1455 = vmatprep.mubr.bf16.mxu0 0
  %1456 = vmatmul.mubr.bf16.gmra.mrb[0].mxu0 %v689
  %v1457 = vpop.f32.mrb[0].mxu0
  %v1458 = vadd.f32 0.0, %v1457
  %v1459 = vpop.f32.mrb[0].mxu0
  %v1460 = vpop.f32.mrb[0].mxu0
  %v1461 = vadd.f32 0.0, %v1460
  %v1462 = vpop.f32.mrb[0].mxu0
  %1463 = vmatprep.mubr.bf16.mxu0 0
  %1464 = vmatmul.mubr.bf16.gmra.mrb[0].mxu0 %v690
  %v1465 = vpop.f32.mrb[0].mxu0
  %v1466 = vadd.f32 0.0, %v1465
  %v1467 = vpop.f32.mrb[0].mxu0
  %v1468 = vpop.f32.mrb[0].mxu0
  %v1469 = vadd.f32 0.0, %v1468
  %v1470 = vpop.f32.mrb[0].mxu0
  %1471 = vmatprep.mubr.bf16.mxu0 0
  %1472 = vmatmul.mubr.bf16.gmra.mrb[0].mxu0 %v691
  %v1473 = vpop.f32.mrb[0].mxu0
  %v1474 = vadd.f32 0.0, %v1473
  %v1475 = vpop.f32.mrb[0].mxu0
  %v1476 = vpop.f32.mrb[0].mxu0
  %v1477 = vadd.f32 0.0, %v1476
  %v1478 = vpop.f32.mrb[0].mxu0
  %1479 = vmatprep.mubr.bf16.mxu0 0
  %1480 = vmatmul.mubr.bf16.gmra.mrb[0].mxu0 %v692
  %v1481 = vpop.f32.mrb[0].mxu0
  %v1482 = vadd.f32 0.0, %v1481
  %v1483 = vpop.f32.mrb[0].mxu0
  %v1484 = vpop.f32.mrb[0].mxu0
  %v1485 = vadd.f32 0.0, %v1484
  %v1486 = vpop.f32.mrb[0].mxu0
  %1487 = vmatprep.mubr.bf16.mxu0 0
  %1488 = vmatmul.mubr.bf16.gmra.mrb[0].mxu0 %v693
  %v1489 = vpop.f32.mrb[0].mxu0
  %v1490 = vadd.f32 0.0, %v1489
  %v1491 = vpop.f32.mrb[0].mxu0
  %v1492 = vpop.f32.mrb[0].mxu0
  %v1493 = vadd.f32 0.0, %v1492
  %v1494 = vpop.f32.mrb[0].mxu0
  %1495 = vmatprep.mubr.bf16.mxu0 0
  %1496 = vmatmul.mubr.bf16.gmra.mrb[0].mxu0 %v694
  %v1497 = vpop.f32.mrb[0].mxu0
  %v1498 = vadd.f32 0.0, %v1497
  %v1499 = vpop.f32.mrb[0].mxu0
  %v1500 = vpop.f32.mrb[0].mxu0
  %v1501 = vadd.f32 0.0, %v1500
  %v1502 = vpop.f32.mrb[0].mxu0
  %1503 = vmatprep.mubr.bf16.mxu0 0
  %1504 = vmatmul.mubr.bf16.gmra.mrb[0].mxu0 %v695
  %v1505 = vpop.f32.mrb[0].mxu0
  %v1506 = vadd.f32 0.0, %v1505
  %v1507 = vpop.f32.mrb[0].mxu0
  %v1508 = vpop.f32.mrb[0].mxu0
  %v1509 = vadd.f32 0.0, %v1508
  %v1510 = vpop.f32.mrb[0].mxu0
  %1511 = vmatprep.mubr.bf16.mxu0 0
  %1512 = vmatmul.mubr.bf16.gmra.mrb[0].mxu0 %v696
  %v1513 = vpop.f32.mrb[0].mxu0
  %v1514 = vadd.f32 0.0, %v1513
  %v1515 = vpop.f32.mrb[0].mxu0
  %v1516 = vpop.f32.mrb[0].mxu0
  %v1517 = vadd.f32 0.0, %v1516
  %v1518 = vpop.f32.mrb[0].mxu0
  %1519 = vmatprep.mubr.bf16.mxu0 0
  %1520 = vmatmul.mubr.bf16.gmra.mrb[0].mxu0 %v697
  %v1521 = vpop.f32.mrb[0].mxu0
  %v1522 = vadd.f32 0.0, %v1521
  %v1523 = vpop.f32.mrb[0].mxu0
  %v1524 = vpop.f32.mrb[0].mxu0
  %v1525 = vadd.f32 0.0, %v1524
  %v1526 = vpop.f32.mrb[0].mxu0
  %1527 = vmatprep.mubr.bf16.mxu0 0
  %1528 = vmatmul.mubr.bf16.gmra.mrb[0].mxu0 %v698
  %v1529 = vpop.f32.mrb[0].mxu0
  %v1530 = vadd.f32 0.0, %v1529
  %v1531 = vpop.f32.mrb[0].mxu0
  %v1532 = vpop.f32.mrb[0].mxu0
  %v1533 = vadd.f32 0.0, %v1532
  %v1534 = vpop.f32.mrb[0].mxu0
  %1535 = vmatprep.mubr.bf16.mxu0 0
  %1536 = vmatmul.mubr.bf16.gmra.mrb[0].mxu0 %v699
  %v1537 = vpop.f32.mrb[0].mxu0
  %v1538 = vadd.f32 0.0, %v1537
  %v1539 = vpop.f32.mrb[0].mxu0
  %v1540 = vpop.f32.mrb[0].mxu0
  %v1541 = vadd.f32 0.0, %v1540
  %v1542 = vpop.f32.mrb[0].mxu0
  %1543 = vmatprep.mubr.bf16.mxu0 0
  %1544 = vmatmul.mubr.bf16.gmra.mrb[0].mxu0 %v700
  %v1545 = vpop.f32.mrb[0].mxu0
  %v1546 = vadd.f32 0.0, %v1545
  %v1547 = vpop.f32.mrb[0].mxu0
  %v1548 = vpop.f32.mrb[0].mxu0
  %v1549 = vadd.f32 0.0, %v1548
  %v1550 = vpop.f32.mrb[0].mxu0
  %1551 = vmatprep.mubr.bf16.mxu0 0
  %1552 = vmatmul.mubr.bf16.gmra.mrb[0].mxu0 %v701
  %v1553 = vpop.f32.mrb[0].mxu0
  %v1554 = vadd.f32 0.0, %v1553
  %v1555 = vpop.f32.mrb[0].mxu0
  %v1556 = vpop.f32.mrb[0].mxu0
  %v1557 = vadd.f32 0.0, %v1556
  %v1558 = vpop.f32.mrb[0].mxu0
  %1559 = vmatprep.mubr.bf16.mxu0 0
  %1560 = vmatmul.mubr.bf16.gmra.mrb[0].mxu0 %v702
  %v1561 = vpop.f32.mrb[0].mxu0
  %v1562 = vadd.f32 0.0, %v1561
  %v1563 = vpop.f32.mrb[0].mxu0
  %v1564 = vpop.f32.mrb[0].mxu0
  %v1565 = vadd.f32 0.0, %v1564
  %v1566 = vpop.f32.mrb[0].mxu0
  %1567 = vmatprep.mubr.bf16.mxu0 0
  %1568 = vmatmul.mubr.bf16.gmra.mrb[0].mxu0 %v703
  %v1569 = vpop.f32.mrb[0].mxu0
  %v1570 = vadd.f32 0.0, %v1569
  %v1571 = vpop.f32.mrb[0].mxu0
  %v1572 = vpop.f32.mrb[0].mxu0
  %v1573 = vadd.f32 0.0, %v1572
  %v1574 = vpop.f32.mrb[0].mxu0
  %1575 = vmatprep.mubr.bf16.mxu0 0
  %1576 = vmatmul.mubr.bf16.gmra.mrb[0].mxu0 %v704
  %v1577 = vpop.f32.mrb[0].mxu0
  %v1578 = vadd.f32 0.0, %v1577
  %v1579 = vpop.f32.mrb[0].mxu0
  %v1580 = vpop.f32.mrb[0].mxu0
  %v1581 = vadd.f32 0.0, %v1580
  %v1582 = vpop.f32.mrb[0].mxu0
  %1583 = vmatprep.mubr.bf16.mxu0 0
  %1584 = vmatmul.mubr.bf16.gmra.mrb[0].mxu0 %v705
  %v1585 = vpop.f32.mrb[0].mxu0
  %v1586 = vadd.f32 0.0, %v1585
  %v1587 = vpop.f32.mrb[0].mxu0
  %v1588 = vpop.f32.mrb[0].mxu0
  %v1589 = vadd.f32 0.0, %v1588
  %v1590 = vpop.f32.mrb[0].mxu0
  %1591 = vmatprep.mubr.bf16.mxu0 0
  %1592 = vmatmul.mubr.bf16.gmra.mrb[0].mxu0 %v706
  %v1593 = vpop.f32.mrb[0].mxu0
  %v1594 = vadd.f32 0.0, %v1593
  %v1595 = vpop.f32.mrb[0].mxu0
  %v1596 = vpop.f32.mrb[0].mxu0
  %v1597 = vadd.f32 0.0, %v1596
  %v1598 = vpop.f32.mrb[0].mxu0
  %1599 = vmatprep.mubr.bf16.mxu0 0
  %1600 = vmatmul.mubr.bf16.gmra.mrb[0].mxu0 %v707
  %v1601 = vpop.f32.mrb[0].mxu0
  %v1602 = vadd.f32 0.0, %v1601
  %v1603 = vpop.f32.mrb[0].mxu0
  %v1604 = vpop.f32.mrb[0].mxu0
  %v1605 = vadd.f32 0.0, %v1604
  %v1606 = vpop.f32.mrb[0].mxu0
  %1607 = vmatprep.mubr.bf16.mxu0 0
  %1608 = vmatmul.mubr.bf16.gmra.mrb[0].mxu0 %v708
  %v1609 = vpop.f32.mrb[0].mxu0
  %v1610 = vadd.f32 0.0, %v1609
  %v1611 = vpop.f32.mrb[0].mxu0
  %v1612 = vpop.f32.mrb[0].mxu0
  %v1613 = vadd.f32 0.0, %v1612
  %v1614 = vpop.f32.mrb[0].mxu0
  %1615 = vmatprep.mubr.bf16.mxu0 0
  %1616 = vmatmul.mubr.bf16.gmra.mrb[0].mxu0 %v709
  %v1617 = vpop.f32.mrb[0].mxu0
  %v1618 = vadd.f32 0.0, %v1617
  %v1619 = vpop.f32.mrb[0].mxu0
  %v1620 = vpop.f32.mrb[0].mxu0
  %v1621 = vadd.f32 0.0, %v1620
  %v1622 = vpop.f32.mrb[0].mxu0
  %1623 = vmatprep.mubr.bf16.mxu0 0
  %1624 = vmatmul.mubr.bf16.gmra.mrb[0].mxu0 %v710
  %v1625 = vpop.f32.mrb[0].mxu0
  %v1626 = vadd.f32 0.0, %v1625
  %v1627 = vpop.f32.mrb[0].mxu0
  %v1628 = vpop.f32.mrb[0].mxu0
  %v1629 = vadd.f32 0.0, %v1628
  %v1630 = vpop.f32.mrb[0].mxu0
  %1631 = vmatprep.mubr.bf16.mxu0 0
  %1632 = vmatmul.mubr.bf16.gmra.mrb[0].mxu0 %v711
  %v1633 = vpop.f32.mrb[0].mxu0
  %v1634 = vadd.f32 0.0, %v1633
  %v1635 = vpop.f32.mrb[0].mxu0
  %v1636 = vpop.f32.mrb[0].mxu0
  %v1637 = vadd.f32 0.0, %v1636
  %v1638 = vpop.f32.mrb[0].mxu0
  %1639 = vmatprep.mubr.bf16.mxu0 0
  %1640 = vmatmul.mubr.bf16.gmra.mrb[0].mxu0 %v712
  %v1641 = vpop.f32.mrb[0].mxu0
  %v1642 = vadd.f32 0.0, %v1641
  %v1643 = vpop.f32.mrb[0].mxu0
  %v1644 = vpop.f32.mrb[0].mxu0
  %v1645 = vadd.f32 0.0, %v1644
  %v1646 = vpop.f32.mrb[0].mxu0
  %1647 = vmatprep.mubr.bf16.mxu0 0
  %1648 = vmatmul.mubr.bf16.gmra.mrb[0].mxu0 %v713
  %v1649 = vpop.f32.mrb[0].mxu0
  %v1650 = vadd.f32 0.0, %v1649
  %v1651 = vpop.f32.mrb[0].mxu0
  %v1652 = vpop.f32.mrb[0].mxu0
  %v1653 = vadd.f32 0.0, %v1652
  %v1654 = vpop.f32.mrb[0].mxu0
  %1655 = vmatprep.mubr.bf16.mxu0 0
  %1656 = vmatmul.mubr.bf16.gmra.mrb[0].mxu0 %v714
  %v1657 = vpop.f32.mrb[0].mxu0
  %v1658 = vadd.f32 0.0, %v1657
  %v1659 = vpop.f32.mrb[0].mxu0
  %v1660 = vpop.f32.mrb[0].mxu0
  %v1661 = vadd.f32 0.0, %v1660
  %v1662 = vpop.f32.mrb[0].mxu0
  %1663 = vmatprep.mubr.bf16.mxu0 0
  %1664 = vmatmul.mubr.bf16.gmra.mrb[0].mxu0 %v715
  %v1665 = vpop.f32.mrb[0].mxu0
  %v1666 = vadd.f32 0.0, %v1665
  %v1667 = vpop.f32.mrb[0].mxu0
  %v1668 = vpop.f32.mrb[0].mxu0
  %v1669 = vadd.f32 0.0, %v1668
  %v1670 = vpop.f32.mrb[0].mxu0
  %1671 = vmatprep.mubr.bf16.mxu0 0
  %1672 = vmatmul.mubr.bf16.gmra.mrb[0].mxu0 %v716
  %v1673 = vpop.f32.mrb[0].mxu0
  %v1674 = vadd.f32 0.0, %v1673
  %v1675 = vpop.f32.mrb[0].mxu0
  %v1676 = vpop.f32.mrb[0].mxu0
  %v1677 = vadd.f32 0.0, %v1676
  %v1678 = vpop.f32.mrb[0].mxu0
  %1679 = vdwg.mxu0
  %1876 = vrot.lane.b32.xlu0 %v898, 112
  %v1877 = vpop.permute.xlu0 %1876
  %1878 = vrot.lane.b32.xlu0 %v901, 112
  %v1879 = vpop.permute.xlu0 %1878
  %1880 = vrot.lane.b32.xlu0 %v906, 112
  %v1881 = vpop.permute.xlu0 %1880
  %1882 = vrot.lane.b32.xlu0 %v909, 112
  %v1883 = vpop.permute.xlu0 %1882
  %1884 = vrot.lane.b32.xlu0 %v914, 112
  %v1885 = vpop.permute.xlu0 %1884
  %1886 = vrot.lane.b32.xlu0 %v917, 112
  %v1887 = vpop.permute.xlu0 %1886
  %1888 = vrot.lane.b32.xlu0 %v922, 112
  %v1889 = vpop.permute.xlu0 %1888
  %1890 = vrot.lane.b32.xlu0 %v925, 112
  %v1891 = vpop.permute.xlu0 %1890
  %1892 = vrot.lane.b32.xlu0 %v930, 112
  %v1893 = vpop.permute.xlu0 %1892
  %1894 = vrot.lane.b32.xlu0 %v933, 112
  %v1895 = vpop.permute.xlu0 %1894
  %1896 = vrot.lane.b32.xlu0 %v938, 112
  %v1897 = vpop.permute.xlu0 %1896
  %1898 = vrot.lane.b32.xlu0 %v941, 112
  %v1899 = vpop.permute.xlu0 %1898
  %1900 = vrot.lane.b32.xlu0 %v946, 112
  %v1901 = vpop.permute.xlu0 %1900
  %1902 = vrot.lane.b32.xlu0 %v949, 112
  %v1903 = vpop.permute.xlu0 %1902
  %1904 = vrot.lane.b32.xlu0 %v954, 112
  %v1905 = vpop.permute.xlu0 %1904
  %1906 = vrot.lane.b32.xlu0 %v957, 112
  %v1907 = vpop.permute.xlu0 %1906
  %1908 = vrot.lane.b32.xlu0 %v962, 112
  %v1909 = vpop.permute.xlu0 %1908
  %1910 = vrot.lane.b32.xlu0 %v965, 112
  %v1911 = vpop.permute.xlu0 %1910
  %1912 = vrot.lane.b32.xlu0 %v970, 112
  %v1913 = vpop.permute.xlu0 %1912
  %1914 = vrot.lane.b32.xlu0 %v973, 112
  %v1915 = vpop.permute.xlu0 %1914
  %1916 = vrot.lane.b32.xlu0 %v978, 112
  %v1917 = vpop.permute.xlu0 %1916
  %1918 = vrot.lane.b32.xlu0 %v981, 112
  %v1919 = vpop.permute.xlu0 %1918
  %1920 = vrot.lane.b32.xlu0 %v986, 112
  %v1921 = vpop.permute.xlu0 %1920
  %1922 = vrot.lane.b32.xlu0 %v989, 112
  %v1923 = vpop.permute.xlu0 %1922
  %1924 = vrot.lane.b32.xlu0 %v994, 112
  %v1925 = vpop.permute.xlu0 %1924
  %1926 = vrot.lane.b32.xlu0 %v997, 112
  %v1927 = vpop.permute.xlu0 %1926
  %1928 = vrot.lane.b32.xlu0 %v1002, 112
  %v1929 = vpop.permute.xlu0 %1928
  %1930 = vrot.lane.b32.xlu0 %v1005, 112
  %v1931 = vpop.permute.xlu0 %1930
  %1932 = vrot.lane.b32.xlu0 %v1010, 112
  %v1933 = vpop.permute.xlu0 %1932
  %1934 = vrot.lane.b32.xlu0 %v1013, 112
  %v1935 = vpop.permute.xlu0 %1934
  %1936 = vrot.lane.b32.xlu0 %v1018, 112
  %v1937 = vpop.permute.xlu0 %1936
  %1938 = vrot.lane.b32.xlu0 %v1021, 112
  %v1939 = vpop.permute.xlu0 %1938
  %1940 = vrot.lane.b32.xlu0 %v1026, 112
  %v1941 = vpop.permute.xlu0 %1940
  %1942 = vrot.lane.b32.xlu0 %v1029, 112
  %v1943 = vpop.permute.xlu0 %1942
  %1944 = vrot.lane.b32.xlu0 %v1034, 112
  %v1945 = vpop.permute.xlu0 %1944
  %1946 = vrot.lane.b32.xlu0 %v1037, 112
  %v1947 = vpop.permute.xlu0 %1946
  %1948 = vrot.lane.b32.xlu0 %v1042, 112
  %v1949 = vpop.permute.xlu0 %1948
  %1950 = vrot.lane.b32.xlu0 %v1045, 112
  %v1951 = vpop.permute.xlu0 %1950
  %1952 = vrot.lane.b32.xlu0 %v1050, 112
  %v1953 = vpop.permute.xlu0 %1952
  %1954 = vrot.lane.b32.xlu0 %v1053, 112
  %v1955 = vpop.permute.xlu0 %1954
  %1956 = vrot.lane.b32.xlu0 %v1058, 112
  %v1957 = vpop.permute.xlu0 %1956
  %1958 = vrot.lane.b32.xlu0 %v1061, 112
  %v1959 = vpop.permute.xlu0 %1958
  %1960 = vrot.lane.b32.xlu0 %v1066, 112
  %v1961 = vpop.permute.xlu0 %1960
  %1962 = vrot.lane.b32.xlu0 %v1069, 112
  %v1963 = vpop.permute.xlu0 %1962
  %1964 = vrot.lane.b32.xlu0 %v1074, 112
  %v1965 = vpop.permute.xlu0 %1964
  %1966 = vrot.lane.b32.xlu0 %v1077, 112
  %v1967 = vpop.permute.xlu0 %1966
  %1968 = vrot.lane.b32.xlu0 %v1082, 112
  %v1969 = vpop.permute.xlu0 %1968
  %1970 = vrot.lane.b32.xlu0 %v1085, 112
  %v1971 = vpop.permute.xlu0 %1970
  %1972 = vrot.lane.b32.xlu0 %v1090, 112
  %v1973 = vpop.permute.xlu0 %1972
  %1974 = vrot.lane.b32.xlu0 %v1093, 112
  %v1975 = vpop.permute.xlu0 %1974
  %1976 = vrot.lane.b32.xlu0 %v1098, 112
  %v1977 = vpop.permute.xlu0 %1976
  %1978 = vrot.lane.b32.xlu0 %v1101, 112
  %v1979 = vpop.permute.xlu0 %1978
  %1980 = vrot.lane.b32.xlu0 %v1106, 112
  %v1981 = vpop.permute.xlu0 %1980
  %1982 = vrot.lane.b32.xlu0 %v1109, 112
  %v1983 = vpop.permute.xlu0 %1982
  %1984 = vrot.lane.b32.xlu0 %v1114, 112
  %v1985 = vpop.permute.xlu0 %1984
  %1986 = vrot.lane.b32.xlu0 %v1117, 112
  %v1987 = vpop.permute.xlu0 %1986
  %1988 = vrot.lane.b32.xlu0 %v1122, 112
  %v1989 = vpop.permute.xlu0 %1988
  %1990 = vrot.lane.b32.xlu0 %v1125, 112
  %v1991 = vpop.permute.xlu0 %1990
  %1992 = vrot.lane.b32.xlu0 %v1130, 112
  %v1993 = vpop.permute.xlu0 %1992
  %1994 = vrot.lane.b32.xlu0 %v1133, 112
  %v1995 = vpop.permute.xlu0 %1994
  %1996 = vrot.lane.b32.xlu0 %v1138, 112
  %v1997 = vpop.permute.xlu0 %1996
  %1998 = vrot.lane.b32.xlu0 %v1141, 112
  %v1999 = vpop.permute.xlu0 %1998
  %2000 = vrot.lane.b32.xlu0 %v1146, 112
  %v2001 = vpop.permute.xlu0 %2000
  %2002 = vrot.lane.b32.xlu0 %v1149, 112
  %v2003 = vpop.permute.xlu0 %2002
  %2004 = vrot.lane.b32.xlu0 %v1154, 112
  %v2005 = vpop.permute.xlu0 %2004
  %2006 = vrot.lane.b32.xlu0 %v1157, 112
  %v2007 = vpop.permute.xlu0 %2006
  %2008 = vrot.lane.b32.xlu0 %v1162, 112
  %v2009 = vpop.permute.xlu0 %2008
  %2010 = vrot.lane.b32.xlu0 %v1165, 112
  %v2011 = vpop.permute.xlu0 %2010
  %2012 = vrot.lane.b32.xlu0 %v1170, 112
  %v2013 = vpop.permute.xlu0 %2012
  %2014 = vrot.lane.b32.xlu0 %v1173, 112
  %v2015 = vpop.permute.xlu0 %2014
  %2016 = vrot.lane.b32.xlu0 %v1178, 112
  %v2017 = vpop.permute.xlu0 %2016
  %2018 = vrot.lane.b32.xlu0 %v1181, 112
  %v2019 = vpop.permute.xlu0 %2018
  %2020 = vrot.lane.b32.xlu0 %v1186, 112
  %v2021 = vpop.permute.xlu0 %2020
  %2022 = vrot.lane.b32.xlu0 %v1189, 112
  %v2023 = vpop.permute.xlu0 %2022
  %2024 = vrot.lane.b32.xlu0 %v1194, 112
  %v2025 = vpop.permute.xlu0 %2024
  %2026 = vrot.lane.b32.xlu0 %v1197, 112
  %v2027 = vpop.permute.xlu0 %2026
  %2028 = vrot.lane.b32.xlu0 %v1202, 112
  %v2029 = vpop.permute.xlu0 %2028
  %2030 = vrot.lane.b32.xlu0 %v1205, 112
  %v2031 = vpop.permute.xlu0 %2030
  %2032 = vrot.lane.b32.xlu0 %v1210, 112
  %v2033 = vpop.permute.xlu0 %2032
  %2034 = vrot.lane.b32.xlu0 %v1213, 112
  %v2035 = vpop.permute.xlu0 %2034
  %2036 = vrot.lane.b32.xlu0 %v1218, 112
  %v2037 = vpop.permute.xlu0 %2036
  %2038 = vrot.lane.b32.xlu0 %v1221, 112
  %v2039 = vpop.permute.xlu0 %2038
  %2040 = vrot.lane.b32.xlu0 %v1226, 112
  %v2041 = vpop.permute.xlu0 %2040
  %2042 = vrot.lane.b32.xlu0 %v1229, 112
  %v2043 = vpop.permute.xlu0 %2042
  %2044 = vrot.lane.b32.xlu0 %v1234, 112
  %v2045 = vpop.permute.xlu0 %2044
  %2046 = vrot.lane.b32.xlu0 %v1237, 112
  %v2047 = vpop.permute.xlu0 %2046
  %2048 = vrot.lane.b32.xlu0 %v1242, 112
  %v2049 = vpop.permute.xlu0 %2048
  %2050 = vrot.lane.b32.xlu0 %v1245, 112
  %v2051 = vpop.permute.xlu0 %2050
  %2052 = vrot.lane.b32.xlu0 %v1250, 112
  %v2053 = vpop.permute.xlu0 %2052
  %2054 = vrot.lane.b32.xlu0 %v1253, 112
  %v2055 = vpop.permute.xlu0 %2054
  %2056 = vrot.lane.b32.xlu0 %v1258, 112
  %v2057 = vpop.permute.xlu0 %2056
  %2058 = vrot.lane.b32.xlu0 %v1261, 112
  %v2059 = vpop.permute.xlu0 %2058
  %2060 = vrot.lane.b32.xlu0 %v1266, 112
  %v2061 = vpop.permute.xlu0 %2060
  %2062 = vrot.lane.b32.xlu0 %v1269, 112
  %v2063 = vpop.permute.xlu0 %2062
  %2064 = vrot.lane.b32.xlu0 %v1274, 112
  %v2065 = vpop.permute.xlu0 %2064
  %2066 = vrot.lane.b32.xlu0 %v1277, 112
  %v2067 = vpop.permute.xlu0 %2066
  %2068 = vrot.lane.b32.xlu0 %v1282, 112
  %v2069 = vpop.permute.xlu0 %2068
  %2070 = vrot.lane.b32.xlu0 %v1285, 112
  %v2071 = vpop.permute.xlu0 %2070
  %2072 = vrot.lane.b32.xlu0 %v1290, 112
  %v2073 = vpop.permute.xlu0 %2072
  %2074 = vrot.lane.b32.xlu0 %v1293, 112
  %v2075 = vpop.permute.xlu0 %2074
  %2076 = vrot.lane.b32.xlu0 %v1298, 112
  %v2077 = vpop.permute.xlu0 %2076
  %2078 = vrot.lane.b32.xlu0 %v1301, 112
  %v2079 = vpop.permute.xlu0 %2078
  %2080 = vrot.lane.b32.xlu0 %v1306, 112
  %v2081 = vpop.permute.xlu0 %2080
  %2082 = vrot.lane.b32.xlu0 %v1309, 112
  %v2083 = vpop.permute.xlu0 %2082
  %2084 = vrot.lane.b32.xlu0 %v1314, 112
  %v2085 = vpop.permute.xlu0 %2084
  %2086 = vrot.lane.b32.xlu0 %v1317, 112
  %v2087 = vpop.permute.xlu0 %2086
  %2088 = vrot.lane.b32.xlu0 %v1322, 112
  %v2089 = vpop.permute.xlu0 %2088
  %2090 = vrot.lane.b32.xlu0 %v1325, 112
  %v2091 = vpop.permute.xlu0 %2090
  %2092 = vrot.lane.b32.xlu0 %v1330, 112
  %v2093 = vpop.permute.xlu0 %2092
  %2094 = vrot.lane.b32.xlu0 %v1333, 112
  %v2095 = vpop.permute.xlu0 %2094
  %2096 = vrot.lane.b32.xlu0 %v1338, 112
  %v2097 = vpop.permute.xlu0 %2096
  %2098 = vrot.lane.b32.xlu0 %v1341, 112
  %v2099 = vpop.permute.xlu0 %2098
  %2100 = vrot.lane.b32.xlu0 %v1346, 112
  %v2101 = vpop.permute.xlu0 %2100
  %2102 = vrot.lane.b32.xlu0 %v1349, 112
  %v2103 = vpop.permute.xlu0 %2102
  %2104 = vrot.lane.b32.xlu0 %v1354, 112
  %v2105 = vpop.permute.xlu0 %2104
  %2106 = vrot.lane.b32.xlu0 %v1357, 112
  %v2107 = vpop.permute.xlu0 %2106
  %2108 = vrot.lane.b32.xlu0 %v1362, 112
  %v2109 = vpop.permute.xlu0 %2108
  %2110 = vrot.lane.b32.xlu0 %v1365, 112
  %v2111 = vpop.permute.xlu0 %2110
  %2112 = vrot.lane.b32.xlu0 %v1370, 112
  %v2113 = vpop.permute.xlu0 %2112
  %2114 = vrot.lane.b32.xlu0 %v1373, 112
  %v2115 = vpop.permute.xlu0 %2114
  %2116 = vrot.lane.b32.xlu0 %v1378, 112
  %v2117 = vpop.permute.xlu0 %2116
  %2118 = vrot.lane.b32.xlu0 %v1381, 112
  %v2119 = vpop.permute.xlu0 %2118
  %2120 = vrot.lane.b32.xlu0 %v1386, 112
  %v2121 = vpop.permute.xlu0 %2120
  %2122 = vrot.lane.b32.xlu0 %v1389, 112
  %v2123 = vpop.permute.xlu0 %2122
  %2124 = vrot.lane.b32.xlu0 %v1394, 112
  %v2125 = vpop.permute.xlu0 %2124
  %2126 = vrot.lane.b32.xlu0 %v1397, 112
  %v2127 = vpop.permute.xlu0 %2126
  %2128 = vrot.lane.b32.xlu0 %v1402, 112
  %v2129 = vpop.permute.xlu0 %2128
  %2130 = vrot.lane.b32.xlu0 %v1405, 112
  %v2131 = vpop.permute.xlu0 %2130
  %2132 = vrot.lane.b32.xlu0 %v1410, 112
  %v2133 = vpop.permute.xlu0 %2132
  %2134 = vrot.lane.b32.xlu0 %v1413, 112
  %v2135 = vpop.permute.xlu0 %2134
  %2136 = vrot.lane.b32.xlu0 %v1418, 112
  %v2137 = vpop.permute.xlu0 %2136
  %2138 = vrot.lane.b32.xlu0 %v1421, 112
  %v2139 = vpop.permute.xlu0 %2138
  %2140 = vrot.lane.b32.xlu0 %v1426, 112
  %v2141 = vpop.permute.xlu0 %2140
  %2142 = vrot.lane.b32.xlu0 %v1429, 112
  %v2143 = vpop.permute.xlu0 %2142
  %2144 = vrot.lane.b32.xlu0 %v1434, 112
  %v2145 = vpop.permute.xlu0 %2144
  %2146 = vrot.lane.b32.xlu0 %v1437, 112
  %v2147 = vpop.permute.xlu0 %2146
  %2148 = vrot.lane.b32.xlu0 %v1442, 112
  %v2149 = vpop.permute.xlu0 %2148
  %2150 = vrot.lane.b32.xlu0 %v1445, 112
  %v2151 = vpop.permute.xlu0 %2150
  %2152 = vrot.lane.b32.xlu0 %v1450, 112
  %v2153 = vpop.permute.xlu0 %2152
  %2154 = vrot.lane.b32.xlu0 %v1453, 112
  %v2155 = vpop.permute.xlu0 %2154
  %2156 = vrot.lane.b32.xlu0 %v1458, 112
  %v2157 = vpop.permute.xlu0 %2156
  %2158 = vrot.lane.b32.xlu0 %v1461, 112
  %v2159 = vpop.permute.xlu0 %2158
  %2160 = vrot.lane.b32.xlu0 %v1466, 112
  %v2161 = vpop.permute.xlu0 %2160
  %2162 = vrot.lane.b32.xlu0 %v1469, 112
  %v2163 = vpop.permute.xlu0 %2162
  %2164 = vrot.lane.b32.xlu0 %v1474, 112
  %v2165 = vpop.permute.xlu0 %2164
  %2166 = vrot.lane.b32.xlu0 %v1477, 112
  %v2167 = vpop.permute.xlu0 %2166
  %2168 = vrot.lane.b32.xlu0 %v1482, 112
  %v2169 = vpop.permute.xlu0 %2168
  %2170 = vrot.lane.b32.xlu0 %v1485, 112
  %v2171 = vpop.permute.xlu0 %2170
  %2172 = vrot.lane.b32.xlu0 %v1490, 112
  %v2173 = vpop.permute.xlu0 %2172
  %2174 = vrot.lane.b32.xlu0 %v1493, 112
  %v2175 = vpop.permute.xlu0 %2174
  %2176 = vrot.lane.b32.xlu0 %v1498, 112
  %v2177 = vpop.permute.xlu0 %2176
  %2178 = vrot.lane.b32.xlu0 %v1501, 112
  %v2179 = vpop.permute.xlu0 %2178
  %2180 = vrot.lane.b32.xlu0 %v1506, 112
  %v2181 = vpop.permute.xlu0 %2180
  %2182 = vrot.lane.b32.xlu0 %v1509, 112
  %v2183 = vpop.permute.xlu0 %2182
  %2184 = vrot.lane.b32.xlu0 %v1514, 112
  %v2185 = vpop.permute.xlu0 %2184
  %2186 = vrot.lane.b32.xlu0 %v1517, 112
  %v2187 = vpop.permute.xlu0 %2186
  %2188 = vrot.lane.b32.xlu0 %v1522, 112
  %v2189 = vpop.permute.xlu0 %2188
  %2190 = vrot.lane.b32.xlu0 %v1525, 112
  %v2191 = vpop.permute.xlu0 %2190
  %2192 = vrot.lane.b32.xlu0 %v1530, 112
  %v2193 = vpop.permute.xlu0 %2192
  %2194 = vrot.lane.b32.xlu0 %v1533, 112
  %v2195 = vpop.permute.xlu0 %2194
  %2196 = vrot.lane.b32.xlu0 %v1538, 112
  %v2197 = vpop.permute.xlu0 %2196
  %2198 = vrot.lane.b32.xlu0 %v1541, 112
  %v2199 = vpop.permute.xlu0 %2198
  %2200 = vrot.lane.b32.xlu0 %v1546, 112
  %v2201 = vpop.permute.xlu0 %2200
  %2202 = vrot.lane.b32.xlu0 %v1549, 112
  %v2203 = vpop.permute.xlu0 %2202
  %2204 = vrot.lane.b32.xlu0 %v1554, 112
  %v2205 = vpop.permute.xlu0 %2204
  %2206 = vrot.lane.b32.xlu0 %v1557, 112
  %v2207 = vpop.permute.xlu0 %2206
  %2208 = vrot.lane.b32.xlu0 %v1562, 112
  %v2209 = vpop.permute.xlu0 %2208
  %2210 = vrot.lane.b32.xlu0 %v1565, 112
  %v2211 = vpop.permute.xlu0 %2210
  %2212 = vrot.lane.b32.xlu0 %v1570, 112
  %v2213 = vpop.permute.xlu0 %2212
  %2214 = vrot.lane.b32.xlu0 %v1573, 112
  %v2215 = vpop.permute.xlu0 %2214
  %2216 = vrot.lane.b32.xlu0 %v1578, 112
  %v2217 = vpop.permute.xlu0 %2216
  %2218 = vrot.lane.b32.xlu0 %v1581, 112
  %v2219 = vpop.permute.xlu0 %2218
  %2220 = vrot.lane.b32.xlu0 %v1586, 112
  %v2221 = vpop.permute.xlu0 %2220
  %2222 = vrot.lane.b32.xlu0 %v1589, 112
  %v2223 = vpop.permute.xlu0 %2222
  %2224 = vrot.lane.b32.xlu0 %v1594, 112
  %v2225 = vpop.permute.xlu0 %2224
  %2226 = vrot.lane.b32.xlu0 %v1597, 112
  %v2227 = vpop.permute.xlu0 %2226
  %2228 = vrot.lane.b32.xlu0 %v1602, 112
  %v2229 = vpop.permute.xlu0 %2228
  %2230 = vrot.lane.b32.xlu0 %v1605, 112
  %v2231 = vpop.permute.xlu0 %2230
  %2232 = vrot.lane.b32.xlu0 %v1610, 112
  %v2233 = vpop.permute.xlu0 %2232
  %2234 = vrot.lane.b32.xlu0 %v1613, 112
  %v2235 = vpop.permute.xlu0 %2234
  %2236 = vrot.lane.b32.xlu0 %v1618, 112
  %v2237 = vpop.permute.xlu0 %2236
  %2238 = vrot.lane.b32.xlu0 %v1621, 112
  %v2239 = vpop.permute.xlu0 %2238
  %2240 = vrot.lane.b32.xlu0 %v1626, 112
  %v2241 = vpop.permute.xlu0 %2240
  %2242 = vrot.lane.b32.xlu0 %v1629, 112
  %v2243 = vpop.permute.xlu0 %2242
  %2244 = vrot.lane.b32.xlu0 %v1634, 112
  %v2245 = vpop.permute.xlu0 %2244
  %2246 = vrot.lane.b32.xlu0 %v1637, 112
  %v2247 = vpop.permute.xlu0 %2246
  %2248 = vrot.lane.b32.xlu0 %v1642, 112
  %v2249 = vpop.permute.xlu0 %2248
  %2250 = vrot.lane.b32.xlu0 %v1645, 112
  %v2251 = vpop.permute.xlu0 %2250
  %2252 = vrot.lane.b32.xlu0 %v1650, 112
  %v2253 = vpop.permute.xlu0 %2252
  %2254 = vrot.lane.b32.xlu0 %v1653, 112
  %v2255 = vpop.permute.xlu0 %2254
  %2256 = vrot.lane.b32.xlu0 %v1658, 112
  %v2257 = vpop.permute.xlu0 %2256
  %2258 = vrot.lane.b32.xlu0 %v1661, 112
  %v2259 = vpop.permute.xlu0 %2258
  %2260 = vrot.lane.b32.xlu0 %v1666, 112
  %v2261 = vpop.permute.xlu0 %2260
  %2262 = vrot.lane.b32.xlu0 %v1669, 112
  %v2263 = vpop.permute.xlu0 %2262
  %2264 = vrot.lane.b32.xlu0 %v1674, 112
  %v2265 = vpop.permute.xlu0 %2264
  %2266 = vrot.lane.b32.xlu0 %v1677, 112
  %v2267 = vpop.permute.xlu0 %2266
  %v2464 = vmax.f32 %v898, %v1877
  %v2465 = vmax.f32 %v901, %v1879
  %v2466 = vmax.f32 %v906, %v1881
  %v2467 = vmax.f32 %v909, %v1883
  %v2468 = vmax.f32 %v914, %v1885
  %v2469 = vmax.f32 %v917, %v1887
  %v2470 = vmax.f32 %v922, %v1889
  %v2471 = vmax.f32 %v925, %v1891
  %v2472 = vmax.f32 %v930, %v1893
  %v2473 = vmax.f32 %v933, %v1895
  %v2474 = vmax.f32 %v938, %v1897
  %v2475 = vmax.f32 %v941, %v1899
  %v2476 = vmax.f32 %v946, %v1901
  %v2477 = vmax.f32 %v949, %v1903
  %v2478 = vmax.f32 %v954, %v1905
  %v2479 = vmax.f32 %v957, %v1907
  %v2480 = vmax.f32 %v962, %v1909
  %v2481 = vmax.f32 %v965, %v1911
  %v2482 = vmax.f32 %v970, %v1913
  %v2483 = vmax.f32 %v973, %v1915
  %v2484 = vmax.f32 %v978, %v1917
  %v2485 = vmax.f32 %v981, %v1919
  %v2486 = vmax.f32 %v986, %v1921
  %v2487 = vmax.f32 %v989, %v1923
  %v2488 = vmax.f32 %v994, %v1925
  %v2489 = vmax.f32 %v997, %v1927
  %v2490 = vmax.f32 %v1002, %v1929
  %v2491 = vmax.f32 %v1005, %v1931
  %v2492 = vmax.f32 %v1010, %v1933
  %v2493 = vmax.f32 %v1013, %v1935
  %v2494 = vmax.f32 %v1018, %v1937
  %v2495 = vmax.f32 %v1021, %v1939
  %v2496 = vmax.f32 %v1026, %v1941
  %v2497 = vmax.f32 %v1029, %v1943
  %v2498 = vmax.f32 %v1034, %v1945
  %v2499 = vmax.f32 %v1037, %v1947
  %v2500 = vmax.f32 %v1042, %v1949
  %v2501 = vmax.f32 %v1045, %v1951
  %v2502 = vmax.f32 %v1050, %v1953
  %v2503 = vmax.f32 %v1053, %v1955
  %v2504 = vmax.f32 %v1058, %v1957
  %v2505 = vmax.f32 %v1061, %v1959
  %v2506 = vmax.f32 %v1066, %v1961
  %v2507 = vmax.f32 %v1069, %v1963
  %v2508 = vmax.f32 %v1074, %v1965
  %v2509 = vmax.f32 %v1077, %v1967
  %v2510 = vmax.f32 %v1082, %v1969
  %v2511 = vmax.f32 %v1085, %v1971
  %v2512 = vmax.f32 %v1090, %v1973
  %v2513 = vmax.f32 %v1093, %v1975
  %v2514 = vmax.f32 %v1098, %v1977
  %v2515 = vmax.f32 %v1101, %v1979
  %v2516 = vmax.f32 %v1106, %v1981
  %v2517 = vmax.f32 %v1109, %v1983
  %v2518 = vmax.f32 %v1114, %v1985
  %v2519 = vmax.f32 %v1117, %v1987
  %v2520 = vmax.f32 %v1122, %v1989
  %v2521 = vmax.f32 %v1125, %v1991
  %v2522 = vmax.f32 %v1130, %v1993
  %v2523 = vmax.f32 %v1133, %v1995
  %v2524 = vmax.f32 %v1138, %v1997
  %v2525 = vmax.f32 %v1141, %v1999
  %v2526 = vmax.f32 %v1146, %v2001
  %v2527 = vmax.f32 %v1149, %v2003
  %v2528 = vmax.f32 %v1154, %v2005
  %v2529 = vmax.f32 %v1157, %v2007
  %v2530 = vmax.f32 %v1162, %v2009
  %v2531 = vmax.f32 %v1165, %v2011
  %v2532 = vmax.f32 %v1170, %v2013
  %v2533 = vmax.f32 %v1173, %v2015
  %v2534 = vmax.f32 %v1178, %v2017
  %v2535 = vmax.f32 %v1181, %v2019
  %v2536 = vmax.f32 %v1186, %v2021
  %v2537 = vmax.f32 %v1189, %v2023
  %v2538 = vmax.f32 %v1194, %v2025
  %v2539 = vmax.f32 %v1197, %v2027
  %v2540 = vmax.f32 %v1202, %v2029
  %v2541 = vmax.f32 %v1205, %v2031
  %v2542 = vmax.f32 %v1210, %v2033
  %v2543 = vmax.f32 %v1213, %v2035
  %v2544 = vmax.f32 %v1218, %v2037
  %v2545 = vmax.f32 %v1221, %v2039
  %v2546 = vmax.f32 %v1226, %v2041
  %v2547 = vmax.f32 %v1229, %v2043
  %v2548 = vmax.f32 %v1234, %v2045
  %v2549 = vmax.f32 %v1237, %v2047
  %v2550 = vmax.f32 %v1242, %v2049
  %v2551 = vmax.f32 %v1245, %v2051
  %v2552 = vmax.f32 %v1250, %v2053
  %v2553 = vmax.f32 %v1253, %v2055
  %v2554 = vmax.f32 %v1258, %v2057
  %v2555 = vmax.f32 %v1261, %v2059
  %v2556 = vmax.f32 %v1266, %v2061
  %v2557 = vmax.f32 %v1269, %v2063
  %v2558 = vmax.f32 %v1274, %v2065
  %v2559 = vmax.f32 %v1277, %v2067
  %v2560 = vmax.f32 %v1282, %v2069
  %v2561 = vmax.f32 %v1285, %v2071
  %v2562 = vmax.f32 %v1290, %v2073
  %v2563 = vmax.f32 %v1293, %v2075
  %v2564 = vmax.f32 %v1298, %v2077
  %v2565 = vmax.f32 %v1301, %v2079
  %v2566 = vmax.f32 %v1306, %v2081
  %v2567 = vmax.f32 %v1309, %v2083
  %v2568 = vmax.f32 %v1314, %v2085
  %v2569 = vmax.f32 %v1317, %v2087
  %v2570 = vmax.f32 %v1322, %v2089
  %v2571 = vmax.f32 %v1325, %v2091
  %v2572 = vmax.f32 %v1330, %v2093
  %v2573 = vmax.f32 %v1333, %v2095
  %v2574 = vmax.f32 %v1338, %v2097
  %v2575 = vmax.f32 %v1341, %v2099
  %v2576 = vmax.f32 %v1346, %v2101
  %v2577 = vmax.f32 %v1349, %v2103
  %v2578 = vmax.f32 %v1354, %v2105
  %v2579 = vmax.f32 %v1357, %v2107
  %v2580 = vmax.f32 %v1362, %v2109
  %v2581 = vmax.f32 %v1365, %v2111
  %v2582 = vmax.f32 %v1370, %v2113
  %v2583 = vmax.f32 %v1373, %v2115
  %v2584 = vmax.f32 %v1378, %v2117
  %v2585 = vmax.f32 %v1381, %v2119
  %v2586 = vmax.f32 %v1386, %v2121
  %v2587 = vmax.f32 %v1389, %v2123
  %v2588 = vmax.f32 %v1394, %v2125
  %v2589 = vmax.f32 %v1397, %v2127
  %v2590 = vmax.f32 %v1402, %v2129
  %v2591 = vmax.f32 %v1405, %v2131
  %v2592 = vmax.f32 %v1410, %v2133
  %v2593 = vmax.f32 %v1413, %v2135
  %v2594 = vmax.f32 %v1418, %v2137
  %v2595 = vmax.f32 %v1421, %v2139
  %v2596 = vmax.f32 %v1426, %v2141
  %v2597 = vmax.f32 %v1429, %v2143
  %v2598 = vmax.f32 %v1434, %v2145
  %v2599 = vmax.f32 %v1437, %v2147
  %v2600 = vmax.f32 %v1442, %v2149
  %v2601 = vmax.f32 %v1445, %v2151
  %v2602 = vmax.f32 %v1450, %v2153
  %v2603 = vmax.f32 %v1453, %v2155
  %v2604 = vmax.f32 %v1458, %v2157
  %v2605 = vmax.f32 %v1461, %v2159
  %v2606 = vmax.f32 %v1466, %v2161
  %v2607 = vmax.f32 %v1469, %v2163
  %v2608 = vmax.f32 %v1474, %v2165
  %v2609 = vmax.f32 %v1477, %v2167
  %v2610 = vmax.f32 %v1482, %v2169
  %v2611 = vmax.f32 %v1485, %v2171
  %v2612 = vmax.f32 %v1490, %v2173
  %v2613 = vmax.f32 %v1493, %v2175
  %v2614 = vmax.f32 %v1498, %v2177
  %v2615 = vmax.f32 %v1501, %v2179
  %v2616 = vmax.f32 %v1506, %v2181
  %v2617 = vmax.f32 %v1509, %v2183
  %v2618 = vmax.f32 %v1514, %v2185
  %v2619 = vmax.f32 %v1517, %v2187
  %v2620 = vmax.f32 %v1522, %v2189
  %v2621 = vmax.f32 %v1525, %v2191
  %v2622 = vmax.f32 %v1530, %v2193
  %v2623 = vmax.f32 %v1533, %v2195
  %v2624 = vmax.f32 %v1538, %v2197
  %v2625 = vmax.f32 %v1541, %v2199
  %v2626 = vmax.f32 %v1546, %v2201
  %v2627 = vmax.f32 %v1549, %v2203
  %v2628 = vmax.f32 %v1554, %v2205
  %v2629 = vmax.f32 %v1557, %v2207
  %v2630 = vmax.f32 %v1562, %v2209
  %v2631 = vmax.f32 %v1565, %v2211
  %v2632 = vmax.f32 %v1570, %v2213
  %v2633 = vmax.f32 %v1573, %v2215
  %v2634 = vmax.f32 %v1578, %v2217
  %v2635 = vmax.f32 %v1581, %v2219
  %v2636 = vmax.f32 %v1586, %v2221
  %v2637 = vmax.f32 %v1589, %v2223
  %v2638 = vmax.f32 %v1594, %v2225
  %v2639 = vmax.f32 %v1597, %v2227
  %v2640 = vmax.f32 %v1602, %v2229
  %v2641 = vmax.f32 %v1605, %v2231
  %v2642 = vmax.f32 %v1610, %v2233
  %v2643 = vmax.f32 %v1613, %v2235
  %v2644 = vmax.f32 %v1618, %v2237
  %v2645 = vmax.f32 %v1621, %v2239
  %v2646 = vmax.f32 %v1626, %v2241
  %v2647 = vmax.f32 %v1629, %v2243
  %v2648 = vmax.f32 %v1634, %v2245
  %v2649 = vmax.f32 %v1637, %v2247
  %v2650 = vmax.f32 %v1642, %v2249
  %v2651 = vmax.f32 %v1645, %v2251
  %v2652 = vmax.f32 %v1650, %v2253
  %v2653 = vmax.f32 %v1653, %v2255
  %v2654 = vmax.f32 %v1658, %v2257
  %v2655 = vmax.f32 %v1661, %v2259
  %v2656 = vmax.f32 %v1666, %v2261
  %v2657 = vmax.f32 %v1669, %v2263
  %v2658 = vmax.f32 %v1674, %v2265
  %v2659 = vmax.f32 %v1677, %v2267
  %2856 = vrot.lane.b32.xlu0 %v2464, 96
  %v2857 = vpop.permute.xlu0 %2856
  %2858 = vrot.lane.b32.xlu0 %v2465, 96
  %v2859 = vpop.permute.xlu0 %2858
  %2860 = vrot.lane.b32.xlu0 %v2466, 96
  %v2861 = vpop.permute.xlu0 %2860
  %2862 = vrot.lane.b32.xlu0 %v2467, 96
  %v2863 = vpop.permute.xlu0 %2862
  %2864 = vrot.lane.b32.xlu0 %v2468, 96
  %v2865 = vpop.permute.xlu0 %2864
  %2866 = vrot.lane.b32.xlu0 %v2469, 96
  %v2867 = vpop.permute.xlu0 %2866
  %2868 = vrot.lane.b32.xlu0 %v2470, 96
  %v2869 = vpop.permute.xlu0 %2868
  %2870 = vrot.lane.b32.xlu0 %v2471, 96
  %v2871 = vpop.permute.xlu0 %2870
  %2872 = vrot.lane.b32.xlu0 %v2472, 96
  %v2873 = vpop.permute.xlu0 %2872
  %2874 = vrot.lane.b32.xlu0 %v2473, 96
  %v2875 = vpop.permute.xlu0 %2874
  %2876 = vrot.lane.b32.xlu0 %v2474, 96
  %v2877 = vpop.permute.xlu0 %2876
  %2878 = vrot.lane.b32.xlu0 %v2475, 96
  %v2879 = vpop.permute.xlu0 %2878
  %2880 = vrot.lane.b32.xlu0 %v2476, 96
  %v2881 = vpop.permute.xlu0 %2880
  %2882 = vrot.lane.b32.xlu0 %v2477, 96
  %v2883 = vpop.permute.xlu0 %2882
  %2884 = vrot.lane.b32.xlu0 %v2478, 96
  %v2885 = vpop.permute.xlu0 %2884
  %2886 = vrot.lane.b32.xlu0 %v2479, 96
  %v2887 = vpop.permute.xlu0 %2886
  %2888 = vrot.lane.b32.xlu0 %v2480, 96
  %v2889 = vpop.permute.xlu0 %2888
  %2890 = vrot.lane.b32.xlu0 %v2481, 96
  %v2891 = vpop.permute.xlu0 %2890
  %2892 = vrot.lane.b32.xlu0 %v2482, 96
  %v2893 = vpop.permute.xlu0 %2892
  %2894 = vrot.lane.b32.xlu0 %v2483, 96
  %v2895 = vpop.permute.xlu0 %2894
  %2896 = vrot.lane.b32.xlu0 %v2484, 96
  %v2897 = vpop.permute.xlu0 %2896
  %2898 = vrot.lane.b32.xlu0 %v2485, 96
  %v2899 = vpop.permute.xlu0 %2898
  %2900 = vrot.lane.b32.xlu0 %v2486, 96
  %v2901 = vpop.permute.xlu0 %2900
  %2902 = vrot.lane.b32.xlu0 %v2487, 96
  %v2903 = vpop.permute.xlu0 %2902
  %2904 = vrot.lane.b32.xlu0 %v2488, 96
  %v2905 = vpop.permute.xlu0 %2904
  %2906 = vrot.lane.b32.xlu0 %v2489, 96
  %v2907 = vpop.permute.xlu0 %2906
  %2908 = vrot.lane.b32.xlu0 %v2490, 96
  %v2909 = vpop.permute.xlu0 %2908
  %2910 = vrot.lane.b32.xlu0 %v2491, 96
  %v2911 = vpop.permute.xlu0 %2910
  %2912 = vrot.lane.b32.xlu0 %v2492, 96
  %v2913 = vpop.permute.xlu0 %2912
  %2914 = vrot.lane.b32.xlu0 %v2493, 96
  %v2915 = vpop.permute.xlu0 %2914
  %2916 = vrot.lane.b32.xlu0 %v2494, 96
  %v2917 = vpop.permute.xlu0 %2916
  %2918 = vrot.lane.b32.xlu0 %v2495, 96
  %v2919 = vpop.permute.xlu0 %2918
  %2920 = vrot.lane.b32.xlu0 %v2496, 96
  %v2921 = vpop.permute.xlu0 %2920
  %2922 = vrot.lane.b32.xlu0 %v2497, 96
  %v2923 = vpop.permute.xlu0 %2922
  %2924 = vrot.lane.b32.xlu0 %v2498, 96
  %v2925 = vpop.permute.xlu0 %2924
  %2926 = vrot.lane.b32.xlu0 %v2499, 96
  %v2927 = vpop.permute.xlu0 %2926
  %2928 = vrot.lane.b32.xlu0 %v2500, 96
  %v2929 = vpop.permute.xlu0 %2928
  %2930 = vrot.lane.b32.xlu0 %v2501, 96
  %v2931 = vpop.permute.xlu0 %2930
  %2932 = vrot.lane.b32.xlu0 %v2502, 96
  %v2933 = vpop.permute.xlu0 %2932
  %2934 = vrot.lane.b32.xlu0 %v2503, 96
  %v2935 = vpop.permute.xlu0 %2934
  %2936 = vrot.lane.b32.xlu0 %v2504, 96
  %v2937 = vpop.permute.xlu0 %2936
  %2938 = vrot.lane.b32.xlu0 %v2505, 96
  %v2939 = vpop.permute.xlu0 %2938
  %2940 = vrot.lane.b32.xlu0 %v2506, 96
  %v2941 = vpop.permute.xlu0 %2940
  %2942 = vrot.lane.b32.xlu0 %v2507, 96
  %v2943 = vpop.permute.xlu0 %2942
  %2944 = vrot.lane.b32.xlu0 %v2508, 96
  %v2945 = vpop.permute.xlu0 %2944
  %2946 = vrot.lane.b32.xlu0 %v2509, 96
  %v2947 = vpop.permute.xlu0 %2946
  %2948 = vrot.lane.b32.xlu0 %v2510, 96
  %v2949 = vpop.permute.xlu0 %2948
  %2950 = vrot.lane.b32.xlu0 %v2511, 96
  %v2951 = vpop.permute.xlu0 %2950
  %2952 = vrot.lane.b32.xlu0 %v2512, 96
  %v2953 = vpop.permute.xlu0 %2952
  %2954 = vrot.lane.b32.xlu0 %v2513, 96
  %v2955 = vpop.permute.xlu0 %2954
  %2956 = vrot.lane.b32.xlu0 %v2514, 96
  %v2957 = vpop.permute.xlu0 %2956
  %2958 = vrot.lane.b32.xlu0 %v2515, 96
  %v2959 = vpop.permute.xlu0 %2958
  %2960 = vrot.lane.b32.xlu0 %v2516, 96
  %v2961 = vpop.permute.xlu0 %2960
  %2962 = vrot.lane.b32.xlu0 %v2517, 96
  %v2963 = vpop.permute.xlu0 %2962
  %2964 = vrot.lane.b32.xlu0 %v2518, 96
  %v2965 = vpop.permute.xlu0 %2964
  %2966 = vrot.lane.b32.xlu0 %v2519, 96
  %v2967 = vpop.permute.xlu0 %2966
  %2968 = vrot.lane.b32.xlu0 %v2520, 96
  %v2969 = vpop.permute.xlu0 %2968
  %2970 = vrot.lane.b32.xlu0 %v2521, 96
  %v2971 = vpop.permute.xlu0 %2970
  %2972 = vrot.lane.b32.xlu0 %v2522, 96
  %v2973 = vpop.permute.xlu0 %2972
  %2974 = vrot.lane.b32.xlu0 %v2523, 96
  %v2975 = vpop.permute.xlu0 %2974
  %2976 = vrot.lane.b32.xlu0 %v2524, 96
  %v2977 = vpop.permute.xlu0 %2976
  %2978 = vrot.lane.b32.xlu0 %v2525, 96
  %v2979 = vpop.permute.xlu0 %2978
  %2980 = vrot.lane.b32.xlu0 %v2526, 96
  %v2981 = vpop.permute.xlu0 %2980
  %2982 = vrot.lane.b32.xlu0 %v2527, 96
  %v2983 = vpop.permute.xlu0 %2982
  %2984 = vrot.lane.b32.xlu0 %v2528, 96
  %v2985 = vpop.permute.xlu0 %2984
  %2986 = vrot.lane.b32.xlu0 %v2529, 96
  %v2987 = vpop.permute.xlu0 %2986
  %2988 = vrot.lane.b32.xlu0 %v2530, 96
  %v2989 = vpop.permute.xlu0 %2988
  %2990 = vrot.lane.b32.xlu0 %v2531, 96
  %v2991 = vpop.permute.xlu0 %2990
  %2992 = vrot.lane.b32.xlu0 %v2532, 96
  %v2993 = vpop.permute.xlu0 %2992
  %2994 = vrot.lane.b32.xlu0 %v2533, 96
  %v2995 = vpop.permute.xlu0 %2994
  %2996 = vrot.lane.b32.xlu0 %v2534, 96
  %v2997 = vpop.permute.xlu0 %2996
  %2998 = vrot.lane.b32.xlu0 %v2535, 96
  %v2999 = vpop.permute.xlu0 %2998
  %3000 = vrot.lane.b32.xlu0 %v2536, 96
  %v3001 = vpop.permute.xlu0 %3000
  %3002 = vrot.lane.b32.xlu0 %v2537, 96
  %v3003 = vpop.permute.xlu0 %3002
  %3004 = vrot.lane.b32.xlu0 %v2538, 96
  %v3005 = vpop.permute.xlu0 %3004
  %3006 = vrot.lane.b32.xlu0 %v2539, 96
  %v3007 = vpop.permute.xlu0 %3006
  %3008 = vrot.lane.b32.xlu0 %v2540, 96
  %v3009 = vpop.permute.xlu0 %3008
  %3010 = vrot.lane.b32.xlu0 %v2541, 96
  %v3011 = vpop.permute.xlu0 %3010
  %3012 = vrot.lane.b32.xlu0 %v2542, 96
  %v3013 = vpop.permute.xlu0 %3012
  %3014 = vrot.lane.b32.xlu0 %v2543, 96
  %v3015 = vpop.permute.xlu0 %3014
  %3016 = vrot.lane.b32.xlu0 %v2544, 96
  %v3017 = vpop.permute.xlu0 %3016
  %3018 = vrot.lane.b32.xlu0 %v2545, 96
  %v3019 = vpop.permute.xlu0 %3018
  %3020 = vrot.lane.b32.xlu0 %v2546, 96
  %v3021 = vpop.permute.xlu0 %3020
  %3022 = vrot.lane.b32.xlu0 %v2547, 96
  %v3023 = vpop.permute.xlu0 %3022
  %3024 = vrot.lane.b32.xlu0 %v2548, 96
  %v3025 = vpop.permute.xlu0 %3024
  %3026 = vrot.lane.b32.xlu0 %v2549, 96
  %v3027 = vpop.permute.xlu0 %3026
  %3028 = vrot.lane.b32.xlu0 %v2550, 96
  %v3029 = vpop.permute.xlu0 %3028
  %3030 = vrot.lane.b32.xlu0 %v2551, 96
  %v3031 = vpop.permute.xlu0 %3030
  %3032 = vrot.lane.b32.xlu0 %v2552, 96
  %v3033 = vpop.permute.xlu0 %3032
  %3034 = vrot.lane.b32.xlu0 %v2553, 96
  %v3035 = vpop.permute.xlu0 %3034
  %3036 = vrot.lane.b32.xlu0 %v2554, 96
  %v3037 = vpop.permute.xlu0 %3036
  %3038 = vrot.lane.b32.xlu0 %v2555, 96
  %v3039 = vpop.permute.xlu0 %3038
  %3040 = vrot.lane.b32.xlu0 %v2556, 96
  %v3041 = vpop.permute.xlu0 %3040
  %3042 = vrot.lane.b32.xlu0 %v2557, 96
  %v3043 = vpop.permute.xlu0 %3042
  %3044 = vrot.lane.b32.xlu0 %v2558, 96
  %v3045 = vpop.permute.xlu0 %3044
  %3046 = vrot.lane.b32.xlu0 %v2559, 96
  %v3047 = vpop.permute.xlu0 %3046
  %3048 = vrot.lane.b32.xlu0 %v2560, 96
  %v3049 = vpop.permute.xlu0 %3048
  %3050 = vrot.lane.b32.xlu0 %v2561, 96
  %v3051 = vpop.permute.xlu0 %3050
  %3052 = vrot.lane.b32.xlu0 %v2562, 96
  %v3053 = vpop.permute.xlu0 %3052
  %3054 = vrot.lane.b32.xlu0 %v2563, 96
  %v3055 = vpop.permute.xlu0 %3054
  %3056 = vrot.lane.b32.xlu0 %v2564, 96
  %v3057 = vpop.permute.xlu0 %3056
  %3058 = vrot.lane.b32.xlu0 %v2565, 96
  %v3059 = vpop.permute.xlu0 %3058
  %3060 = vrot.lane.b32.xlu0 %v2566, 96
  %v3061 = vpop.permute.xlu0 %3060
  %3062 = vrot.lane.b32.xlu0 %v2567, 96
  %v3063 = vpop.permute.xlu0 %3062
  %3064 = vrot.lane.b32.xlu0 %v2568, 96
  %v3065 = vpop.permute.xlu0 %3064
  %3066 = vrot.lane.b32.xlu0 %v2569, 96
  %v3067 = vpop.permute.xlu0 %3066
  %3068 = vrot.lane.b32.xlu0 %v2570, 96
  %v3069 = vpop.permute.xlu0 %3068
  %3070 = vrot.lane.b32.xlu0 %v2571, 96
  %v3071 = vpop.permute.xlu0 %3070
  %3072 = vrot.lane.b32.xlu0 %v2572, 96
  %v3073 = vpop.permute.xlu0 %3072
  %3074 = vrot.lane.b32.xlu0 %v2573, 96
  %v3075 = vpop.permute.xlu0 %3074
  %3076 = vrot.lane.b32.xlu0 %v2574, 96
  %v3077 = vpop.permute.xlu0 %3076
  %3078 = vrot.lane.b32.xlu0 %v2575, 96
  %v3079 = vpop.permute.xlu0 %3078
  %3080 = vrot.lane.b32.xlu0 %v2576, 96
  %v3081 = vpop.permute.xlu0 %3080
  %3082 = vrot.lane.b32.xlu0 %v2577, 96
  %v3083 = vpop.permute.xlu0 %3082
  %3084 = vrot.lane.b32.xlu0 %v2578, 96
  %v3085 = vpop.permute.xlu0 %3084
  %3086 = vrot.lane.b32.xlu0 %v2579, 96
  %v3087 = vpop.permute.xlu0 %3086
  %3088 = vrot.lane.b32.xlu0 %v2580, 96
  %v3089 = vpop.permute.xlu0 %3088
  %3090 = vrot.lane.b32.xlu0 %v2581, 96
  %v3091 = vpop.permute.xlu0 %3090
  %3092 = vrot.lane.b32.xlu0 %v2582, 96
  %v3093 = vpop.permute.xlu0 %3092
  %3094 = vrot.lane.b32.xlu0 %v2583, 96
  %v3095 = vpop.permute.xlu0 %3094
  %3096 = vrot.lane.b32.xlu0 %v2584, 96
  %v3097 = vpop.permute.xlu0 %3096
  %3098 = vrot.lane.b32.xlu0 %v2585, 96
  %v3099 = vpop.permute.xlu0 %3098
  %3100 = vrot.lane.b32.xlu0 %v2586, 96
  %v3101 = vpop.permute.xlu0 %3100
  %3102 = vrot.lane.b32.xlu0 %v2587, 96
  %v3103 = vpop.permute.xlu0 %3102
  %3104 = vrot.lane.b32.xlu0 %v2588, 96
  %v3105 = vpop.permute.xlu0 %3104
  %3106 = vrot.lane.b32.xlu0 %v2589, 96
  %v3107 = vpop.permute.xlu0 %3106
  %3108 = vrot.lane.b32.xlu0 %v2590, 96
  %v3109 = vpop.permute.xlu0 %3108
  %3110 = vrot.lane.b32.xlu0 %v2591, 96
  %v3111 = vpop.permute.xlu0 %3110
  %3112 = vrot.lane.b32.xlu0 %v2592, 96
  %v3113 = vpop.permute.xlu0 %3112
  %3114 = vrot.lane.b32.xlu0 %v2593, 96
  %v3115 = vpop.permute.xlu0 %3114
  %3116 = vrot.lane.b32.xlu0 %v2594, 96
  %v3117 = vpop.permute.xlu0 %3116
  %3118 = vrot.lane.b32.xlu0 %v2595, 96
  %v3119 = vpop.permute.xlu0 %3118
  %3120 = vrot.lane.b32.xlu0 %v2596, 96
  %v3121 = vpop.permute.xlu0 %3120
  %3122 = vrot.lane.b32.xlu0 %v2597, 96
  %v3123 = vpop.permute.xlu0 %3122
  %3124 = vrot.lane.b32.xlu0 %v2598, 96
  %v3125 = vpop.permute.xlu0 %3124
  %3126 = vrot.lane.b32.xlu0 %v2599, 96
  %v3127 = vpop.permute.xlu0 %3126
  %3128 = vrot.lane.b32.xlu0 %v2600, 96
  %v3129 = vpop.permute.xlu0 %3128
  %3130 = vrot.lane.b32.xlu0 %v2601, 96
  %v3131 = vpop.permute.xlu0 %3130
  %3132 = vrot.lane.b32.xlu0 %v2602, 96
  %v3133 = vpop.permute.xlu0 %3132
  %3134 = vrot.lane.b32.xlu0 %v2603, 96
  %v3135 = vpop.permute.xlu0 %3134
  %3136 = vrot.lane.b32.xlu0 %v2604, 96
  %v3137 = vpop.permute.xlu0 %3136
  %3138 = vrot.lane.b32.xlu0 %v2605, 96
  %v3139 = vpop.permute.xlu0 %3138
  %3140 = vrot.lane.b32.xlu0 %v2606, 96
  %v3141 = vpop.permute.xlu0 %3140
  %3142 = vrot.lane.b32.xlu0 %v2607, 96
  %v3143 = vpop.permute.xlu0 %3142
  %3144 = vrot.lane.b32.xlu0 %v2608, 96
  %v3145 = vpop.permute.xlu0 %3144
  %3146 = vrot.lane.b32.xlu0 %v2609, 96
  %v3147 = vpop.permute.xlu0 %3146
  %3148 = vrot.lane.b32.xlu0 %v2610, 96
  %v3149 = vpop.permute.xlu0 %3148
  %3150 = vrot.lane.b32.xlu0 %v2611, 96
  %v3151 = vpop.permute.xlu0 %3150
  %3152 = vrot.lane.b32.xlu0 %v2612, 96
  %v3153 = vpop.permute.xlu0 %3152
  %3154 = vrot.lane.b32.xlu0 %v2613, 96
  %v3155 = vpop.permute.xlu0 %3154
  %3156 = vrot.lane.b32.xlu0 %v2614, 96
  %v3157 = vpop.permute.xlu0 %3156
  %3158 = vrot.lane.b32.xlu0 %v2615, 96
  %v3159 = vpop.permute.xlu0 %3158
  %3160 = vrot.lane.b32.xlu0 %v2616, 96
  %v3161 = vpop.permute.xlu0 %3160
  %3162 = vrot.lane.b32.xlu0 %v2617, 96
  %v3163 = vpop.permute.xlu0 %3162
  %3164 = vrot.lane.b32.xlu0 %v2618, 96
  %v3165 = vpop.permute.xlu0 %3164
  %3166 = vrot.lane.b32.xlu0 %v2619, 96
  %v3167 = vpop.permute.xlu0 %3166
  %3168 = vrot.lane.b32.xlu0 %v2620, 96
  %v3169 = vpop.permute.xlu0 %3168
  %3170 = vrot.lane.b32.xlu0 %v2621, 96
  %v3171 = vpop.permute.xlu0 %3170
  %3172 = vrot.lane.b32.xlu0 %v2622, 96
  %v3173 = vpop.permute.xlu0 %3172
  %3174 = vrot.lane.b32.xlu0 %v2623, 96
  %v3175 = vpop.permute.xlu0 %3174
  %3176 = vrot.lane.b32.xlu0 %v2624, 96
  %v3177 = vpop.permute.xlu0 %3176
  %3178 = vrot.lane.b32.xlu0 %v2625, 96
  %v3179 = vpop.permute.xlu0 %3178
  %3180 = vrot.lane.b32.xlu0 %v2626, 96
  %v3181 = vpop.permute.xlu0 %3180
  %3182 = vrot.lane.b32.xlu0 %v2627, 96
  %v3183 = vpop.permute.xlu0 %3182
  %3184 = vrot.lane.b32.xlu0 %v2628, 96
  %v3185 = vpop.permute.xlu0 %3184
  %3186 = vrot.lane.b32.xlu0 %v2629, 96
  %v3187 = vpop.permute.xlu0 %3186
  %3188 = vrot.lane.b32.xlu0 %v2630, 96
  %v3189 = vpop.permute.xlu0 %3188
  %3190 = vrot.lane.b32.xlu0 %v2631, 96
  %v3191 = vpop.permute.xlu0 %3190
  %3192 = vrot.lane.b32.xlu0 %v2632, 96
  %v3193 = vpop.permute.xlu0 %3192
  %3194 = vrot.lane.b32.xlu0 %v2633, 96
  %v3195 = vpop.permute.xlu0 %3194
  %3196 = vrot.lane.b32.xlu0 %v2634, 96
  %v3197 = vpop.permute.xlu0 %3196
  %3198 = vrot.lane.b32.xlu0 %v2635, 96
  %v3199 = vpop.permute.xlu0 %3198
  %3200 = vrot.lane.b32.xlu0 %v2636, 96
  %v3201 = vpop.permute.xlu0 %3200
  %3202 = vrot.lane.b32.xlu0 %v2637, 96
  %v3203 = vpop.permute.xlu0 %3202
  %3204 = vrot.lane.b32.xlu0 %v2638, 96
  %v3205 = vpop.permute.xlu0 %3204
  %3206 = vrot.lane.b32.xlu0 %v2639, 96
  %v3207 = vpop.permute.xlu0 %3206
  %3208 = vrot.lane.b32.xlu0 %v2640, 96
  %v3209 = vpop.permute.xlu0 %3208
  %3210 = vrot.lane.b32.xlu0 %v2641, 96
  %v3211 = vpop.permute.xlu0 %3210
  %3212 = vrot.lane.b32.xlu0 %v2642, 96
  %v3213 = vpop.permute.xlu0 %3212
  %3214 = vrot.lane.b32.xlu0 %v2643, 96
  %v3215 = vpop.permute.xlu0 %3214
  %3216 = vrot.lane.b32.xlu0 %v2644, 96
  %v3217 = vpop.permute.xlu0 %3216
  %3218 = vrot.lane.b32.xlu0 %v2645, 96
  %v3219 = vpop.permute.xlu0 %3218
  %3220 = vrot.lane.b32.xlu0 %v2646, 96
  %v3221 = vpop.permute.xlu0 %3220
  %3222 = vrot.lane.b32.xlu0 %v2647, 96
  %v3223 = vpop.permute.xlu0 %3222
  %3224 = vrot.lane.b32.xlu0 %v2648, 96
  %v3225 = vpop.permute.xlu0 %3224
  %3226 = vrot.lane.b32.xlu0 %v2649, 96
  %v3227 = vpop.permute.xlu0 %3226
  %3228 = vrot.lane.b32.xlu0 %v2650, 96
  %v3229 = vpop.permute.xlu0 %3228
  %3230 = vrot.lane.b32.xlu0 %v2651, 96
  %v3231 = vpop.permute.xlu0 %3230
  %3232 = vrot.lane.b32.xlu0 %v2652, 96
  %v3233 = vpop.permute.xlu0 %3232
  %3234 = vrot.lane.b32.xlu0 %v2653, 96
  %v3235 = vpop.permute.xlu0 %3234
  %3236 = vrot.lane.b32.xlu0 %v2654, 96
  %v3237 = vpop.permute.xlu0 %3236
  %3238 = vrot.lane.b32.xlu0 %v2655, 96
  %v3239 = vpop.permute.xlu0 %3238
  %3240 = vrot.lane.b32.xlu0 %v2656, 96
  %v3241 = vpop.permute.xlu0 %3240
  %3242 = vrot.lane.b32.xlu0 %v2657, 96
  %v3243 = vpop.permute.xlu0 %3242
  %3244 = vrot.lane.b32.xlu0 %v2658, 96
  %v3245 = vpop.permute.xlu0 %3244
  %3246 = vrot.lane.b32.xlu0 %v2659, 96
  %v3247 = vpop.permute.xlu0 %3246
  %v3444 = vmax.f32 %v2464, %v2857
  %v3445 = vmax.f32 %v2465, %v2859
  %v3446 = vmax.f32 %v2466, %v2861
  %v3447 = vmax.f32 %v2467, %v2863
  %v3448 = vmax.f32 %v2468, %v2865
  %v3449 = vmax.f32 %v2469, %v2867
  %v3450 = vmax.f32 %v2470, %v2869
  %v3451 = vmax.f32 %v2471, %v2871
  %v3452 = vmax.f32 %v2472, %v2873
  %v3453 = vmax.f32 %v2473, %v2875
  %v3454 = vmax.f32 %v2474, %v2877
  %v3455 = vmax.f32 %v2475, %v2879
  %v3456 = vmax.f32 %v2476, %v2881
  %v3457 = vmax.f32 %v2477, %v2883
  %v3458 = vmax.f32 %v2478, %v2885
  %v3459 = vmax.f32 %v2479, %v2887
  %v3460 = vmax.f32 %v2480, %v2889
  %v3461 = vmax.f32 %v2481, %v2891
  %v3462 = vmax.f32 %v2482, %v2893
  %v3463 = vmax.f32 %v2483, %v2895
  %v3464 = vmax.f32 %v2484, %v2897
  %v3465 = vmax.f32 %v2485, %v2899
  %v3466 = vmax.f32 %v2486, %v2901
  %v3467 = vmax.f32 %v2487, %v2903
  %v3468 = vmax.f32 %v2488, %v2905
  %v3469 = vmax.f32 %v2489, %v2907
  %v3470 = vmax.f32 %v2490, %v2909
  %v3471 = vmax.f32 %v2491, %v2911
  %v3472 = vmax.f32 %v2492, %v2913
  %v3473 = vmax.f32 %v2493, %v2915
  %v3474 = vmax.f32 %v2494, %v2917
  %v3475 = vmax.f32 %v2495, %v2919
  %v3476 = vmax.f32 %v2496, %v2921
  %v3477 = vmax.f32 %v2497, %v2923
  %v3478 = vmax.f32 %v2498, %v2925
  %v3479 = vmax.f32 %v2499, %v2927
  %v3480 = vmax.f32 %v2500, %v2929
  %v3481 = vmax.f32 %v2501, %v2931
  %v3482 = vmax.f32 %v2502, %v2933
  %v3483 = vmax.f32 %v2503, %v2935
  %v3484 = vmax.f32 %v2504, %v2937
  %v3485 = vmax.f32 %v2505, %v2939
  %v3486 = vmax.f32 %v2506, %v2941
  %v3487 = vmax.f32 %v2507, %v2943
  %v3488 = vmax.f32 %v2508, %v2945
  %v3489 = vmax.f32 %v2509, %v2947
  %v3490 = vmax.f32 %v2510, %v2949
  %v3491 = vmax.f32 %v2511, %v2951
  %v3492 = vmax.f32 %v2512, %v2953
  %v3493 = vmax.f32 %v2513, %v2955
  %v3494 = vmax.f32 %v2514, %v2957
  %v3495 = vmax.f32 %v2515, %v2959
  %v3496 = vmax.f32 %v2516, %v2961
  %v3497 = vmax.f32 %v2517, %v2963
  %v3498 = vmax.f32 %v2518, %v2965
  %v3499 = vmax.f32 %v2519, %v2967
  %v3500 = vmax.f32 %v2520, %v2969
  %v3501 = vmax.f32 %v2521, %v2971
  %v3502 = vmax.f32 %v2522, %v2973
  %v3503 = vmax.f32 %v2523, %v2975
  %v3504 = vmax.f32 %v2524, %v2977
  %v3505 = vmax.f32 %v2525, %v2979
  %v3506 = vmax.f32 %v2526, %v2981
  %v3507 = vmax.f32 %v2527, %v2983
  %v3508 = vmax.f32 %v2528, %v2985
  %v3509 = vmax.f32 %v2529, %v2987
  %v3510 = vmax.f32 %v2530, %v2989
  %v3511 = vmax.f32 %v2531, %v2991
  %v3512 = vmax.f32 %v2532, %v2993
  %v3513 = vmax.f32 %v2533, %v2995
  %v3514 = vmax.f32 %v2534, %v2997
  %v3515 = vmax.f32 %v2535, %v2999
  %v3516 = vmax.f32 %v2536, %v3001
  %v3517 = vmax.f32 %v2537, %v3003
  %v3518 = vmax.f32 %v2538, %v3005
  %v3519 = vmax.f32 %v2539, %v3007
  %v3520 = vmax.f32 %v2540, %v3009
  %v3521 = vmax.f32 %v2541, %v3011
  %v3522 = vmax.f32 %v2542, %v3013
  %v3523 = vmax.f32 %v2543, %v3015
  %v3524 = vmax.f32 %v2544, %v3017
  %v3525 = vmax.f32 %v2545, %v3019
  %v3526 = vmax.f32 %v2546, %v3021
  %v3527 = vmax.f32 %v2547, %v3023
  %v3528 = vmax.f32 %v2548, %v3025
  %v3529 = vmax.f32 %v2549, %v3027
  %v3530 = vmax.f32 %v2550, %v3029
  %v3531 = vmax.f32 %v2551, %v3031
  %v3532 = vmax.f32 %v2552, %v3033
  %v3533 = vmax.f32 %v2553, %v3035
  %v3534 = vmax.f32 %v2554, %v3037
  %v3535 = vmax.f32 %v2555, %v3039
  %v3536 = vmax.f32 %v2556, %v3041
  %v3537 = vmax.f32 %v2557, %v3043
  %v3538 = vmax.f32 %v2558, %v3045
  %v3539 = vmax.f32 %v2559, %v3047
  %v3540 = vmax.f32 %v2560, %v3049
  %v3541 = vmax.f32 %v2561, %v3051
  %v3542 = vmax.f32 %v2562, %v3053
  %v3543 = vmax.f32 %v2563, %v3055
  %v3544 = vmax.f32 %v2564, %v3057
  %v3545 = vmax.f32 %v2565, %v3059
  %v3546 = vmax.f32 %v2566, %v3061
  %v3547 = vmax.f32 %v2567, %v3063
  %v3548 = vmax.f32 %v2568, %v3065
  %v3549 = vmax.f32 %v2569, %v3067
  %v3550 = vmax.f32 %v2570, %v3069
  %v3551 = vmax.f32 %v2571, %v3071
  %v3552 = vmax.f32 %v2572, %v3073
  %v3553 = vmax.f32 %v2573, %v3075
  %v3554 = vmax.f32 %v2574, %v3077
  %v3555 = vmax.f32 %v2575, %v3079
  %v3556 = vmax.f32 %v2576, %v3081
  %v3557 = vmax.f32 %v2577, %v3083
  %v3558 = vmax.f32 %v2578, %v3085
  %v3559 = vmax.f32 %v2579, %v3087
  %v3560 = vmax.f32 %v2580, %v3089
  %v3561 = vmax.f32 %v2581, %v3091
  %v3562 = vmax.f32 %v2582, %v3093
  %v3563 = vmax.f32 %v2583, %v3095
  %v3564 = vmax.f32 %v2584, %v3097
  %v3565 = vmax.f32 %v2585, %v3099
  %v3566 = vmax.f32 %v2586, %v3101
  %v3567 = vmax.f32 %v2587, %v3103
  %v3568 = vmax.f32 %v2588, %v3105
  %v3569 = vmax.f32 %v2589, %v3107
  %v3570 = vmax.f32 %v2590, %v3109
  %v3571 = vmax.f32 %v2591, %v3111
  %v3572 = vmax.f32 %v2592, %v3113
  %v3573 = vmax.f32 %v2593, %v3115
  %v3574 = vmax.f32 %v2594, %v3117
  %v3575 = vmax.f32 %v2595, %v3119
  %v3576 = vmax.f32 %v2596, %v3121
  %v3577 = vmax.f32 %v2597, %v3123
  %v3578 = vmax.f32 %v2598, %v3125
  %v3579 = vmax.f32 %v2599, %v3127
  %v3580 = vmax.f32 %v2600, %v3129
  %v3581 = vmax.f32 %v2601, %v3131
  %v3582 = vmax.f32 %v2602, %v3133
  %v3583 = vmax.f32 %v2603, %v3135
  %v3584 = vmax.f32 %v2604, %v3137
  %v3585 = vmax.f32 %v2605, %v3139
  %v3586 = vmax.f32 %v2606, %v3141
  %v3587 = vmax.f32 %v2607, %v3143
  %v3588 = vmax.f32 %v2608, %v3145
  %v3589 = vmax.f32 %v2609, %v3147
  %v3590 = vmax.f32 %v2610, %v3149
  %v3591 = vmax.f32 %v2611, %v3151
  %v3592 = vmax.f32 %v2612, %v3153
  %v3593 = vmax.f32 %v2613, %v3155
  %v3594 = vmax.f32 %v2614, %v3157
  %v3595 = vmax.f32 %v2615, %v3159
  %v3596 = vmax.f32 %v2616, %v3161
  %v3597 = vmax.f32 %v2617, %v3163
  %v3598 = vmax.f32 %v2618, %v3165
  %v3599 = vmax.f32 %v2619, %v3167
  %v3600 = vmax.f32 %v2620, %v3169
  %v3601 = vmax.f32 %v2621, %v3171
  %v3602 = vmax.f32 %v2622, %v3173
  %v3603 = vmax.f32 %v2623, %v3175
  %v3604 = vmax.f32 %v2624, %v3177
  %v3605 = vmax.f32 %v2625, %v3179
  %v3606 = vmax.f32 %v2626, %v3181
  %v3607 = vmax.f32 %v2627, %v3183
  %v3608 = vmax.f32 %v2628, %v3185
  %v3609 = vmax.f32 %v2629, %v3187
  %v3610 = vmax.f32 %v2630, %v3189
  %v3611 = vmax.f32 %v2631, %v3191
  %v3612 = vmax.f32 %v2632, %v3193
  %v3613 = vmax.f32 %v2633, %v3195
  %v3614 = vmax.f32 %v2634, %v3197
  %v3615 = vmax.f32 %v2635, %v3199
  %v3616 = vmax.f32 %v2636, %v3201
  %v3617 = vmax.f32 %v2637, %v3203
  %v3618 = vmax.f32 %v2638, %v3205
  %v3619 = vmax.f32 %v2639, %v3207
  %v3620 = vmax.f32 %v2640, %v3209
  %v3621 = vmax.f32 %v2641, %v3211
  %v3622 = vmax.f32 %v2642, %v3213
  %v3623 = vmax.f32 %v2643, %v3215
  %v3624 = vmax.f32 %v2644, %v3217
  %v3625 = vmax.f32 %v2645, %v3219
  %v3626 = vmax.f32 %v2646, %v3221
  %v3627 = vmax.f32 %v2647, %v3223
  %v3628 = vmax.f32 %v2648, %v3225
  %v3629 = vmax.f32 %v2649, %v3227
  %v3630 = vmax.f32 %v2650, %v3229
  %v3631 = vmax.f32 %v2651, %v3231
  %v3632 = vmax.f32 %v2652, %v3233
  %v3633 = vmax.f32 %v2653, %v3235
  %v3634 = vmax.f32 %v2654, %v3237
  %v3635 = vmax.f32 %v2655, %v3239
  %v3636 = vmax.f32 %v2656, %v3241
  %v3637 = vmax.f32 %v2657, %v3243
  %v3638 = vmax.f32 %v2658, %v3245
  %v3639 = vmax.f32 %v2659, %v3247
  %v3640 = vld [vmem:[%s2] sm:$0x1]
  %v3642 = vlaneseq
  %v3643 = vshrl.u32 %v3642, 7
  %v3644 = vsub.s32 0, %v3643
  %v3645 = vrot.slane %v3640, %v3644
  %v3647 = vadd.f32 %v3444, %v3645
  %v3648 = vadd.f32 %v3445, %v3645
  %v3649 = vadd.f32 %v3446, %v3645
  %v3650 = vadd.f32 %v3447, %v3645
  %v3651 = vadd.f32 %v3448, %v3645
  %v3652 = vadd.f32 %v3449, %v3645
  %v3653 = vadd.f32 %v3450, %v3645
  %v3654 = vadd.f32 %v3451, %v3645
  %v3655 = vadd.f32 %v3452, %v3645
  %v3656 = vadd.f32 %v3453, %v3645
  %v3657 = vadd.f32 %v3454, %v3645
  %v3658 = vadd.f32 %v3455, %v3645
  %v3659 = vadd.f32 %v3456, %v3645
  %v3660 = vadd.f32 %v3457, %v3645
  %v3661 = vadd.f32 %v3458, %v3645
  %v3662 = vadd.f32 %v3459, %v3645
  %v3663 = vadd.f32 %v3460, %v3645
  %v3664 = vadd.f32 %v3461, %v3645
  %v3665 = vadd.f32 %v3462, %v3645
  %v3666 = vadd.f32 %v3463, %v3645
  %v3667 = vadd.f32 %v3464, %v3645
  %v3668 = vadd.f32 %v3465, %v3645
  %v3669 = vadd.f32 %v3466, %v3645
  %v3670 = vadd.f32 %v3467, %v3645
  %v3671 = vadd.f32 %v3468, %v3645
  %v3672 = vadd.f32 %v3469, %v3645
  %v3673 = vadd.f32 %v3470, %v3645
  %v3674 = vadd.f32 %v3471, %v3645
  %v3675 = vadd.f32 %v3472, %v3645
  %v3676 = vadd.f32 %v3473, %v3645
  %v3677 = vadd.f32 %v3474, %v3645
  %v3678 = vadd.f32 %v3475, %v3645
  %v3679 = vadd.f32 %v3476, %v3645
  %v3680 = vadd.f32 %v3477, %v3645
  %v3681 = vadd.f32 %v3478, %v3645
  %v3682 = vadd.f32 %v3479, %v3645
  %v3683 = vadd.f32 %v3480, %v3645
  %v3684 = vadd.f32 %v3481, %v3645
  %v3685 = vadd.f32 %v3482, %v3645
  %v3686 = vadd.f32 %v3483, %v3645
  %v3687 = vadd.f32 %v3484, %v3645
  %v3688 = vadd.f32 %v3485, %v3645
  %v3689 = vadd.f32 %v3486, %v3645
  %v3690 = vadd.f32 %v3487, %v3645
  %v3691 = vadd.f32 %v3488, %v3645
  %v3692 = vadd.f32 %v3489, %v3645
  %v3693 = vadd.f32 %v3490, %v3645
  %v3694 = vadd.f32 %v3491, %v3645
  %v3695 = vadd.f32 %v3492, %v3645
  %v3696 = vadd.f32 %v3493, %v3645
  %v3697 = vadd.f32 %v3494, %v3645
  %v3698 = vadd.f32 %v3495, %v3645
  %v3699 = vadd.f32 %v3496, %v3645
  %v3700 = vadd.f32 %v3497, %v3645
  %v3701 = vadd.f32 %v3498, %v3645
  %v3702 = vadd.f32 %v3499, %v3645
  %v3703 = vadd.f32 %v3500, %v3645
  %v3704 = vadd.f32 %v3501, %v3645
  %v3705 = vadd.f32 %v3502, %v3645
  %v3706 = vadd.f32 %v3503, %v3645
  %v3707 = vadd.f32 %v3504, %v3645
  %v3708 = vadd.f32 %v3505, %v3645
  %v3709 = vadd.f32 %v3506, %v3645
  %v3710 = vadd.f32 %v3507, %v3645
  %v3711 = vadd.f32 %v3508, %v3645
  %v3712 = vadd.f32 %v3509, %v3645
  %v3713 = vadd.f32 %v3510, %v3645
  %v3714 = vadd.f32 %v3511, %v3645
  %v3715 = vadd.f32 %v3512, %v3645
  %v3716 = vadd.f32 %v3513, %v3645
  %v3717 = vadd.f32 %v3514, %v3645
  %v3718 = vadd.f32 %v3515, %v3645
  %v3719 = vadd.f32 %v3516, %v3645
  %v3720 = vadd.f32 %v3517, %v3645
  %v3721 = vadd.f32 %v3518, %v3645
  %v3722 = vadd.f32 %v3519, %v3645
  %v3723 = vadd.f32 %v3520, %v3645
  %v3724 = vadd.f32 %v3521, %v3645
  %v3725 = vadd.f32 %v3522, %v3645
  %v3726 = vadd.f32 %v3523, %v3645
  %v3727 = vadd.f32 %v3524, %v3645
  %v3728 = vadd.f32 %v3525, %v3645
  %v3729 = vadd.f32 %v3526, %v3645
  %v3730 = vadd.f32 %v3527, %v3645
  %v3731 = vadd.f32 %v3528, %v3645
  %v3732 = vadd.f32 %v3529, %v3645
  %v3733 = vadd.f32 %v3530, %v3645
  %v3734 = vadd.f32 %v3531, %v3645
  %v3735 = vadd.f32 %v3532, %v3645
  %v3736 = vadd.f32 %v3533, %v3645
  %v3737 = vadd.f32 %v3534, %v3645
  %v3738 = vadd.f32 %v3535, %v3645
  %v3739 = vadd.f32 %v3536, %v3645
  %v3740 = vadd.f32 %v3537, %v3645
  %v3741 = vadd.f32 %v3538, %v3645
  %v3742 = vadd.f32 %v3539, %v3645
  %v3743 = vadd.f32 %v3540, %v3645
  %v3744 = vadd.f32 %v3541, %v3645
  %v3745 = vadd.f32 %v3542, %v3645
  %v3746 = vadd.f32 %v3543, %v3645
  %v3747 = vadd.f32 %v3544, %v3645
  %v3748 = vadd.f32 %v3545, %v3645
  %v3749 = vadd.f32 %v3546, %v3645
  %v3750 = vadd.f32 %v3547, %v3645
  %v3751 = vadd.f32 %v3548, %v3645
  %v3752 = vadd.f32 %v3549, %v3645
  %v3753 = vadd.f32 %v3550, %v3645
  %v3754 = vadd.f32 %v3551, %v3645
  %v3755 = vadd.f32 %v3552, %v3645
  %v3756 = vadd.f32 %v3553, %v3645
  %v3757 = vadd.f32 %v3554, %v3645
  %v3758 = vadd.f32 %v3555, %v3645
  %v3759 = vadd.f32 %v3556, %v3645
  %v3760 = vadd.f32 %v3557, %v3645
  %v3761 = vadd.f32 %v3558, %v3645
  %v3762 = vadd.f32 %v3559, %v3645
  %v3763 = vadd.f32 %v3560, %v3645
  %v3764 = vadd.f32 %v3561, %v3645
  %v3765 = vadd.f32 %v3562, %v3645
  %v3766 = vadd.f32 %v3563, %v3645
  %v3767 = vadd.f32 %v3564, %v3645
  %v3768 = vadd.f32 %v3565, %v3645
  %v3769 = vadd.f32 %v3566, %v3645
  %v3770 = vadd.f32 %v3567, %v3645
  %v3771 = vadd.f32 %v3568, %v3645
  %v3772 = vadd.f32 %v3569, %v3645
  %v3773 = vadd.f32 %v3570, %v3645
  %v3774 = vadd.f32 %v3571, %v3645
  %v3775 = vadd.f32 %v3572, %v3645
  %v3776 = vadd.f32 %v3573, %v3645
  %v3777 = vadd.f32 %v3574, %v3645
  %v3778 = vadd.f32 %v3575, %v3645
  %v3779 = vadd.f32 %v3576, %v3645
  %v3780 = vadd.f32 %v3577, %v3645
  %v3781 = vadd.f32 %v3578, %v3645
  %v3782 = vadd.f32 %v3579, %v3645
  %v3783 = vadd.f32 %v3580, %v3645
  %v3784 = vadd.f32 %v3581, %v3645
  %v3785 = vadd.f32 %v3582, %v3645
  %v3786 = vadd.f32 %v3583, %v3645
  %v3787 = vadd.f32 %v3584, %v3645
  %v3788 = vadd.f32 %v3585, %v3645
  %v3789 = vadd.f32 %v3586, %v3645
  %v3790 = vadd.f32 %v3587, %v3645
  %v3791 = vadd.f32 %v3588, %v3645
  %v3792 = vadd.f32 %v3589, %v3645
  %v3793 = vadd.f32 %v3590, %v3645
  %v3794 = vadd.f32 %v3591, %v3645
  %v3795 = vadd.f32 %v3592, %v3645
  %v3796 = vadd.f32 %v3593, %v3645
  %v3797 = vadd.f32 %v3594, %v3645
  %v3798 = vadd.f32 %v3595, %v3645
  %v3799 = vadd.f32 %v3596, %v3645
  %v3800 = vadd.f32 %v3597, %v3645
  %v3801 = vadd.f32 %v3598, %v3645
  %v3802 = vadd.f32 %v3599, %v3645
  %v3803 = vadd.f32 %v3600, %v3645
  %v3804 = vadd.f32 %v3601, %v3645
  %v3805 = vadd.f32 %v3602, %v3645
  %v3806 = vadd.f32 %v3603, %v3645
  %v3807 = vadd.f32 %v3604, %v3645
  %v3808 = vadd.f32 %v3605, %v3645
  %v3809 = vadd.f32 %v3606, %v3645
  %v3810 = vadd.f32 %v3607, %v3645
  %v3811 = vadd.f32 %v3608, %v3645
  %v3812 = vadd.f32 %v3609, %v3645
  %v3813 = vadd.f32 %v3610, %v3645
  %v3814 = vadd.f32 %v3611, %v3645
  %v3815 = vadd.f32 %v3612, %v3645
  %v3816 = vadd.f32 %v3613, %v3645
  %v3817 = vadd.f32 %v3614, %v3645
  %v3818 = vadd.f32 %v3615, %v3645
  %v3819 = vadd.f32 %v3616, %v3645
  %v3820 = vadd.f32 %v3617, %v3645
  %v3821 = vadd.f32 %v3618, %v3645
  %v3822 = vadd.f32 %v3619, %v3645
  %v3823 = vadd.f32 %v3620, %v3645
  %v3824 = vadd.f32 %v3621, %v3645
  %v3825 = vadd.f32 %v3622, %v3645
  %v3826 = vadd.f32 %v3623, %v3645
  %v3827 = vadd.f32 %v3624, %v3645
  %v3828 = vadd.f32 %v3625, %v3645
  %v3829 = vadd.f32 %v3626, %v3645
  %v3830 = vadd.f32 %v3627, %v3645
  %v3831 = vadd.f32 %v3628, %v3645
  %v3832 = vadd.f32 %v3629, %v3645
  %v3833 = vadd.f32 %v3630, %v3645
  %v3834 = vadd.f32 %v3631, %v3645
  %v3835 = vadd.f32 %v3632, %v3645
  %v3836 = vadd.f32 %v3633, %v3645
  %v3837 = vadd.f32 %v3634, %v3645
  %v3838 = vadd.f32 %v3635, %v3645
  %v3839 = vadd.f32 %v3636, %v3645
  %v3840 = vadd.f32 %v3637, %v3645
  %v3841 = vadd.f32 %v3638, %v3645
  %v3842 = vadd.f32 %v3639, %v3645
  %v3843 = vsub.f32 0.0, %v3647
  %v3844 = vsub.f32 0.0, %v3648
  %v3845 = vsub.f32 0.0, %v3649
  %v3846 = vsub.f32 0.0, %v3650
  %v3847 = vsub.f32 0.0, %v3651
  %v3848 = vsub.f32 0.0, %v3652
  %v3849 = vsub.f32 0.0, %v3653
  %v3850 = vsub.f32 0.0, %v3654
  %v3851 = vsub.f32 0.0, %v3655
  %v3852 = vsub.f32 0.0, %v3656
  %v3853 = vsub.f32 0.0, %v3657
  %v3854 = vsub.f32 0.0, %v3658
  %v3855 = vsub.f32 0.0, %v3659
  %v3856 = vsub.f32 0.0, %v3660
  %v3857 = vsub.f32 0.0, %v3661
  %v3858 = vsub.f32 0.0, %v3662
  %v3859 = vsub.f32 0.0, %v3663
  %v3860 = vsub.f32 0.0, %v3664
  %v3861 = vsub.f32 0.0, %v3665
  %v3862 = vsub.f32 0.0, %v3666
  %v3863 = vsub.f32 0.0, %v3667
  %v3864 = vsub.f32 0.0, %v3668
  %v3865 = vsub.f32 0.0, %v3669
  %v3866 = vsub.f32 0.0, %v3670
  %v3867 = vsub.f32 0.0, %v3671
  %v3868 = vsub.f32 0.0, %v3672
  %v3869 = vsub.f32 0.0, %v3673
  %v3870 = vsub.f32 0.0, %v3674
  %v3871 = vsub.f32 0.0, %v3675
  %v3872 = vsub.f32 0.0, %v3676
  %v3873 = vsub.f32 0.0, %v3677
  %v3874 = vsub.f32 0.0, %v3678
  %v3875 = vsub.f32 0.0, %v3679
  %v3876 = vsub.f32 0.0, %v3680
  %v3877 = vsub.f32 0.0, %v3681
  %v3878 = vsub.f32 0.0, %v3682
  %v3879 = vsub.f32 0.0, %v3683
  %v3880 = vsub.f32 0.0, %v3684
  %v3881 = vsub.f32 0.0, %v3685
  %v3882 = vsub.f32 0.0, %v3686
  %v3883 = vsub.f32 0.0, %v3687
  %v3884 = vsub.f32 0.0, %v3688
  %v3885 = vsub.f32 0.0, %v3689
  %v3886 = vsub.f32 0.0, %v3690
  %v3887 = vsub.f32 0.0, %v3691
  %v3888 = vsub.f32 0.0, %v3692
  %v3889 = vsub.f32 0.0, %v3693
  %v3890 = vsub.f32 0.0, %v3694
  %v3891 = vsub.f32 0.0, %v3695
  %v3892 = vsub.f32 0.0, %v3696
  %v3893 = vsub.f32 0.0, %v3697
  %v3894 = vsub.f32 0.0, %v3698
  %v3895 = vsub.f32 0.0, %v3699
  %v3896 = vsub.f32 0.0, %v3700
  %v3897 = vsub.f32 0.0, %v3701
  %v3898 = vsub.f32 0.0, %v3702
  %v3899 = vsub.f32 0.0, %v3703
  %v3900 = vsub.f32 0.0, %v3704
  %v3901 = vsub.f32 0.0, %v3705
  %v3902 = vsub.f32 0.0, %v3706
  %v3903 = vsub.f32 0.0, %v3707
  %v3904 = vsub.f32 0.0, %v3708
  %v3905 = vsub.f32 0.0, %v3709
  %v3906 = vsub.f32 0.0, %v3710
  %v3907 = vsub.f32 0.0, %v3711
  %v3908 = vsub.f32 0.0, %v3712
  %v3909 = vsub.f32 0.0, %v3713
  %v3910 = vsub.f32 0.0, %v3714
  %v3911 = vsub.f32 0.0, %v3715
  %v3912 = vsub.f32 0.0, %v3716
  %v3913 = vsub.f32 0.0, %v3717
  %v3914 = vsub.f32 0.0, %v3718
  %v3915 = vsub.f32 0.0, %v3719
  %v3916 = vsub.f32 0.0, %v3720
  %v3917 = vsub.f32 0.0, %v3721
  %v3918 = vsub.f32 0.0, %v3722
  %v3919 = vsub.f32 0.0, %v3723
  %v3920 = vsub.f32 0.0, %v3724
  %v3921 = vsub.f32 0.0, %v3725
  %v3922 = vsub.f32 0.0, %v3726
  %v3923 = vsub.f32 0.0, %v3727
  %v3924 = vsub.f32 0.0, %v3728
  %v3925 = vsub.f32 0.0, %v3729
  %v3926 = vsub.f32 0.0, %v3730
  %v3927 = vsub.f32 0.0, %v3731
  %v3928 = vsub.f32 0.0, %v3732
  %v3929 = vsub.f32 0.0, %v3733
  %v3930 = vsub.f32 0.0, %v3734
  %v3931 = vsub.f32 0.0, %v3735
  %v3932 = vsub.f32 0.0, %v3736
  %v3933 = vsub.f32 0.0, %v3737
  %v3934 = vsub.f32 0.0, %v3738
  %v3935 = vsub.f32 0.0, %v3739
  %v3936 = vsub.f32 0.0, %v3740
  %v3937 = vsub.f32 0.0, %v3741
  %v3938 = vsub.f32 0.0, %v3742
  %v3939 = vsub.f32 0.0, %v3743
  %v3940 = vsub.f32 0.0, %v3744
  %v3941 = vsub.f32 0.0, %v3745
  %v3942 = vsub.f32 0.0, %v3746
  %v3943 = vsub.f32 0.0, %v3747
  %v3944 = vsub.f32 0.0, %v3748
  %v3945 = vsub.f32 0.0, %v3749
  %v3946 = vsub.f32 0.0, %v3750
  %v3947 = vsub.f32 0.0, %v3751
  %v3948 = vsub.f32 0.0, %v3752
  %v3949 = vsub.f32 0.0, %v3753
  %v3950 = vsub.f32 0.0, %v3754
  %v3951 = vsub.f32 0.0, %v3755
  %v3952 = vsub.f32 0.0, %v3756
  %v3953 = vsub.f32 0.0, %v3757
  %v3954 = vsub.f32 0.0, %v3758
  %v3955 = vsub.f32 0.0, %v3759
  %v3956 = vsub.f32 0.0, %v3760
  %v3957 = vsub.f32 0.0, %v3761
  %v3958 = vsub.f32 0.0, %v3762
  %v3959 = vsub.f32 0.0, %v3763
  %v3960 = vsub.f32 0.0, %v3764
  %v3961 = vsub.f32 0.0, %v3765
  %v3962 = vsub.f32 0.0, %v3766
  %v3963 = vsub.f32 0.0, %v3767
  %v3964 = vsub.f32 0.0, %v3768
  %v3965 = vsub.f32 0.0, %v3769
  %v3966 = vsub.f32 0.0, %v3770
  %v3967 = vsub.f32 0.0, %v3771
  %v3968 = vsub.f32 0.0, %v3772
  %v3969 = vsub.f32 0.0, %v3773
  %v3970 = vsub.f32 0.0, %v3774
  %v3971 = vsub.f32 0.0, %v3775
  %v3972 = vsub.f32 0.0, %v3776
  %v3973 = vsub.f32 0.0, %v3777
  %v3974 = vsub.f32 0.0, %v3778
  %v3975 = vsub.f32 0.0, %v3779
  %v3976 = vsub.f32 0.0, %v3780
  %v3977 = vsub.f32 0.0, %v3781
  %v3978 = vsub.f32 0.0, %v3782
  %v3979 = vsub.f32 0.0, %v3783
  %v3980 = vsub.f32 0.0, %v3784
  %v3981 = vsub.f32 0.0, %v3785
  %v3982 = vsub.f32 0.0, %v3786
  %v3983 = vsub.f32 0.0, %v3787
  %v3984 = vsub.f32 0.0, %v3788
  %v3985 = vsub.f32 0.0, %v3789
  %v3986 = vsub.f32 0.0, %v3790
  %v3987 = vsub.f32 0.0, %v3791
  %v3988 = vsub.f32 0.0, %v3792
  %v3989 = vsub.f32 0.0, %v3793
  %v3990 = vsub.f32 0.0, %v3794
  %v3991 = vsub.f32 0.0, %v3795
  %v3992 = vsub.f32 0.0, %v3796
  %v3993 = vsub.f32 0.0, %v3797
  %v3994 = vsub.f32 0.0, %v3798
  %v3995 = vsub.f32 0.0, %v3799
  %v3996 = vsub.f32 0.0, %v3800
  %v3997 = vsub.f32 0.0, %v3801
  %v3998 = vsub.f32 0.0, %v3802
  %v3999 = vsub.f32 0.0, %v3803
  %v4000 = vsub.f32 0.0, %v3804
  %v4001 = vsub.f32 0.0, %v3805
  %v4002 = vsub.f32 0.0, %v3806
  %v4003 = vsub.f32 0.0, %v3807
  %v4004 = vsub.f32 0.0, %v3808
  %v4005 = vsub.f32 0.0, %v3809
  %v4006 = vsub.f32 0.0, %v3810
  %v4007 = vsub.f32 0.0, %v3811
  %v4008 = vsub.f32 0.0, %v3812
  %v4009 = vsub.f32 0.0, %v3813
  %v4010 = vsub.f32 0.0, %v3814
  %v4011 = vsub.f32 0.0, %v3815
  %v4012 = vsub.f32 0.0, %v3816
  %v4013 = vsub.f32 0.0, %v3817
  %v4014 = vsub.f32 0.0, %v3818
  %v4015 = vsub.f32 0.0, %v3819
  %v4016 = vsub.f32 0.0, %v3820
  %v4017 = vsub.f32 0.0, %v3821
  %v4018 = vsub.f32 0.0, %v3822
  %v4019 = vsub.f32 0.0, %v3823
  %v4020 = vsub.f32 0.0, %v3824
  %v4021 = vsub.f32 0.0, %v3825
  %v4022 = vsub.f32 0.0, %v3826
  %v4023 = vsub.f32 0.0, %v3827
  %v4024 = vsub.f32 0.0, %v3828
  %v4025 = vsub.f32 0.0, %v3829
  %v4026 = vsub.f32 0.0, %v3830
  %v4027 = vsub.f32 0.0, %v3831
  %v4028 = vsub.f32 0.0, %v3832
  %v4029 = vsub.f32 0.0, %v3833
  %v4030 = vsub.f32 0.0, %v3834
  %v4031 = vsub.f32 0.0, %v3835
  %v4032 = vsub.f32 0.0, %v3836
  %v4033 = vsub.f32 0.0, %v3837
  %v4034 = vsub.f32 0.0, %v3838
  %v4035 = vsub.f32 0.0, %v3839
  %v4036 = vsub.f32 0.0, %v3840
  %v4037 = vsub.f32 0.0, %v3841
  %v4038 = vsub.f32 0.0, %v3842
  %v4039 = vmul.f32 %v3843, 1.442695
  %v4040 = vpow.pop %v4039
  %v4041 = vmul.f32 %v3844, 1.442695
  %v4042 = vpow.pop %v4041
  %v4043 = vmul.f32 %v3845, 1.442695
  %v4044 = vpow.pop %v4043
  %v4045 = vmul.f32 %v3846, 1.442695
  %v4046 = vpow.pop %v4045
  %v4047 = vmul.f32 %v3847, 1.442695
  %v4048 = vpow.pop %v4047
  %v4049 = vmul.f32 %v3848, 1.442695
  %v4050 = vpow.pop %v4049
  %v4051 = vmul.f32 %v3849, 1.442695
  %v4052 = vpow.pop %v4051
  %v4053 = vmul.f32 %v3850, 1.442695
  %v4054 = vpow.pop %v4053
  %v4055 = vmul.f32 %v3851, 1.442695
  %v4056 = vpow.pop %v4055
  %v4057 = vmul.f32 %v3852, 1.442695
  %v4058 = vpow.pop %v4057
  %v4059 = vmul.f32 %v3853, 1.442695
  %v4060 = vpow.pop %v4059
  %v4061 = vmul.f32 %v3854, 1.442695
  %v4062 = vpow.pop %v4061
  %v4063 = vmul.f32 %v3855, 1.442695
  %v4064 = vpow.pop %v4063
  %v4065 = vmul.f32 %v3856, 1.442695
  %v4066 = vpow.pop %v4065
  %v4067 = vmul.f32 %v3857, 1.442695
  %v4068 = vpow.pop %v4067
  %v4069 = vmul.f32 %v3858, 1.442695
  %v4070 = vpow.pop %v4069
  %v4071 = vmul.f32 %v3859, 1.442695
  %v4072 = vpow.pop %v4071
  %v4073 = vmul.f32 %v3860, 1.442695
  %v4074 = vpow.pop %v4073
  %v4075 = vmul.f32 %v3861, 1.442695
  %v4076 = vpow.pop %v4075
  %v4077 = vmul.f32 %v3862, 1.442695
  %v4078 = vpow.pop %v4077
  %v4079 = vmul.f32 %v3863, 1.442695
  %v4080 = vpow.pop %v4079
  %v4081 = vmul.f32 %v3864, 1.442695
  %v4082 = vpow.pop %v4081
  %v4083 = vmul.f32 %v3865, 1.442695
  %v4084 = vpow.pop %v4083
  %v4085 = vmul.f32 %v3866, 1.442695
  %v4086 = vpow.pop %v4085
  %v4087 = vmul.f32 %v3867, 1.442695
  %v4088 = vpow.pop %v4087
  %v4089 = vmul.f32 %v3868, 1.442695
  %v4090 = vpow.pop %v4089
  %v4091 = vmul.f32 %v3869, 1.442695
  %v4092 = vpow.pop %v4091
  %v4093 = vmul.f32 %v3870, 1.442695
  %v4094 = vpow.pop %v4093
  %v4095 = vmul.f32 %v3871, 1.442695
  %v4096 = vpow.pop %v4095
  %v4097 = vmul.f32 %v3872, 1.442695
  %v4098 = vpow.pop %v4097
  %v4099 = vmul.f32 %v3873, 1.442695
  %v4100 = vpow.pop %v4099
  %v4101 = vmul.f32 %v3874, 1.442695
  %v4102 = vpow.pop %v4101
  %v4103 = vmul.f32 %v3875, 1.442695
  %v4104 = vpow.pop %v4103
  %v4105 = vmul.f32 %v3876, 1.442695
  %v4106 = vpow.pop %v4105
  %v4107 = vmul.f32 %v3877, 1.442695
  %v4108 = vpow.pop %v4107
  %v4109 = vmul.f32 %v3878, 1.442695
  %v4110 = vpow.pop %v4109
  %v4111 = vmul.f32 %v3879, 1.442695
  %v4112 = vpow.pop %v4111
  %v4113 = vmul.f32 %v3880, 1.442695
  %v4114 = vpow.pop %v4113
  %v4115 = vmul.f32 %v3881, 1.442695
  %v4116 = vpow.pop %v4115
  %v4117 = vmul.f32 %v3882, 1.442695
  %v4118 = vpow.pop %v4117
  %v4119 = vmul.f32 %v3883, 1.442695
  %v4120 = vpow.pop %v4119
  %v4121 = vmul.f32 %v3884, 1.442695
  %v4122 = vpow.pop %v4121
  %v4123 = vmul.f32 %v3885, 1.442695
  %v4124 = vpow.pop %v4123
  %v4125 = vmul.f32 %v3886, 1.442695
  %v4126 = vpow.pop %v4125
  %v4127 = vmul.f32 %v3887, 1.442695
  %v4128 = vpow.pop %v4127
  %v4129 = vmul.f32 %v3888, 1.442695
  %v4130 = vpow.pop %v4129
  %v4131 = vmul.f32 %v3889, 1.442695
  %v4132 = vpow.pop %v4131
  %v4133 = vmul.f32 %v3890, 1.442695
  %v4134 = vpow.pop %v4133
  %v4135 = vmul.f32 %v3891, 1.442695
  %v4136 = vpow.pop %v4135
  %v4137 = vmul.f32 %v3892, 1.442695
  %v4138 = vpow.pop %v4137
  %v4139 = vmul.f32 %v3893, 1.442695
  %v4140 = vpow.pop %v4139
  %v4141 = vmul.f32 %v3894, 1.442695
  %v4142 = vpow.pop %v4141
  %v4143 = vmul.f32 %v3895, 1.442695
  %v4144 = vpow.pop %v4143
  %v4145 = vmul.f32 %v3896, 1.442695
  %v4146 = vpow.pop %v4145
  %v4147 = vmul.f32 %v3897, 1.442695
  %v4148 = vpow.pop %v4147
  %v4149 = vmul.f32 %v3898, 1.442695
  %v4150 = vpow.pop %v4149
  %v4151 = vmul.f32 %v3899, 1.442695
  %v4152 = vpow.pop %v4151
  %v4153 = vmul.f32 %v3900, 1.442695
  %v4154 = vpow.pop %v4153
  %v4155 = vmul.f32 %v3901, 1.442695
  %v4156 = vpow.pop %v4155
  %v4157 = vmul.f32 %v3902, 1.442695
  %v4158 = vpow.pop %v4157
  %v4159 = vmul.f32 %v3903, 1.442695
  %v4160 = vpow.pop %v4159
  %v4161 = vmul.f32 %v3904, 1.442695
  %v4162 = vpow.pop %v4161
  %v4163 = vmul.f32 %v3905, 1.442695
  %v4164 = vpow.pop %v4163
  %v4165 = vmul.f32 %v3906, 1.442695
  %v4166 = vpow.pop %v4165
  %v4167 = vmul.f32 %v3907, 1.442695
  %v4168 = vpow.pop %v4167
  %v4169 = vmul.f32 %v3908, 1.442695
  %v4170 = vpow.pop %v4169
  %v4171 = vmul.f32 %v3909, 1.442695
  %v4172 = vpow.pop %v4171
  %v4173 = vmul.f32 %v3910, 1.442695
  %v4174 = vpow.pop %v4173
  %v4175 = vmul.f32 %v3911, 1.442695
  %v4176 = vpow.pop %v4175
  %v4177 = vmul.f32 %v3912, 1.442695
  %v4178 = vpow.pop %v4177
  %v4179 = vmul.f32 %v3913, 1.442695
  %v4180 = vpow.pop %v4179
  %v4181 = vmul.f32 %v3914, 1.442695
  %v4182 = vpow.pop %v4181
  %v4183 = vmul.f32 %v3915, 1.442695
  %v4184 = vpow.pop %v4183
  %v4185 = vmul.f32 %v3916, 1.442695
  %v4186 = vpow.pop %v4185
  %v4187 = vmul.f32 %v3917, 1.442695
  %v4188 = vpow.pop %v4187
  %v4189 = vmul.f32 %v3918, 1.442695
  %v4190 = vpow.pop %v4189
  %v4191 = vmul.f32 %v3919, 1.442695
  %v4192 = vpow.pop %v4191
  %v4193 = vmul.f32 %v3920, 1.442695
  %v4194 = vpow.pop %v4193
  %v4195 = vmul.f32 %v3921, 1.442695
  %v4196 = vpow.pop %v4195
  %v4197 = vmul.f32 %v3922, 1.442695
  %v4198 = vpow.pop %v4197
  %v4199 = vmul.f32 %v3923, 1.442695
  %v4200 = vpow.pop %v4199
  %v4201 = vmul.f32 %v3924, 1.442695
  %v4202 = vpow.pop %v4201
  %v4203 = vmul.f32 %v3925, 1.442695
  %v4204 = vpow.pop %v4203
  %v4205 = vmul.f32 %v3926, 1.442695
  %v4206 = vpow.pop %v4205
  %v4207 = vmul.f32 %v3927, 1.442695
  %v4208 = vpow.pop %v4207
  %v4209 = vmul.f32 %v3928, 1.442695
  %v4210 = vpow.pop %v4209
  %v4211 = vmul.f32 %v3929, 1.442695
  %v4212 = vpow.pop %v4211
  %v4213 = vmul.f32 %v3930, 1.442695
  %v4214 = vpow.pop %v4213
  %v4215 = vmul.f32 %v3931, 1.442695
  %v4216 = vpow.pop %v4215
  %v4217 = vmul.f32 %v3932, 1.442695
  %v4218 = vpow.pop %v4217
  %v4219 = vmul.f32 %v3933, 1.442695
  %v4220 = vpow.pop %v4219
  %v4221 = vmul.f32 %v3934, 1.442695
  %v4222 = vpow.pop %v4221
  %v4223 = vmul.f32 %v3935, 1.442695
  %v4224 = vpow.pop %v4223
  %v4225 = vmul.f32 %v3936, 1.442695
  %v4226 = vpow.pop %v4225
  %v4227 = vmul.f32 %v3937, 1.442695
  %v4228 = vpow.pop %v4227
  %v4229 = vmul.f32 %v3938, 1.442695
  %v4230 = vpow.pop %v4229
  %v4231 = vmul.f32 %v3939, 1.442695
  %v4232 = vpow.pop %v4231
  %v4233 = vmul.f32 %v3940, 1.442695
  %v4234 = vpow.pop %v4233
  %v4235 = vmul.f32 %v3941, 1.442695
  %v4236 = vpow.pop %v4235
  %v4237 = vmul.f32 %v3942, 1.442695
  %v4238 = vpow.pop %v4237
  %v4239 = vmul.f32 %v3943, 1.442695
  %v4240 = vpow.pop %v4239
  %v4241 = vmul.f32 %v3944, 1.442695
  %v4242 = vpow.pop %v4241
  %v4243 = vmul.f32 %v3945, 1.442695
  %v4244 = vpow.pop %v4243
  %v4245 = vmul.f32 %v3946, 1.442695
  %v4246 = vpow.pop %v4245
  %v4247 = vmul.f32 %v3947, 1.442695
  %v4248 = vpow.pop %v4247
  %v4249 = vmul.f32 %v3948, 1.442695
  %v4250 = vpow.pop %v4249
  %v4251 = vmul.f32 %v3949, 1.442695
  %v4252 = vpow.pop %v4251
  %v4253 = vmul.f32 %v3950, 1.442695
  %v4254 = vpow.pop %v4253
  %v4255 = vmul.f32 %v3951, 1.442695
  %v4256 = vpow.pop %v4255
  %v4257 = vmul.f32 %v3952, 1.442695
  %v4258 = vpow.pop %v4257
  %v4259 = vmul.f32 %v3953, 1.442695
  %v4260 = vpow.pop %v4259
  %v4261 = vmul.f32 %v3954, 1.442695
  %v4262 = vpow.pop %v4261
  %v4263 = vmul.f32 %v3955, 1.442695
  %v4264 = vpow.pop %v4263
  %v4265 = vmul.f32 %v3956, 1.442695
  %v4266 = vpow.pop %v4265
  %v4267 = vmul.f32 %v3957, 1.442695
  %v4268 = vpow.pop %v4267
  %v4269 = vmul.f32 %v3958, 1.442695
  %v4270 = vpow.pop %v4269
  %v4271 = vmul.f32 %v3959, 1.442695
  %v4272 = vpow.pop %v4271
  %v4273 = vmul.f32 %v3960, 1.442695
  %v4274 = vpow.pop %v4273
  %v4275 = vmul.f32 %v3961, 1.442695
  %v4276 = vpow.pop %v4275
  %v4277 = vmul.f32 %v3962, 1.442695
  %v4278 = vpow.pop %v4277
  %v4279 = vmul.f32 %v3963, 1.442695
  %v4280 = vpow.pop %v4279
  %v4281 = vmul.f32 %v3964, 1.442695
  %v4282 = vpow.pop %v4281
  %v4283 = vmul.f32 %v3965, 1.442695
  %v4284 = vpow.pop %v4283
  %v4285 = vmul.f32 %v3966, 1.442695
  %v4286 = vpow.pop %v4285
  %v4287 = vmul.f32 %v3967, 1.442695
  %v4288 = vpow.pop %v4287
  %v4289 = vmul.f32 %v3968, 1.442695
  %v4290 = vpow.pop %v4289
  %v4291 = vmul.f32 %v3969, 1.442695
  %v4292 = vpow.pop %v4291
  %v4293 = vmul.f32 %v3970, 1.442695
  %v4294 = vpow.pop %v4293
  %v4295 = vmul.f32 %v3971, 1.442695
  %v4296 = vpow.pop %v4295
  %v4297 = vmul.f32 %v3972, 1.442695
  %v4298 = vpow.pop %v4297
  %v4299 = vmul.f32 %v3973, 1.442695
  %v4300 = vpow.pop %v4299
  %v4301 = vmul.f32 %v3974, 1.442695
  %v4302 = vpow.pop %v4301
  %v4303 = vmul.f32 %v3975, 1.442695
  %v4304 = vpow.pop %v4303
  %v4305 = vmul.f32 %v3976, 1.442695
  %v4306 = vpow.pop %v4305
  %v4307 = vmul.f32 %v3977, 1.442695
  %v4308 = vpow.pop %v4307
  %v4309 = vmul.f32 %v3978, 1.442695
  %v4310 = vpow.pop %v4309
  %v4311 = vmul.f32 %v3979, 1.442695
  %v4312 = vpow.pop %v4311
  %v4313 = vmul.f32 %v3980, 1.442695
  %v4314 = vpow.pop %v4313
  %v4315 = vmul.f32 %v3981, 1.442695
  %v4316 = vpow.pop %v4315
  %v4317 = vmul.f32 %v3982, 1.442695
  %v4318 = vpow.pop %v4317
  %v4319 = vmul.f32 %v3983, 1.442695
  %v4320 = vpow.pop %v4319
  %v4321 = vmul.f32 %v3984, 1.442695
  %v4322 = vpow.pop %v4321
  %v4323 = vmul.f32 %v3985, 1.442695
  %v4324 = vpow.pop %v4323
  %v4325 = vmul.f32 %v3986, 1.442695
  %v4326 = vpow.pop %v4325
  %v4327 = vmul.f32 %v3987, 1.442695
  %v4328 = vpow.pop %v4327
  %v4329 = vmul.f32 %v3988, 1.442695
  %v4330 = vpow.pop %v4329
  %v4331 = vmul.f32 %v3989, 1.442695
  %v4332 = vpow.pop %v4331
  %v4333 = vmul.f32 %v3990, 1.442695
  %v4334 = vpow.pop %v4333
  %v4335 = vmul.f32 %v3991, 1.442695
  %v4336 = vpow.pop %v4335
  %v4337 = vmul.f32 %v3992, 1.442695
  %v4338 = vpow.pop %v4337
  %v4339 = vmul.f32 %v3993, 1.442695
  %v4340 = vpow.pop %v4339
  %v4341 = vmul.f32 %v3994, 1.442695
  %v4342 = vpow.pop %v4341
  %v4343 = vmul.f32 %v3995, 1.442695
  %v4344 = vpow.pop %v4343
  %v4345 = vmul.f32 %v3996, 1.442695
  %v4346 = vpow.pop %v4345
  %v4347 = vmul.f32 %v3997, 1.442695
  %v4348 = vpow.pop %v4347
  %v4349 = vmul.f32 %v3998, 1.442695
  %v4350 = vpow.pop %v4349
  %v4351 = vmul.f32 %v3999, 1.442695
  %v4352 = vpow.pop %v4351
  %v4353 = vmul.f32 %v4000, 1.442695
  %v4354 = vpow.pop %v4353
  %v4355 = vmul.f32 %v4001, 1.442695
  %v4356 = vpow.pop %v4355
  %v4357 = vmul.f32 %v4002, 1.442695
  %v4358 = vpow.pop %v4357
  %v4359 = vmul.f32 %v4003, 1.442695
  %v4360 = vpow.pop %v4359
  %v4361 = vmul.f32 %v4004, 1.442695
  %v4362 = vpow.pop %v4361
  %v4363 = vmul.f32 %v4005, 1.442695
  %v4364 = vpow.pop %v4363
  %v4365 = vmul.f32 %v4006, 1.442695
  %v4366 = vpow.pop %v4365
  %v4367 = vmul.f32 %v4007, 1.442695
  %v4368 = vpow.pop %v4367
  %v4369 = vmul.f32 %v4008, 1.442695
  %v4370 = vpow.pop %v4369
  %v4371 = vmul.f32 %v4009, 1.442695
  %v4372 = vpow.pop %v4371
  %v4373 = vmul.f32 %v4010, 1.442695
  %v4374 = vpow.pop %v4373
  %v4375 = vmul.f32 %v4011, 1.442695
  %v4376 = vpow.pop %v4375
  %v4377 = vmul.f32 %v4012, 1.442695
  %v4378 = vpow.pop %v4377
  %v4379 = vmul.f32 %v4013, 1.442695
  %v4380 = vpow.pop %v4379
  %v4381 = vmul.f32 %v4014, 1.442695
  %v4382 = vpow.pop %v4381
  %v4383 = vmul.f32 %v4015, 1.442695
  %v4384 = vpow.pop %v4383
  %v4385 = vmul.f32 %v4016, 1.442695
  %v4386 = vpow.pop %v4385
  %v4387 = vmul.f32 %v4017, 1.442695
  %v4388 = vpow.pop %v4387
  %v4389 = vmul.f32 %v4018, 1.442695
  %v4390 = vpow.pop %v4389
  %v4391 = vmul.f32 %v4019, 1.442695
  %v4392 = vpow.pop %v4391
  %v4393 = vmul.f32 %v4020, 1.442695
  %v4394 = vpow.pop %v4393
  %v4395 = vmul.f32 %v4021, 1.442695
  %v4396 = vpow.pop %v4395
  %v4397 = vmul.f32 %v4022, 1.442695
  %v4398 = vpow.pop %v4397
  %v4399 = vmul.f32 %v4023, 1.442695
  %v4400 = vpow.pop %v4399
  %v4401 = vmul.f32 %v4024, 1.442695
  %v4402 = vpow.pop %v4401
  %v4403 = vmul.f32 %v4025, 1.442695
  %v4404 = vpow.pop %v4403
  %v4405 = vmul.f32 %v4026, 1.442695
  %v4406 = vpow.pop %v4405
  %v4407 = vmul.f32 %v4027, 1.442695
  %v4408 = vpow.pop %v4407
  %v4409 = vmul.f32 %v4028, 1.442695
  %v4410 = vpow.pop %v4409
  %v4411 = vmul.f32 %v4029, 1.442695
  %v4412 = vpow.pop %v4411
  %v4413 = vmul.f32 %v4030, 1.442695
  %v4414 = vpow.pop %v4413
  %v4415 = vmul.f32 %v4031, 1.442695
  %v4416 = vpow.pop %v4415
  %v4417 = vmul.f32 %v4032, 1.442695
  %v4418 = vpow.pop %v4417
  %v4419 = vmul.f32 %v4033, 1.442695
  %v4420 = vpow.pop %v4419
  %v4421 = vmul.f32 %v4034, 1.442695
  %v4422 = vpow.pop %v4421
  %v4423 = vmul.f32 %v4035, 1.442695
  %v4424 = vpow.pop %v4423
  %v4425 = vmul.f32 %v4036, 1.442695
  %v4426 = vpow.pop %v4425
  %v4427 = vmul.f32 %v4037, 1.442695
  %v4428 = vpow.pop %v4427
  %v4429 = vmul.f32 %v4038, 1.442695
  %v4430 = vpow.pop %v4429
  %v4431 = vadd.f32 %v4040, 1.0
  %v4432 = vadd.f32 %v4042, 1.0
  %v4433 = vadd.f32 %v4044, 1.0
  %v4434 = vadd.f32 %v4046, 1.0
  %v4435 = vadd.f32 %v4048, 1.0
  %v4436 = vadd.f32 %v4050, 1.0
  %v4437 = vadd.f32 %v4052, 1.0
  %v4438 = vadd.f32 %v4054, 1.0
  %v4439 = vadd.f32 %v4056, 1.0
  %v4440 = vadd.f32 %v4058, 1.0
  %v4441 = vadd.f32 %v4060, 1.0
  %v4442 = vadd.f32 %v4062, 1.0
  %v4443 = vadd.f32 %v4064, 1.0
  %v4444 = vadd.f32 %v4066, 1.0
  %v4445 = vadd.f32 %v4068, 1.0
  %v4446 = vadd.f32 %v4070, 1.0
  %v4447 = vadd.f32 %v4072, 1.0
  %v4448 = vadd.f32 %v4074, 1.0
  %v4449 = vadd.f32 %v4076, 1.0
  %v4450 = vadd.f32 %v4078, 1.0
  %v4451 = vadd.f32 %v4080, 1.0
  %v4452 = vadd.f32 %v4082, 1.0
  %v4453 = vadd.f32 %v4084, 1.0
  %v4454 = vadd.f32 %v4086, 1.0
  %v4455 = vadd.f32 %v4088, 1.0
  %v4456 = vadd.f32 %v4090, 1.0
  %v4457 = vadd.f32 %v4092, 1.0
  %v4458 = vadd.f32 %v4094, 1.0
  %v4459 = vadd.f32 %v4096, 1.0
  %v4460 = vadd.f32 %v4098, 1.0
  %v4461 = vadd.f32 %v4100, 1.0
  %v4462 = vadd.f32 %v4102, 1.0
  %v4463 = vadd.f32 %v4104, 1.0
  %v4464 = vadd.f32 %v4106, 1.0
  %v4465 = vadd.f32 %v4108, 1.0
  %v4466 = vadd.f32 %v4110, 1.0
  %v4467 = vadd.f32 %v4112, 1.0
  %v4468 = vadd.f32 %v4114, 1.0
  %v4469 = vadd.f32 %v4116, 1.0
  %v4470 = vadd.f32 %v4118, 1.0
  %v4471 = vadd.f32 %v4120, 1.0
  %v4472 = vadd.f32 %v4122, 1.0
  %v4473 = vadd.f32 %v4124, 1.0
  %v4474 = vadd.f32 %v4126, 1.0
  %v4475 = vadd.f32 %v4128, 1.0
  %v4476 = vadd.f32 %v4130, 1.0
  %v4477 = vadd.f32 %v4132, 1.0
  %v4478 = vadd.f32 %v4134, 1.0
  %v4479 = vadd.f32 %v4136, 1.0
  %v4480 = vadd.f32 %v4138, 1.0
  %v4481 = vadd.f32 %v4140, 1.0
  %v4482 = vadd.f32 %v4142, 1.0
  %v4483 = vadd.f32 %v4144, 1.0
  %v4484 = vadd.f32 %v4146, 1.0
  %v4485 = vadd.f32 %v4148, 1.0
  %v4486 = vadd.f32 %v4150, 1.0
  %v4487 = vadd.f32 %v4152, 1.0
  %v4488 = vadd.f32 %v4154, 1.0
  %v4489 = vadd.f32 %v4156, 1.0
  %v4490 = vadd.f32 %v4158, 1.0
  %v4491 = vadd.f32 %v4160, 1.0
  %v4492 = vadd.f32 %v4162, 1.0
  %v4493 = vadd.f32 %v4164, 1.0
  %v4494 = vadd.f32 %v4166, 1.0
  %v4495 = vadd.f32 %v4168, 1.0
  %v4496 = vadd.f32 %v4170, 1.0
  %v4497 = vadd.f32 %v4172, 1.0
  %v4498 = vadd.f32 %v4174, 1.0
  %v4499 = vadd.f32 %v4176, 1.0
  %v4500 = vadd.f32 %v4178, 1.0
  %v4501 = vadd.f32 %v4180, 1.0
  %v4502 = vadd.f32 %v4182, 1.0
  %v4503 = vadd.f32 %v4184, 1.0
  %v4504 = vadd.f32 %v4186, 1.0
  %v4505 = vadd.f32 %v4188, 1.0
  %v4506 = vadd.f32 %v4190, 1.0
  %v4507 = vadd.f32 %v4192, 1.0
  %v4508 = vadd.f32 %v4194, 1.0
  %v4509 = vadd.f32 %v4196, 1.0
  %v4510 = vadd.f32 %v4198, 1.0
  %v4511 = vadd.f32 %v4200, 1.0
  %v4512 = vadd.f32 %v4202, 1.0
  %v4513 = vadd.f32 %v4204, 1.0
  %v4514 = vadd.f32 %v4206, 1.0
  %v4515 = vadd.f32 %v4208, 1.0
  %v4516 = vadd.f32 %v4210, 1.0
  %v4517 = vadd.f32 %v4212, 1.0
  %v4518 = vadd.f32 %v4214, 1.0
  %v4519 = vadd.f32 %v4216, 1.0
  %v4520 = vadd.f32 %v4218, 1.0
  %v4521 = vadd.f32 %v4220, 1.0
  %v4522 = vadd.f32 %v4222, 1.0
  %v4523 = vadd.f32 %v4224, 1.0
  %v4524 = vadd.f32 %v4226, 1.0
  %v4525 = vadd.f32 %v4228, 1.0
  %v4526 = vadd.f32 %v4230, 1.0
  %v4527 = vadd.f32 %v4232, 1.0
  %v4528 = vadd.f32 %v4234, 1.0
  %v4529 = vadd.f32 %v4236, 1.0
  %v4530 = vadd.f32 %v4238, 1.0
  %v4531 = vadd.f32 %v4240, 1.0
  %v4532 = vadd.f32 %v4242, 1.0
  %v4533 = vadd.f32 %v4244, 1.0
  %v4534 = vadd.f32 %v4246, 1.0
  %v4535 = vadd.f32 %v4248, 1.0
  %v4536 = vadd.f32 %v4250, 1.0
  %v4537 = vadd.f32 %v4252, 1.0
  %v4538 = vadd.f32 %v4254, 1.0
  %v4539 = vadd.f32 %v4256, 1.0
  %v4540 = vadd.f32 %v4258, 1.0
  %v4541 = vadd.f32 %v4260, 1.0
  %v4542 = vadd.f32 %v4262, 1.0
  %v4543 = vadd.f32 %v4264, 1.0
  %v4544 = vadd.f32 %v4266, 1.0
  %v4545 = vadd.f32 %v4268, 1.0
  %v4546 = vadd.f32 %v4270, 1.0
  %v4547 = vadd.f32 %v4272, 1.0
  %v4548 = vadd.f32 %v4274, 1.0
  %v4549 = vadd.f32 %v4276, 1.0
  %v4550 = vadd.f32 %v4278, 1.0
  %v4551 = vadd.f32 %v4280, 1.0
  %v4552 = vadd.f32 %v4282, 1.0
  %v4553 = vadd.f32 %v4284, 1.0
  %v4554 = vadd.f32 %v4286, 1.0
  %v4555 = vadd.f32 %v4288, 1.0
  %v4556 = vadd.f32 %v4290, 1.0
  %v4557 = vadd.f32 %v4292, 1.0
  %v4558 = vadd.f32 %v4294, 1.0
  %v4559 = vadd.f32 %v4296, 1.0
  %v4560 = vadd.f32 %v4298, 1.0
  %v4561 = vadd.f32 %v4300, 1.0
  %v4562 = vadd.f32 %v4302, 1.0
  %v4563 = vadd.f32 %v4304, 1.0
  %v4564 = vadd.f32 %v4306, 1.0
  %v4565 = vadd.f32 %v4308, 1.0
  %v4566 = vadd.f32 %v4310, 1.0
  %v4567 = vadd.f32 %v4312, 1.0
  %v4568 = vadd.f32 %v4314, 1.0
  %v4569 = vadd.f32 %v4316, 1.0
  %v4570 = vadd.f32 %v4318, 1.0
  %v4571 = vadd.f32 %v4320, 1.0
  %v4572 = vadd.f32 %v4322, 1.0
  %v4573 = vadd.f32 %v4324, 1.0
  %v4574 = vadd.f32 %v4326, 1.0
  %v4575 = vadd.f32 %v4328, 1.0
  %v4576 = vadd.f32 %v4330, 1.0
  %v4577 = vadd.f32 %v4332, 1.0
  %v4578 = vadd.f32 %v4334, 1.0
  %v4579 = vadd.f32 %v4336, 1.0
  %v4580 = vadd.f32 %v4338, 1.0
  %v4581 = vadd.f32 %v4340, 1.0
  %v4582 = vadd.f32 %v4342, 1.0
  %v4583 = vadd.f32 %v4344, 1.0
  %v4584 = vadd.f32 %v4346, 1.0
  %v4585 = vadd.f32 %v4348, 1.0
  %v4586 = vadd.f32 %v4350, 1.0
  %v4587 = vadd.f32 %v4352, 1.0
  %v4588 = vadd.f32 %v4354, 1.0
  %v4589 = vadd.f32 %v4356, 1.0
  %v4590 = vadd.f32 %v4358, 1.0
  %v4591 = vadd.f32 %v4360, 1.0
  %v4592 = vadd.f32 %v4362, 1.0
  %v4593 = vadd.f32 %v4364, 1.0
  %v4594 = vadd.f32 %v4366, 1.0
  %v4595 = vadd.f32 %v4368, 1.0
  %v4596 = vadd.f32 %v4370, 1.0
  %v4597 = vadd.f32 %v4372, 1.0
  %v4598 = vadd.f32 %v4374, 1.0
  %v4599 = vadd.f32 %v4376, 1.0
  %v4600 = vadd.f32 %v4378, 1.0
  %v4601 = vadd.f32 %v4380, 1.0
  %v4602 = vadd.f32 %v4382, 1.0
  %v4603 = vadd.f32 %v4384, 1.0
  %v4604 = vadd.f32 %v4386, 1.0
  %v4605 = vadd.f32 %v4388, 1.0
  %v4606 = vadd.f32 %v4390, 1.0
  %v4607 = vadd.f32 %v4392, 1.0
  %v4608 = vadd.f32 %v4394, 1.0
  %v4609 = vadd.f32 %v4396, 1.0
  %v4610 = vadd.f32 %v4398, 1.0
  %v4611 = vadd.f32 %v4400, 1.0
  %v4612 = vadd.f32 %v4402, 1.0
  %v4613 = vadd.f32 %v4404, 1.0
  %v4614 = vadd.f32 %v4406, 1.0
  %v4615 = vadd.f32 %v4408, 1.0
  %v4616 = vadd.f32 %v4410, 1.0
  %v4617 = vadd.f32 %v4412, 1.0
  %v4618 = vadd.f32 %v4414, 1.0
  %v4619 = vadd.f32 %v4416, 1.0
  %v4620 = vadd.f32 %v4418, 1.0
  %v4621 = vadd.f32 %v4420, 1.0
  %v4622 = vadd.f32 %v4422, 1.0
  %v4623 = vadd.f32 %v4424, 1.0
  %v4624 = vadd.f32 %v4426, 1.0
  %v4625 = vadd.f32 %v4428, 1.0
  %v4626 = vadd.f32 %v4430, 1.0
  %v4627 = vrcp.pop %v4431
  %v4628 = vrcp.pop %v4432
  %v4629 = vrcp.pop %v4433
  %v4630 = vrcp.pop %v4434
  %v4631 = vrcp.pop %v4435
  %v4632 = vrcp.pop %v4436
  %v4633 = vrcp.pop %v4437
  %v4634 = vrcp.pop %v4438
  %v4635 = vrcp.pop %v4439
  %v4636 = vrcp.pop %v4440
  %v4637 = vrcp.pop %v4441
  %v4638 = vrcp.pop %v4442
  %v4639 = vrcp.pop %v4443
  %v4640 = vrcp.pop %v4444
  %v4641 = vrcp.pop %v4445
  %v4642 = vrcp.pop %v4446
  %v4643 = vrcp.pop %v4447
  %v4644 = vrcp.pop %v4448
  %v4645 = vrcp.pop %v4449
  %v4646 = vrcp.pop %v4450
  %v4647 = vrcp.pop %v4451
  %v4648 = vrcp.pop %v4452
  %v4649 = vrcp.pop %v4453
  %v4650 = vrcp.pop %v4454
  %v4651 = vrcp.pop %v4455
  %v4652 = vrcp.pop %v4456
  %v4653 = vrcp.pop %v4457
  %v4654 = vrcp.pop %v4458
  %v4655 = vrcp.pop %v4459
  %v4656 = vrcp.pop %v4460
  %v4657 = vrcp.pop %v4461
  %v4658 = vrcp.pop %v4462
  %v4659 = vrcp.pop %v4463
  %v4660 = vrcp.pop %v4464
  %v4661 = vrcp.pop %v4465
  %v4662 = vrcp.pop %v4466
  %v4663 = vrcp.pop %v4467
  %v4664 = vrcp.pop %v4468
  %v4665 = vrcp.pop %v4469
  %v4666 = vrcp.pop %v4470
  %v4667 = vrcp.pop %v4471
  %v4668 = vrcp.pop %v4472
  %v4669 = vrcp.pop %v4473
  %v4670 = vrcp.pop %v4474
  %v4671 = vrcp.pop %v4475
  %v4672 = vrcp.pop %v4476
  %v4673 = vrcp.pop %v4477
  %v4674 = vrcp.pop %v4478
  %v4675 = vrcp.pop %v4479
  %v4676 = vrcp.pop %v4480
  %v4677 = vrcp.pop %v4481
  %v4678 = vrcp.pop %v4482
  %v4679 = vrcp.pop %v4483
  %v4680 = vrcp.pop %v4484
  %v4681 = vrcp.pop %v4485
  %v4682 = vrcp.pop %v4486
  %v4683 = vrcp.pop %v4487
  %v4684 = vrcp.pop %v4488
  %v4685 = vrcp.pop %v4489
  %v4686 = vrcp.pop %v4490
  %v4687 = vrcp.pop %v4491
  %v4688 = vrcp.pop %v4492
  %v4689 = vrcp.pop %v4493
  %v4690 = vrcp.pop %v4494
  %v4691 = vrcp.pop %v4495
  %v4692 = vrcp.pop %v4496
  %v4693 = vrcp.pop %v4497
  %v4694 = vrcp.pop %v4498
  %v4695 = vrcp.pop %v4499
  %v4696 = vrcp.pop %v4500
  %v4697 = vrcp.pop %v4501
  %v4698 = vrcp.pop %v4502
  %v4699 = vrcp.pop %v4503
  %v4700 = vrcp.pop %v4504
  %v4701 = vrcp.pop %v4505
  %v4702 = vrcp.pop %v4506
  %v4703 = vrcp.pop %v4507
  %v4704 = vrcp.pop %v4508
  %v4705 = vrcp.pop %v4509
  %v4706 = vrcp.pop %v4510
  %v4707 = vrcp.pop %v4511
  %v4708 = vrcp.pop %v4512
  %v4709 = vrcp.pop %v4513
  %v4710 = vrcp.pop %v4514
  %v4711 = vrcp.pop %v4515
  %v4712 = vrcp.pop %v4516
  %v4713 = vrcp.pop %v4517
  %v4714 = vrcp.pop %v4518
  %v4715 = vrcp.pop %v4519
  %v4716 = vrcp.pop %v4520
  %v4717 = vrcp.pop %v4521
  %v4718 = vrcp.pop %v4522
  %v4719 = vrcp.pop %v4523
  %v4720 = vrcp.pop %v4524
  %v4721 = vrcp.pop %v4525
  %v4722 = vrcp.pop %v4526
  %v4723 = vrcp.pop %v4527
  %v4724 = vrcp.pop %v4528
  %v4725 = vrcp.pop %v4529
  %v4726 = vrcp.pop %v4530
  %v4727 = vrcp.pop %v4531
  %v4728 = vrcp.pop %v4532
  %v4729 = vrcp.pop %v4533
  %v4730 = vrcp.pop %v4534
  %v4731 = vrcp.pop %v4535
  %v4732 = vrcp.pop %v4536
  %v4733 = vrcp.pop %v4537
  %v4734 = vrcp.pop %v4538
  %v4735 = vrcp.pop %v4539
  %v4736 = vrcp.pop %v4540
  %v4737 = vrcp.pop %v4541
  %v4738 = vrcp.pop %v4542
  %v4739 = vrcp.pop %v4543
  %v4740 = vrcp.pop %v4544
  %v4741 = vrcp.pop %v4545
  %v4742 = vrcp.pop %v4546
  %v4743 = vrcp.pop %v4547
  %v4744 = vrcp.pop %v4548
  %v4745 = vrcp.pop %v4549
  %v4746 = vrcp.pop %v4550
  %v4747 = vrcp.pop %v4551
  %v4748 = vrcp.pop %v4552
  %v4749 = vrcp.pop %v4553
  %v4750 = vrcp.pop %v4554
  %v4751 = vrcp.pop %v4555
  %v4752 = vrcp.pop %v4556
  %v4753 = vrcp.pop %v4557
  %v4754 = vrcp.pop %v4558
  %v4755 = vrcp.pop %v4559
  %v4756 = vrcp.pop %v4560
  %v4757 = vrcp.pop %v4561
  %v4758 = vrcp.pop %v4562
  %v4759 = vrcp.pop %v4563
  %v4760 = vrcp.pop %v4564
  %v4761 = vrcp.pop %v4565
  %v4762 = vrcp.pop %v4566
  %v4763 = vrcp.pop %v4567
  %v4764 = vrcp.pop %v4568
  %v4765 = vrcp.pop %v4569
  %v4766 = vrcp.pop %v4570
  %v4767 = vrcp.pop %v4571
  %v4768 = vrcp.pop %v4572
  %v4769 = vrcp.pop %v4573
  %v4770 = vrcp.pop %v4574
  %v4771 = vrcp.pop %v4575
  %v4772 = vrcp.pop %v4576
  %v4773 = vrcp.pop %v4577
  %v4774 = vrcp.pop %v4578
  %v4775 = vrcp.pop %v4579
  %v4776 = vrcp.pop %v4580
  %v4777 = vrcp.pop %v4581
  %v4778 = vrcp.pop %v4582
  %v4779 = vrcp.pop %v4583
  %v4780 = vrcp.pop %v4584
  %v4781 = vrcp.pop %v4585
  %v4782 = vrcp.pop %v4586
  %v4783 = vrcp.pop %v4587
  %v4784 = vrcp.pop %v4588
  %v4785 = vrcp.pop %v4589
  %v4786 = vrcp.pop %v4590
  %v4787 = vrcp.pop %v4591
  %v4788 = vrcp.pop %v4592
  %v4789 = vrcp.pop %v4593
  %v4790 = vrcp.pop %v4594
  %v4791 = vrcp.pop %v4595
  %v4792 = vrcp.pop %v4596
  %v4793 = vrcp.pop %v4597
  %v4794 = vrcp.pop %v4598
  %v4795 = vrcp.pop %v4599
  %v4796 = vrcp.pop %v4600
  %v4797 = vrcp.pop %v4601
  %v4798 = vrcp.pop %v4602
  %v4799 = vrcp.pop %v4603
  %v4800 = vrcp.pop %v4604
  %v4801 = vrcp.pop %v4605
  %v4802 = vrcp.pop %v4606
  %v4803 = vrcp.pop %v4607
  %v4804 = vrcp.pop %v4608
  %v4805 = vrcp.pop %v4609
  %v4806 = vrcp.pop %v4610
  %v4807 = vrcp.pop %v4611
  %v4808 = vrcp.pop %v4612
  %v4809 = vrcp.pop %v4613
  %v4810 = vrcp.pop %v4614
  %v4811 = vrcp.pop %v4615
  %v4812 = vrcp.pop %v4616
  %v4813 = vrcp.pop %v4617
  %v4814 = vrcp.pop %v4618
  %v4815 = vrcp.pop %v4619
  %v4816 = vrcp.pop %v4620
  %v4817 = vrcp.pop %v4621
  %v4818 = vrcp.pop %v4622
  %v4819 = vrcp.pop %v4623
  %v4820 = vrcp.pop %v4624
  %v4821 = vrcp.pop %v4625
  %v4822 = vrcp.pop %v4626
  %vm4823 = vcmask 130048
  %4824 = vst.msk [vmem:[%s3] sm:$0xff] %vm4823, %v4627
  %4825 = vst.msk [vmem:[%s3 + $0x8] sm:$0xff] %vm4823, %v4628
  %4826 = vst.msk [vmem:[%s3 + $0x10] sm:$0xff] %vm4823, %v4629
  %4827 = vst.msk [vmem:[%s3 + $0x18] sm:$0xff] %vm4823, %v4630
  %4828 = vst.msk [vmem:[%s3 + $0x20] sm:$0xff] %vm4823, %v4631
  %4829 = vst.msk [vmem:[%s3 + $0x28] sm:$0xff] %vm4823, %v4632
  %4830 = vst.msk [vmem:[%s3 + $0x30] sm:$0xff] %vm4823, %v4633
  %4831 = vst.msk [vmem:[%s3 + $0x38] sm:$0xff] %vm4823, %v4634
  %4832 = vst.msk [vmem:[%s3 + $0x40] sm:$0xff] %vm4823, %v4635
  %4833 = vst.msk [vmem:[%s3 + $0x48] sm:$0xff] %vm4823, %v4636
  %4834 = vst.msk [vmem:[%s3 + $0x50] sm:$0xff] %vm4823, %v4637
  %4835 = vst.msk [vmem:[%s3 + $0x58] sm:$0xff] %vm4823, %v4638
  %4836 = vst.msk [vmem:[%s3 + $0x60] sm:$0xff] %vm4823, %v4639
  %4837 = vst.msk [vmem:[%s3 + $0x68] sm:$0xff] %vm4823, %v4640
  %4838 = vst.msk [vmem:[%s3 + $0x70] sm:$0xff] %vm4823, %v4641
  %4839 = vst.msk [vmem:[%s3 + $0x78] sm:$0xff] %vm4823, %v4642
  %4840 = vst.msk [vmem:[%s3 + $0x80] sm:$0xff] %vm4823, %v4643
  %4841 = vst.msk [vmem:[%s3 + $0x88] sm:$0xff] %vm4823, %v4644
  %4842 = vst.msk [vmem:[%s3 + $0x90] sm:$0xff] %vm4823, %v4645
  %4843 = vst.msk [vmem:[%s3 + $0x98] sm:$0xff] %vm4823, %v4646
  %4844 = vst.msk [vmem:[%s3 + $0xa0] sm:$0xff] %vm4823, %v4647
  %4845 = vst.msk [vmem:[%s3 + $0xa8] sm:$0xff] %vm4823, %v4648
  %4846 = vst.msk [vmem:[%s3 + $0xb0] sm:$0xff] %vm4823, %v4649
  %4847 = vst.msk [vmem:[%s3 + $0xb8] sm:$0xff] %vm4823, %v4650
  %4848 = vst.msk [vmem:[%s3 + $0xc0] sm:$0xff] %vm4823, %v4651
  %4849 = vst.msk [vmem:[%s3 + $0xc8] sm:$0xff] %vm4823, %v4652
  %4850 = vst.msk [vmem:[%s3 + $0xd0] sm:$0xff] %vm4823, %v4653
  %4851 = vst.msk [vmem:[%s3 + $0xd8] sm:$0xff] %vm4823, %v4654
  %4852 = vst.msk [vmem:[%s3 + $0xe0] sm:$0xff] %vm4823, %v4655
  %4853 = vst.msk [vmem:[%s3 + $0xe8] sm:$0xff] %vm4823, %v4656
  %4854 = vst.msk [vmem:[%s3 + $0xf0] sm:$0xff] %vm4823, %v4657
  %4855 = vst.msk [vmem:[%s3 + $0xf8] sm:$0xff] %vm4823, %v4658
  %4856 = vst.msk [vmem:[%s3 + $0x100] sm:$0xff] %vm4823, %v4659
  %4857 = vst.msk [vmem:[%s3 + $0x108] sm:$0xff] %vm4823, %v4660
  %4858 = vst.msk [vmem:[%s3 + $0x110] sm:$0xff] %vm4823, %v4661
  %4859 = vst.msk [vmem:[%s3 + $0x118] sm:$0xff] %vm4823, %v4662
  %4860 = vst.msk [vmem:[%s3 + $0x120] sm:$0xff] %vm4823, %v4663
  %4861 = vst.msk [vmem:[%s3 + $0x128] sm:$0xff] %vm4823, %v4664
  %4862 = vst.msk [vmem:[%s3 + $0x130] sm:$0xff] %vm4823, %v4665
  %4863 = vst.msk [vmem:[%s3 + $0x138] sm:$0xff] %vm4823, %v4666
  %4864 = vst.msk [vmem:[%s3 + $0x140] sm:$0xff] %vm4823, %v4667
  %4865 = vst.msk [vmem:[%s3 + $0x148] sm:$0xff] %vm4823, %v4668
  %4866 = vst.msk [vmem:[%s3 + $0x150] sm:$0xff] %vm4823, %v4669
  %4867 = vst.msk [vmem:[%s3 + $0x158] sm:$0xff] %vm4823, %v4670
  %4868 = vst.msk [vmem:[%s3 + $0x160] sm:$0xff] %vm4823, %v4671
  %4869 = vst.msk [vmem:[%s3 + $0x168] sm:$0xff] %vm4823, %v4672
  %4870 = vst.msk [vmem:[%s3 + $0x170] sm:$0xff] %vm4823, %v4673
  %4871 = vst.msk [vmem:[%s3 + $0x178] sm:$0xff] %vm4823, %v4674
  %4872 = vst.msk [vmem:[%s3 + $0x180] sm:$0xff] %vm4823, %v4675
  %4873 = vst.msk [vmem:[%s3 + $0x188] sm:$0xff] %vm4823, %v4676
  %4874 = vst.msk [vmem:[%s3 + $0x190] sm:$0xff] %vm4823, %v4677
  %4875 = vst.msk [vmem:[%s3 + $0x198] sm:$0xff] %vm4823, %v4678
  %4876 = vst.msk [vmem:[%s3 + $0x1a0] sm:$0xff] %vm4823, %v4679
  %4877 = vst.msk [vmem:[%s3 + $0x1a8] sm:$0xff] %vm4823, %v4680
  %4878 = vst.msk [vmem:[%s3 + $0x1b0] sm:$0xff] %vm4823, %v4681
  %4879 = vst.msk [vmem:[%s3 + $0x1b8] sm:$0xff] %vm4823, %v4682
  %4880 = vst.msk [vmem:[%s3 + $0x1c0] sm:$0xff] %vm4823, %v4683
  %4881 = vst.msk [vmem:[%s3 + $0x1c8] sm:$0xff] %vm4823, %v4684
  %4882 = vst.msk [vmem:[%s3 + $0x1d0] sm:$0xff] %vm4823, %v4685
  %4883 = vst.msk [vmem:[%s3 + $0x1d8] sm:$0xff] %vm4823, %v4686
  %4884 = vst.msk [vmem:[%s3 + $0x1e0] sm:$0xff] %vm4823, %v4687
  %4885 = vst.msk [vmem:[%s3 + $0x1e8] sm:$0xff] %vm4823, %v4688
  %4886 = vst.msk [vmem:[%s3 + $0x1f0] sm:$0xff] %vm4823, %v4689
  %4887 = vst.msk [vmem:[%s3 + $0x1f8] sm:$0xff] %vm4823, %v4690
  %4888 = vst.msk [vmem:[%s3 + $0x200] sm:$0xff] %vm4823, %v4691
  %4889 = vst.msk [vmem:[%s3 + $0x208] sm:$0xff] %vm4823, %v4692
  %4890 = vst.msk [vmem:[%s3 + $0x210] sm:$0xff] %vm4823, %v4693
  %4891 = vst.msk [vmem:[%s3 + $0x218] sm:$0xff] %vm4823, %v4694
  %4892 = vst.msk [vmem:[%s3 + $0x220] sm:$0xff] %vm4823, %v4695
  %4893 = vst.msk [vmem:[%s3 + $0x228] sm:$0xff] %vm4823, %v4696
  %4894 = vst.msk [vmem:[%s3 + $0x230] sm:$0xff] %vm4823, %v4697
  %4895 = vst.msk [vmem:[%s3 + $0x238] sm:$0xff] %vm4823, %v4698
  %4896 = vst.msk [vmem:[%s3 + $0x240] sm:$0xff] %vm4823, %v4699
  %4897 = vst.msk [vmem:[%s3 + $0x248] sm:$0xff] %vm4823, %v4700
  %4898 = vst.msk [vmem:[%s3 + $0x250] sm:$0xff] %vm4823, %v4701
  %4899 = vst.msk [vmem:[%s3 + $0x258] sm:$0xff] %vm4823, %v4702
  %4900 = vst.msk [vmem:[%s3 + $0x260] sm:$0xff] %vm4823, %v4703
  %4901 = vst.msk [vmem:[%s3 + $0x268] sm:$0xff] %vm4823, %v4704
  %4902 = vst.msk [vmem:[%s3 + $0x270] sm:$0xff] %vm4823, %v4705
  %4903 = vst.msk [vmem:[%s3 + $0x278] sm:$0xff] %vm4823, %v4706
  %4904 = vst.msk [vmem:[%s3 + $0x280] sm:$0xff] %vm4823, %v4707
  %4905 = vst.msk [vmem:[%s3 + $0x288] sm:$0xff] %vm4823, %v4708
  %4906 = vst.msk [vmem:[%s3 + $0x290] sm:$0xff] %vm4823, %v4709
  %4907 = vst.msk [vmem:[%s3 + $0x298] sm:$0xff] %vm4823, %v4710
  %4908 = vst.msk [vmem:[%s3 + $0x2a0] sm:$0xff] %vm4823, %v4711
  %4909 = vst.msk [vmem:[%s3 + $0x2a8] sm:$0xff] %vm4823, %v4712
  %4910 = vst.msk [vmem:[%s3 + $0x2b0] sm:$0xff] %vm4823, %v4713
  %4911 = vst.msk [vmem:[%s3 + $0x2b8] sm:$0xff] %vm4823, %v4714
  %4912 = vst.msk [vmem:[%s3 + $0x2c0] sm:$0xff] %vm4823, %v4715
  %4913 = vst.msk [vmem:[%s3 + $0x2c8] sm:$0xff] %vm4823, %v4716
  %4914 = vst.msk [vmem:[%s3 + $0x2d0] sm:$0xff] %vm4823, %v4717
  %4915 = vst.msk [vmem:[%s3 + $0x2d8] sm:$0xff] %vm4823, %v4718
  %4916 = vst.msk [vmem:[%s3 + $0x2e0] sm:$0xff] %vm4823, %v4719
  %4917 = vst.msk [vmem:[%s3 + $0x2e8] sm:$0xff] %vm4823, %v4720
  %4918 = vst.msk [vmem:[%s3 + $0x2f0] sm:$0xff] %vm4823, %v4721
  %4919 = vst.msk [vmem:[%s3 + $0x2f8] sm:$0xff] %vm4823, %v4722
  %4920 = vst.msk [vmem:[%s3 + $0x300] sm:$0xff] %vm4823, %v4723
  %4921 = vst.msk [vmem:[%s3 + $0x308] sm:$0xff] %vm4823, %v4724
  %4922 = vst.msk [vmem:[%s3 + $0x310] sm:$0xff] %vm4823, %v4725
  %4923 = vst.msk [vmem:[%s3 + $0x318] sm:$0xff] %vm4823, %v4726
  %4924 = vst.msk [vmem:[%s3 + $0x320] sm:$0xff] %vm4823, %v4727
  %4925 = vst.msk [vmem:[%s3 + $0x328] sm:$0xff] %vm4823, %v4728
  %4926 = vst.msk [vmem:[%s3 + $0x330] sm:$0xff] %vm4823, %v4729
  %4927 = vst.msk [vmem:[%s3 + $0x338] sm:$0xff] %vm4823, %v4730
  %4928 = vst.msk [vmem:[%s3 + $0x340] sm:$0xff] %vm4823, %v4731
  %4929 = vst.msk [vmem:[%s3 + $0x348] sm:$0xff] %vm4823, %v4732
  %4930 = vst.msk [vmem:[%s3 + $0x350] sm:$0xff] %vm4823, %v4733
  %4931 = vst.msk [vmem:[%s3 + $0x358] sm:$0xff] %vm4823, %v4734
  %4932 = vst.msk [vmem:[%s3 + $0x360] sm:$0xff] %vm4823, %v4735
  %4933 = vst.msk [vmem:[%s3 + $0x368] sm:$0xff] %vm4823, %v4736
  %4934 = vst.msk [vmem:[%s3 + $0x370] sm:$0xff] %vm4823, %v4737
  %4935 = vst.msk [vmem:[%s3 + $0x378] sm:$0xff] %vm4823, %v4738
  %4936 = vst.msk [vmem:[%s3 + $0x380] sm:$0xff] %vm4823, %v4739
  %4937 = vst.msk [vmem:[%s3 + $0x388] sm:$0xff] %vm4823, %v4740
  %4938 = vst.msk [vmem:[%s3 + $0x390] sm:$0xff] %vm4823, %v4741
  %4939 = vst.msk [vmem:[%s3 + $0x398] sm:$0xff] %vm4823, %v4742
  %4940 = vst.msk [vmem:[%s3 + $0x3a0] sm:$0xff] %vm4823, %v4743
  %4941 = vst.msk [vmem:[%s3 + $0x3a8] sm:$0xff] %vm4823, %v4744
  %4942 = vst.msk [vmem:[%s3 + $0x3b0] sm:$0xff] %vm4823, %v4745
  %4943 = vst.msk [vmem:[%s3 + $0x3b8] sm:$0xff] %vm4823, %v4746
  %4944 = vst.msk [vmem:[%s3 + $0x3c0] sm:$0xff] %vm4823, %v4747
  %4945 = vst.msk [vmem:[%s3 + $0x3c8] sm:$0xff] %vm4823, %v4748
  %4946 = vst.msk [vmem:[%s3 + $0x3d0] sm:$0xff] %vm4823, %v4749
  %4947 = vst.msk [vmem:[%s3 + $0x3d8] sm:$0xff] %vm4823, %v4750
  %4948 = vst.msk [vmem:[%s3 + $0x3e0] sm:$0xff] %vm4823, %v4751
  %4949 = vst.msk [vmem:[%s3 + $0x3e8] sm:$0xff] %vm4823, %v4752
  %4950 = vst.msk [vmem:[%s3 + $0x3f0] sm:$0xff] %vm4823, %v4753
  %4951 = vst.msk [vmem:[%s3 + $0x3f8] sm:$0xff] %vm4823, %v4754
  %4952 = vst.msk [vmem:[%s3 + $0x400] sm:$0xff] %vm4823, %v4755
  %4953 = vst.msk [vmem:[%s3 + $0x408] sm:$0xff] %vm4823, %v4756
  %4954 = vst.msk [vmem:[%s3 + $0x410] sm:$0xff] %vm4823, %v4757
  %4955 = vst.msk [vmem:[%s3 + $0x418] sm:$0xff] %vm4823, %v4758
  %4956 = vst.msk [vmem:[%s3 + $0x420] sm:$0xff] %vm4823, %v4759
  %4957 = vst.msk [vmem:[%s3 + $0x428] sm:$0xff] %vm4823, %v4760
  %4958 = vst.msk [vmem:[%s3 + $0x430] sm:$0xff] %vm4823, %v4761
  %4959 = vst.msk [vmem:[%s3 + $0x438] sm:$0xff] %vm4823, %v4762
  %4960 = vst.msk [vmem:[%s3 + $0x440] sm:$0xff] %vm4823, %v4763
  %4961 = vst.msk [vmem:[%s3 + $0x448] sm:$0xff] %vm4823, %v4764
  %4962 = vst.msk [vmem:[%s3 + $0x450] sm:$0xff] %vm4823, %v4765
  %4963 = vst.msk [vmem:[%s3 + $0x458] sm:$0xff] %vm4823, %v4766
  %4964 = vst.msk [vmem:[%s3 + $0x460] sm:$0xff] %vm4823, %v4767
  %4965 = vst.msk [vmem:[%s3 + $0x468] sm:$0xff] %vm4823, %v4768
  %4966 = vst.msk [vmem:[%s3 + $0x470] sm:$0xff] %vm4823, %v4769
  %4967 = vst.msk [vmem:[%s3 + $0x478] sm:$0xff] %vm4823, %v4770
  %4968 = vst.msk [vmem:[%s3 + $0x480] sm:$0xff] %vm4823, %v4771
  %4969 = vst.msk [vmem:[%s3 + $0x488] sm:$0xff] %vm4823, %v4772
  %4970 = vst.msk [vmem:[%s3 + $0x490] sm:$0xff] %vm4823, %v4773
  %4971 = vst.msk [vmem:[%s3 + $0x498] sm:$0xff] %vm4823, %v4774
  %4972 = vst.msk [vmem:[%s3 + $0x4a0] sm:$0xff] %vm4823, %v4775
  %4973 = vst.msk [vmem:[%s3 + $0x4a8] sm:$0xff] %vm4823, %v4776
  %4974 = vst.msk [vmem:[%s3 + $0x4b0] sm:$0xff] %vm4823, %v4777
  %4975 = vst.msk [vmem:[%s3 + $0x4b8] sm:$0xff] %vm4823, %v4778
  %4976 = vst.msk [vmem:[%s3 + $0x4c0] sm:$0xff] %vm4823, %v4779
  %4977 = vst.msk [vmem:[%s3 + $0x4c8] sm:$0xff] %vm4823, %v4780
  %4978 = vst.msk [vmem:[%s3 + $0x4d0] sm:$0xff] %vm4823, %v4781
  %4979 = vst.msk [vmem:[%s3 + $0x4d8] sm:$0xff] %vm4823, %v4782
  %4980 = vst.msk [vmem:[%s3 + $0x4e0] sm:$0xff] %vm4823, %v4783
  %4981 = vst.msk [vmem:[%s3 + $0x4e8] sm:$0xff] %vm4823, %v4784
  %4982 = vst.msk [vmem:[%s3 + $0x4f0] sm:$0xff] %vm4823, %v4785
  %4983 = vst.msk [vmem:[%s3 + $0x4f8] sm:$0xff] %vm4823, %v4786
  %4984 = vst.msk [vmem:[%s3 + $0x500] sm:$0xff] %vm4823, %v4787
  %4985 = vst.msk [vmem:[%s3 + $0x508] sm:$0xff] %vm4823, %v4788
  %4986 = vst.msk [vmem:[%s3 + $0x510] sm:$0xff] %vm4823, %v4789
  %4987 = vst.msk [vmem:[%s3 + $0x518] sm:$0xff] %vm4823, %v4790
  %4988 = vst.msk [vmem:[%s3 + $0x520] sm:$0xff] %vm4823, %v4791
  %4989 = vst.msk [vmem:[%s3 + $0x528] sm:$0xff] %vm4823, %v4792
  %4990 = vst.msk [vmem:[%s3 + $0x530] sm:$0xff] %vm4823, %v4793
  %4991 = vst.msk [vmem:[%s3 + $0x538] sm:$0xff] %vm4823, %v4794
  %4992 = vst.msk [vmem:[%s3 + $0x540] sm:$0xff] %vm4823, %v4795
  %4993 = vst.msk [vmem:[%s3 + $0x548] sm:$0xff] %vm4823, %v4796
  %4994 = vst.msk [vmem:[%s3 + $0x550] sm:$0xff] %vm4823, %v4797
  %4995 = vst.msk [vmem:[%s3 + $0x558] sm:$0xff] %vm4823, %v4798
  %4996 = vst.msk [vmem:[%s3 + $0x560] sm:$0xff] %vm4823, %v4799
  %4997 = vst.msk [vmem:[%s3 + $0x568] sm:$0xff] %vm4823, %v4800
  %4998 = vst.msk [vmem:[%s3 + $0x570] sm:$0xff] %vm4823, %v4801
  %4999 = vst.msk [vmem:[%s3 + $0x578] sm:$0xff] %vm4823, %v4802
  %5000 = vst.msk [vmem:[%s3 + $0x580] sm:$0xff] %vm4823, %v4803
  %5001 = vst.msk [vmem:[%s3 + $0x588] sm:$0xff] %vm4823, %v4804
  %5002 = vst.msk [vmem:[%s3 + $0x590] sm:$0xff] %vm4823, %v4805
  %5003 = vst.msk [vmem:[%s3 + $0x598] sm:$0xff] %vm4823, %v4806
  %5004 = vst.msk [vmem:[%s3 + $0x5a0] sm:$0xff] %vm4823, %v4807
  %5005 = vst.msk [vmem:[%s3 + $0x5a8] sm:$0xff] %vm4823, %v4808
  %5006 = vst.msk [vmem:[%s3 + $0x5b0] sm:$0xff] %vm4823, %v4809
  %5007 = vst.msk [vmem:[%s3 + $0x5b8] sm:$0xff] %vm4823, %v4810
  %5008 = vst.msk [vmem:[%s3 + $0x5c0] sm:$0xff] %vm4823, %v4811
  %5009 = vst.msk [vmem:[%s3 + $0x5c8] sm:$0xff] %vm4823, %v4812
  %5010 = vst.msk [vmem:[%s3 + $0x5d0] sm:$0xff] %vm4823, %v4813
  %5011 = vst.msk [vmem:[%s3 + $0x5d8] sm:$0xff] %vm4823, %v4814
  %5012 = vst.msk [vmem:[%s3 + $0x5e0] sm:$0xff] %vm4823, %v4815
  %5013 = vst.msk [vmem:[%s3 + $0x5e8] sm:$0xff] %vm4823, %v4816
  %5014 = vst.msk [vmem:[%s3 + $0x5f0] sm:$0xff] %vm4823, %v4817
  %5015 = vst.msk [vmem:[%s3 + $0x5f8] sm:$0xff] %vm4823, %v4818
  %5016 = vst.msk [vmem:[%s3 + $0x600] sm:$0xff] %vm4823, %v4819
  %5017 = vst.msk [vmem:[%s3 + $0x608] sm:$0xff] %vm4823, %v4820
  %5018 = vst.msk [vmem:[%s3 + $0x610] sm:$0xff] %vm4823, %v4821
  %5019 = vst.msk [vmem:[%s3 + $0x618] sm:$0xff] %vm4823, %v4822
  // Predicated region
  $region14: #{lenet_forward.2} parent=0 // pred_check
    _
  $region15: #{lenet_forward.2} parent=0 // pred_check_branch
    %5021 = sbr.rel (0) target = $region17
  $region16: #{lenet_forward.2} parent=0 // pred_region
    _
  $region17: #{lenet_forward.2} parent=0 // pred_fallthru
    _
  // Predicated region
  $region18: #{lenet_forward.2} parent=0 // pred_check
    _
  $region19: #{lenet_forward.2} parent=0 // pred_check_branch
    %5023 = sbr.rel (0) target = $region21
  $region20: #{lenet_forward.2} parent=0 // pred_region
    _
  $region21: #{lenet_forward.2} parent=0 // pred_fallthru
    _

// kernel: lenet_forward.3
$region0: #{lenet_forward.3}
  #allocation0 [shape = 'u32[]', space=smem, size = 0x4, offset = 0x4, fixed_abs, tag = 'smem constant byte address 0x4 - core index']
  #allocation1 [shape = 'u32[144,128]{1,0:T(1,128)}', space=vmem, size = 0x12000, scoped, tag = 'internal scratch']
  %s0 = inlined_call_operand.vmem [shape: bf16[8,3136], index: 0, kind: input, shape index: {}]
  %s1 = inlined_call_operand.vmem [shape: bf16[3136,128], index: 1, kind: input, shape index: {}]
  %s2 = inlined_call_operand.vmem [shape: f32[1,128], index: 2, kind: input, shape index: {}]
  %s3 = inlined_call_operand.vmem [shape: f32[8,128], index: 3, kind: output, shape index: {}]
  %s4 = sld [smem:[#allocation0]]
  $region22: #{lenet_forward.3} parent=0
    _
  %s6 = ssub.s32 1, %s4
  %s7 = scalar_select 0, %s6, %s4
  // Predicated region
  $region2: #{lenet_forward.3} parent=0 // pred_check
    _
  $region3: #{lenet_forward.3} parent=0 // pred_check_branch
    %9 = sbr.rel (0) target = $region5
  $region4: #{lenet_forward.3} parent=0 // pred_region
    _
  $region5: #{lenet_forward.3} parent=0 // pred_fallthru
    _
  // Predicated region
  $region6: #{lenet_forward.3} parent=0 // pred_check
    _
  $region7: #{lenet_forward.3} parent=0 // pred_check_branch
    %11 = sbr.rel (0) target = $region9
  $region8: #{lenet_forward.3} parent=0 // pred_region
    _
  $region9: #{lenet_forward.3} parent=0 // pred_fallthru
    _
  // Predicated region
  $region10: #{lenet_forward.3} parent=0 // pred_check
    _
  $region11: #{lenet_forward.3} parent=0 // pred_check_branch
    %13 = sbr.rel (0) target = $region13
  $region12: #{lenet_forward.3} parent=0 // pred_region
    _
  $region13: #{lenet_forward.3} parent=0 // pred_fallthru
    _
  %v15 = vld [vmem:[%s0] sm:$0xff]
  %v16 = vld [vmem:[%s0 + $0x8] sm:$0xff]
  %v17 = vld [vmem:[%s0 + $0x10] sm:$0xff]
  %v18 = vld [vmem:[%s0 + $0x18] sm:$0xff]
  %v19 = vld [vmem:[%s0 + $0x20] sm:$0xff]
  %v20 = vld [vmem:[%s0 + $0x28] sm:$0xff]
  %v21 = vld [vmem:[%s0 + $0x30] sm:$0xff]
  %v22 = vld [vmem:[%s0 + $0x38] sm:$0xff]
  %v23 = vld [vmem:[%s0 + $0x40] sm:$0xff]
  %v24 = vld [vmem:[%s0 + $0x48] sm:$0xff]
  %v25 = vld [vmem:[%s0 + $0x50] sm:$0xff]
  %v26 = vld [vmem:[%s0 + $0x58] sm:$0xff]
  %v27 = vld [vmem:[%s0 + $0x60] sm:$0xf]
  %v28 = vld [vmem:[%s1] sm:$0xf]
  %v29 = vld [vmem:[%s1 + $0x4] sm:$0xf]
  %v30 = vld [vmem:[%s1 + $0x8] sm:$0xf]
  %v31 = vld [vmem:[%s1 + $0xc] sm:$0xf]
  %v32 = vld [vmem:[%s1 + $0x10] sm:$0xf]
  %v33 = vld [vmem:[%s1 + $0x14] sm:$0xf]
  %v34 = vld [vmem:[%s1 + $0x18] sm:$0xf]
  %v35 = vld [vmem:[%s1 + $0x1c] sm:$0xf]
  %v36 = vld [vmem:[%s1 + $0x20] sm:$0xf]
  %v37 = vld [vmem:[%s1 + $0x24] sm:$0xf]
  %v38 = vld [vmem:[%s1 + $0x28] sm:$0xf]
  %v39 = vld [vmem:[%s1 + $0x2c] sm:$0xf]
  %v40 = vld [vmem:[%s1 + $0x30] sm:$0xf]
  %v41 = vld [vmem:[%s1 + $0x34] sm:$0xf]
  %v42 = vld [vmem:[%s1 + $0x38] sm:$0xf]
  %v43 = vld [vmem:[%s1 + $0x3c] sm:$0xf]
  %v44 = vld [vmem:[%s1 + $0x40] sm:$0xf]
  %v45 = vld [vmem:[%s1 + $0x44] sm:$0xf]
  %v46 = vld [vmem:[%s1 + $0x48] sm:$0xf]
  %v47 = vld [vmem:[%s1 + $0x4c] sm:$0xf]
  %v48 = vld [vmem:[%s1 + $0x50] sm:$0xf]
  %v49 = vld [vmem:[%s1 + $0x54] sm:$0xf]
  %v50 = vld [vmem:[%s1 + $0x58] sm:$0xf]
  %v51 = vld [vmem:[%s1 + $0x5c] sm:$0xf]
  %v52 = vld [vmem:[%s1 + $0x60] sm:$0xf]
  %v53 = vld [vmem:[%s1 + $0x64] sm:$0xf]
  %v54 = vld [vmem:[%s1 + $0x68] sm:$0xf]
  %v55 = vld [vmem:[%s1 + $0x6c] sm:$0xf]
  %v56 = vld [vmem:[%s1 + $0x70] sm:$0xf]
  %v57 = vld [vmem:[%s1 + $0x74] sm:$0xf]
  %v58 = vld [vmem:[%s1 + $0x78] sm:$0xf]
  %v59 = vld [vmem:[%s1 + $0x7c] sm:$0xf]
  %v60 = vld [vmem:[%s1 + $0x80] sm:$0xf]
  %v61 = vld [vmem:[%s1 + $0x84] sm:$0xf]
  %v62 = vld [vmem:[%s1 + $0x88] sm:$0xf]
  %v63 = vld [vmem:[%s1 + $0x8c] sm:$0xf]
  %v64 = vld [vmem:[%s1 + $0x90] sm:$0xf]
  %v65 = vld [vmem:[%s1 + $0x94] sm:$0xf]
  %v66 = vld [vmem:[%s1 + $0x98] sm:$0xf]
  %v67 = vld [vmem:[%s1 + $0x9c] sm:$0xf]
  %v68 = vld [vmem:[%s1 + $0xa0] sm:$0xf]
  %v69 = vld [vmem:[%s1 + $0xa4] sm:$0xf]
  %v70 = vld [vmem:[%s1 + $0xa8] sm:$0xf]
  %v71 = vld [vmem:[%s1 + $0xac] sm:$0xf]
  %v72 = vld [vmem:[%s1 + $0xb0] sm:$0xf]
  %v73 = vld [vmem:[%s1 + $0xb4] sm:$0xf]
  %v74 = vld [vmem:[%s1 + $0xb8] sm:$0xf]
  %v75 = vld [vmem:[%s1 + $0xbc] sm:$0xf]
  %v76 = vld [vmem:[%s1 + $0xc0] sm:$0xf]
  %v77 = vld [vmem:[%s1 + $0xc4] sm:$0xf]
  %v78 = vld [vmem:[%s1 + $0xc8] sm:$0xf]
  %v79 = vld [vmem:[%s1 + $0xcc] sm:$0xf]
  %v80 = vld [vmem:[%s1 + $0xd0] sm:$0xf]
  %v81 = vld [vmem:[%s1 + $0xd4] sm:$0xf]
  %v82 = vld [vmem:[%s1 + $0xd8] sm:$0xf]
  %v83 = vld [vmem:[%s1 + $0xdc] sm:$0xf]
  %v84 = vld [vmem:[%s1 + $0xe0] sm:$0xf]
  %v85 = vld [vmem:[%s1 + $0xe4] sm:$0xf]
  %v86 = vld [vmem:[%s1 + $0xe8] sm:$0xf]
  %v87 = vld [vmem:[%s1 + $0xec] sm:$0xf]
  %v88 = vld [vmem:[%s1 + $0xf0] sm:$0xf]
  %v89 = vld [vmem:[%s1 + $0xf4] sm:$0xf]
  %v90 = vld [vmem:[%s1 + $0xf8] sm:$0xf]
  %v91 = vld [vmem:[%s1 + $0xfc] sm:$0xf]
  %v92 = vld [vmem:[%s1 + $0x100] sm:$0xf]
  %v93 = vld [vmem:[%s1 + $0x104] sm:$0xf]
  %v94 = vld [vmem:[%s1 + $0x108] sm:$0xf]
  %v95 = vld [vmem:[%s1 + $0x10c] sm:$0xf]
  %v96 = vld [vmem:[%s1 + $0x110] sm:$0xf]
  %v97 = vld [vmem:[%s1 + $0x114] sm:$0xf]
  %v98 = vld [vmem:[%s1 + $0x118] sm:$0xf]
  %v99 = vld [vmem:[%s1 + $0x11c] sm:$0xf]
  %v100 = vld [vmem:[%s1 + $0x120] sm:$0xf]
  %v101 = vld [vmem:[%s1 + $0x124] sm:$0xf]
  %v102 = vld [vmem:[%s1 + $0x128] sm:$0xf]
  %v103 = vld [vmem:[%s1 + $0x12c] sm:$0xf]
  %v104 = vld [vmem:[%s1 + $0x130] sm:$0xf]
  %v105 = vld [vmem:[%s1 + $0x134] sm:$0xf]
  %v106 = vld [vmem:[%s1 + $0x138] sm:$0xf]
  %v107 = vld [vmem:[%s1 + $0x13c] sm:$0xf]
  %v108 = vld [vmem:[%s1 + $0x140] sm:$0xf]
  %v109 = vld [vmem:[%s1 + $0x144] sm:$0xf]
  %v110 = vld [vmem:[%s1 + $0x148] sm:$0xf]
  %v111 = vld [vmem:[%s1 + $0x14c] sm:$0xf]
  %v112 = vld [vmem:[%s1 + $0x150] sm:$0xf]
  %v113 = vld [vmem:[%s1 + $0x154] sm:$0xf]
  %v114 = vld [vmem:[%s1 + $0x158] sm:$0xf]
  %v115 = vld [vmem:[%s1 + $0x15c] sm:$0xf]
  %v116 = vld [vmem:[%s1 + $0x160] sm:$0xf]
  %v117 = vld [vmem:[%s1 + $0x164] sm:$0xf]
  %v118 = vld [vmem:[%s1 + $0x168] sm:$0xf]
  %v119 = vld [vmem:[%s1 + $0x16c] sm:$0xf]
  %v120 = vld [vmem:[%s1 + $0x170] sm:$0xf]
  %v121 = vld [vmem:[%s1 + $0x174] sm:$0xf]
  %v122 = vld [vmem:[%s1 + $0x178] sm:$0xf]
  %v123 = vld [vmem:[%s1 + $0x17c] sm:$0xf]
  %v124 = vld [vmem:[%s1 + $0x180] sm:$0xf]
  %v125 = vld [vmem:[%s1 + $0x184] sm:$0xf]
  %v126 = vld [vmem:[%s1 + $0x188] sm:$0xf]
  %v127 = vld [vmem:[%s1 + $0x18c] sm:$0xf]
  %v128 = vld [vmem:[%s1 + $0x190] sm:$0xf]
  %v129 = vld [vmem:[%s1 + $0x194] sm:$0xf]
  %v130 = vld [vmem:[%s1 + $0x198] sm:$0xf]
  %v131 = vld [vmem:[%s1 + $0x19c] sm:$0xf]
  %v132 = vld [vmem:[%s1 + $0x1a0] sm:$0xf]
  %v133 = vld [vmem:[%s1 + $0x1a4] sm:$0xf]
  %v134 = vld [vmem:[%s1 + $0x1a8] sm:$0xf]
  %v135 = vld [vmem:[%s1 + $0x1ac] sm:$0xf]
  %v136 = vld [vmem:[%s1 + $0x1b0] sm:$0xf]
  %v137 = vld [vmem:[%s1 + $0x1b4] sm:$0xf]
  %v138 = vld [vmem:[%s1 + $0x1b8] sm:$0xf]
  %v139 = vld [vmem:[%s1 + $0x1bc] sm:$0xf]
  %v140 = vld [vmem:[%s1 + $0x1c0] sm:$0xf]
  %v141 = vld [vmem:[%s1 + $0x1c4] sm:$0xf]
  %v142 = vld [vmem:[%s1 + $0x1c8] sm:$0xf]
  %v143 = vld [vmem:[%s1 + $0x1cc] sm:$0xf]
  %v144 = vld [vmem:[%s1 + $0x1d0] sm:$0xf]
  %v145 = vld [vmem:[%s1 + $0x1d4] sm:$0xf]
  %v146 = vld [vmem:[%s1 + $0x1d8] sm:$0xf]
  %v147 = vld [vmem:[%s1 + $0x1dc] sm:$0xf]
  %v148 = vld [vmem:[%s1 + $0x1e0] sm:$0xf]
  %v149 = vld [vmem:[%s1 + $0x1e4] sm:$0xf]
  %v150 = vld [vmem:[%s1 + $0x1e8] sm:$0xf]
  %v151 = vld [vmem:[%s1 + $0x1ec] sm:$0xf]
  %v152 = vld [vmem:[%s1 + $0x1f0] sm:$0xf]
  %v153 = vld [vmem:[%s1 + $0x1f4] sm:$0xf]
  %v154 = vld [vmem:[%s1 + $0x1f8] sm:$0xf]
  %v155 = vld [vmem:[%s1 + $0x1fc] sm:$0xf]
  %v156 = vld [vmem:[%s1 + $0x200] sm:$0xf]
  %v157 = vld [vmem:[%s1 + $0x204] sm:$0xf]
  %v158 = vld [vmem:[%s1 + $0x208] sm:$0xf]
  %v159 = vld [vmem:[%s1 + $0x20c] sm:$0xf]
  %v160 = vld [vmem:[%s1 + $0x210] sm:$0xf]
  %v161 = vld [vmem:[%s1 + $0x214] sm:$0xf]
  %v162 = vld [vmem:[%s1 + $0x218] sm:$0xf]
  %v163 = vld [vmem:[%s1 + $0x21c] sm:$0xf]
  %v164 = vld [vmem:[%s1 + $0x220] sm:$0xf]
  %v165 = vld [vmem:[%s1 + $0x224] sm:$0xf]
  %v166 = vld [vmem:[%s1 + $0x228] sm:$0xf]
  %v167 = vld [vmem:[%s1 + $0x22c] sm:$0xf]
  %v168 = vld [vmem:[%s1 + $0x230] sm:$0xf]
  %v169 = vld [vmem:[%s1 + $0x234] sm:$0xf]
  %v170 = vld [vmem:[%s1 + $0x238] sm:$0xf]
  %v171 = vld [vmem:[%s1 + $0x23c] sm:$0xf]
  %v172 = vld [vmem:[%s1 + $0x240] sm:$0xf]
  %v173 = vld [vmem:[%s1 + $0x244] sm:$0xf]
  %v174 = vld [vmem:[%s1 + $0x248] sm:$0xf]
  %v175 = vld [vmem:[%s1 + $0x24c] sm:$0xf]
  %v176 = vld [vmem:[%s1 + $0x250] sm:$0xf]
  %v177 = vld [vmem:[%s1 + $0x254] sm:$0xf]
  %v178 = vld [vmem:[%s1 + $0x258] sm:$0xf]
  %v179 = vld [vmem:[%s1 + $0x25c] sm:$0xf]
  %v180 = vld [vmem:[%s1 + $0x260] sm:$0xf]
  %v181 = vld [vmem:[%s1 + $0x264] sm:$0xf]
  %v182 = vld [vmem:[%s1 + $0x268] sm:$0xf]
  %v183 = vld [vmem:[%s1 + $0x26c] sm:$0xf]
  %v184 = vld [vmem:[%s1 + $0x270] sm:$0xf]
  %v185 = vld [vmem:[%s1 + $0x274] sm:$0xf]
  %v186 = vld [vmem:[%s1 + $0x278] sm:$0xf]
  %v187 = vld [vmem:[%s1 + $0x27c] sm:$0xf]
  %v188 = vld [vmem:[%s1 + $0x280] sm:$0xf]
  %v189 = vld [vmem:[%s1 + $0x284] sm:$0xf]
  %v190 = vld [vmem:[%s1 + $0x288] sm:$0xf]
  %v191 = vld [vmem:[%s1 + $0x28c] sm:$0xf]
  %v192 = vld [vmem:[%s1 + $0x290] sm:$0xf]
  %v193 = vld [vmem:[%s1 + $0x294] sm:$0xf]
  %v194 = vld [vmem:[%s1 + $0x298] sm:$0xf]
  %v195 = vld [vmem:[%s1 + $0x29c] sm:$0xf]
  %v196 = vld [vmem:[%s1 + $0x2a0] sm:$0xf]
  %v197 = vld [vmem:[%s1 + $0x2a4] sm:$0xf]
  %v198 = vld [vmem:[%s1 + $0x2a8] sm:$0xf]
  %v199 = vld [vmem:[%s1 + $0x2ac] sm:$0xf]
  %v200 = vld [vmem:[%s1 + $0x2b0] sm:$0xf]
  %v201 = vld [vmem:[%s1 + $0x2b4] sm:$0xf]
  %v202 = vld [vmem:[%s1 + $0x2b8] sm:$0xf]
  %v203 = vld [vmem:[%s1 + $0x2bc] sm:$0xf]
  %v204 = vld [vmem:[%s1 + $0x2c0] sm:$0xf]
  %v205 = vld [vmem:[%s1 + $0x2c4] sm:$0xf]
  %v206 = vld [vmem:[%s1 + $0x2c8] sm:$0xf]
  %v207 = vld [vmem:[%s1 + $0x2cc] sm:$0xf]
  %v208 = vld [vmem:[%s1 + $0x2d0] sm:$0xf]
  %v209 = vld [vmem:[%s1 + $0x2d4] sm:$0xf]
  %v210 = vld [vmem:[%s1 + $0x2d8] sm:$0xf]
  %v211 = vld [vmem:[%s1 + $0x2dc] sm:$0xf]
  %v212 = vld [vmem:[%s1 + $0x2e0] sm:$0xf]
  %v213 = vld [vmem:[%s1 + $0x2e4] sm:$0xf]
  %v214 = vld [vmem:[%s1 + $0x2e8] sm:$0xf]
  %v215 = vld [vmem:[%s1 + $0x2ec] sm:$0xf]
  %v216 = vld [vmem:[%s1 + $0x2f0] sm:$0xf]
  %v217 = vld [vmem:[%s1 + $0x2f4] sm:$0xf]
  %v218 = vld [vmem:[%s1 + $0x2f8] sm:$0xf]
  %v219 = vld [vmem:[%s1 + $0x2fc] sm:$0xf]
  %v220 = vld [vmem:[%s1 + $0x300] sm:$0xf]
  %v221 = vld [vmem:[%s1 + $0x304] sm:$0xf]
  %v222 = vld [vmem:[%s1 + $0x308] sm:$0xf]
  %v223 = vld [vmem:[%s1 + $0x30c] sm:$0xf]
  %v224 = vld [vmem:[%s1 + $0x310] sm:$0xf]
  %v225 = vld [vmem:[%s1 + $0x314] sm:$0xf]
  %v226 = vld [vmem:[%s1 + $0x318] sm:$0xf]
  %v227 = vld [vmem:[%s1 + $0x31c] sm:$0xf]
  %v228 = vld [vmem:[%s1 + $0x320] sm:$0xf]
  %v229 = vld [vmem:[%s1 + $0x324] sm:$0xf]
  %v230 = vld [vmem:[%s1 + $0x328] sm:$0xf]
  %v231 = vld [vmem:[%s1 + $0x32c] sm:$0xf]
  %v232 = vld [vmem:[%s1 + $0x330] sm:$0xf]
  %v233 = vld [vmem:[%s1 + $0x334] sm:$0xf]
  %v234 = vld [vmem:[%s1 + $0x338] sm:$0xf]
  %v235 = vld [vmem:[%s1 + $0x33c] sm:$0xf]
  %v236 = vld [vmem:[%s1 + $0x340] sm:$0xf]
  %v237 = vld [vmem:[%s1 + $0x344] sm:$0xf]
  %v238 = vld [vmem:[%s1 + $0x348] sm:$0xf]
  %v239 = vld [vmem:[%s1 + $0x34c] sm:$0xf]
  %v240 = vld [vmem:[%s1 + $0x350] sm:$0xf]
  %v241 = vld [vmem:[%s1 + $0x354] sm:$0xf]
  %v242 = vld [vmem:[%s1 + $0x358] sm:$0xf]
  %v243 = vld [vmem:[%s1 + $0x35c] sm:$0xf]
  %v244 = vld [vmem:[%s1 + $0x360] sm:$0xf]
  %v245 = vld [vmem:[%s1 + $0x364] sm:$0xf]
  %v246 = vld [vmem:[%s1 + $0x368] sm:$0xf]
  %v247 = vld [vmem:[%s1 + $0x36c] sm:$0xf]
  %v248 = vld [vmem:[%s1 + $0x370] sm:$0xf]
  %v249 = vld [vmem:[%s1 + $0x374] sm:$0xf]
  %v250 = vld [vmem:[%s1 + $0x378] sm:$0xf]
  %v251 = vld [vmem:[%s1 + $0x37c] sm:$0xf]
  %v252 = vld [vmem:[%s1 + $0x380] sm:$0xf]
  %v253 = vld [vmem:[%s1 + $0x384] sm:$0xf]
  %v254 = vld [vmem:[%s1 + $0x388] sm:$0xf]
  %v255 = vld [vmem:[%s1 + $0x38c] sm:$0xf]
  %v256 = vld [vmem:[%s1 + $0x390] sm:$0xf]
  %v257 = vld [vmem:[%s1 + $0x394] sm:$0xf]
  %v258 = vld [vmem:[%s1 + $0x398] sm:$0xf]
  %v259 = vld [vmem:[%s1 + $0x39c] sm:$0xf]
  %v260 = vld [vmem:[%s1 + $0x3a0] sm:$0xf]
  %v261 = vld [vmem:[%s1 + $0x3a4] sm:$0xf]
  %v262 = vld [vmem:[%s1 + $0x3a8] sm:$0xf]
  %v263 = vld [vmem:[%s1 + $0x3ac] sm:$0xf]
  %v264 = vld [vmem:[%s1 + $0x3b0] sm:$0xf]
  %v265 = vld [vmem:[%s1 + $0x3b4] sm:$0xf]
  %v266 = vld [vmem:[%s1 + $0x3b8] sm:$0xf]
  %v267 = vld [vmem:[%s1 + $0x3bc] sm:$0xf]
  %v268 = vld [vmem:[%s1 + $0x3c0] sm:$0xf]
  %v269 = vld [vmem:[%s1 + $0x3c4] sm:$0xf]
  %v270 = vld [vmem:[%s1 + $0x3c8] sm:$0xf]
  %v271 = vld [vmem:[%s1 + $0x3cc] sm:$0xf]
  %v272 = vld [vmem:[%s1 + $0x3d0] sm:$0xf]
  %v273 = vld [vmem:[%s1 + $0x3d4] sm:$0xf]
  %v274 = vld [vmem:[%s1 + $0x3d8] sm:$0xf]
  %v275 = vld [vmem:[%s1 + $0x3dc] sm:$0xf]
  %v276 = vld [vmem:[%s1 + $0x3e0] sm:$0xf]
  %v277 = vld [vmem:[%s1 + $0x3e4] sm:$0xf]
  %v278 = vld [vmem:[%s1 + $0x3e8] sm:$0xf]
  %v279 = vld [vmem:[%s1 + $0x3ec] sm:$0xf]
  %v280 = vld [vmem:[%s1 + $0x3f0] sm:$0xf]
  %v281 = vld [vmem:[%s1 + $0x3f4] sm:$0xf]
  %v282 = vld [vmem:[%s1 + $0x3f8] sm:$0xf]
  %v283 = vld [vmem:[%s1 + $0x3fc] sm:$0xf]
  %v284 = vld [vmem:[%s1 + $0x400] sm:$0xf]
  %v285 = vld [vmem:[%s1 + $0x404] sm:$0xf]
  %v286 = vld [vmem:[%s1 + $0x408] sm:$0xf]
  %v287 = vld [vmem:[%s1 + $0x40c] sm:$0xf]
  %v288 = vld [vmem:[%s1 + $0x410] sm:$0xf]
  %v289 = vld [vmem:[%s1 + $0x414] sm:$0xf]
  %v290 = vld [vmem:[%s1 + $0x418] sm:$0xf]
  %v291 = vld [vmem:[%s1 + $0x41c] sm:$0xf]
  %v292 = vld [vmem:[%s1 + $0x420] sm:$0xf]
  %v293 = vld [vmem:[%s1 + $0x424] sm:$0xf]
  %v294 = vld [vmem:[%s1 + $0x428] sm:$0xf]
  %v295 = vld [vmem:[%s1 + $0x42c] sm:$0xf]
  %v296 = vld [vmem:[%s1 + $0x430] sm:$0xf]
  %v297 = vld [vmem:[%s1 + $0x434] sm:$0xf]
  %v298 = vld [vmem:[%s1 + $0x438] sm:$0xf]
  %v299 = vld [vmem:[%s1 + $0x43c] sm:$0xf]
  %v300 = vld [vmem:[%s1 + $0x440] sm:$0xf]
  %v301 = vld [vmem:[%s1 + $0x444] sm:$0xf]
  %v302 = vld [vmem:[%s1 + $0x448] sm:$0xf]
  %v303 = vld [vmem:[%s1 + $0x44c] sm:$0xf]
  %v304 = vld [vmem:[%s1 + $0x450] sm:$0xf]
  %v305 = vld [vmem:[%s1 + $0x454] sm:$0xf]
  %v306 = vld [vmem:[%s1 + $0x458] sm:$0xf]
  %v307 = vld [vmem:[%s1 + $0x45c] sm:$0xf]
  %v308 = vld [vmem:[%s1 + $0x460] sm:$0xf]
  %v309 = vld [vmem:[%s1 + $0x464] sm:$0xf]
  %v310 = vld [vmem:[%s1 + $0x468] sm:$0xf]
  %v311 = vld [vmem:[%s1 + $0x46c] sm:$0xf]
  %v312 = vld [vmem:[%s1 + $0x470] sm:$0xf]
  %v313 = vld [vmem:[%s1 + $0x474] sm:$0xf]
  %v314 = vld [vmem:[%s1 + $0x478] sm:$0xf]
  %v315 = vld [vmem:[%s1 + $0x47c] sm:$0xf]
  %v316 = vld [vmem:[%s1 + $0x480] sm:$0xf]
  %v317 = vld [vmem:[%s1 + $0x484] sm:$0xf]
  %v318 = vld [vmem:[%s1 + $0x488] sm:$0xf]
  %v319 = vld [vmem:[%s1 + $0x48c] sm:$0xf]
  %v320 = vld [vmem:[%s1 + $0x490] sm:$0xf]
  %v321 = vld [vmem:[%s1 + $0x494] sm:$0xf]
  %v322 = vld [vmem:[%s1 + $0x498] sm:$0xf]
  %v323 = vld [vmem:[%s1 + $0x49c] sm:$0xf]
  %v324 = vld [vmem:[%s1 + $0x4a0] sm:$0xf]
  %v325 = vld [vmem:[%s1 + $0x4a4] sm:$0xf]
  %v326 = vld [vmem:[%s1 + $0x4a8] sm:$0xf]
  %v327 = vld [vmem:[%s1 + $0x4ac] sm:$0xf]
  %v328 = vld [vmem:[%s1 + $0x4b0] sm:$0xf]
  %v329 = vld [vmem:[%s1 + $0x4b4] sm:$0xf]
  %v330 = vld [vmem:[%s1 + $0x4b8] sm:$0xf]
  %v331 = vld [vmem:[%s1 + $0x4bc] sm:$0xf]
  %v332 = vld [vmem:[%s1 + $0x4c0] sm:$0xf]
  %v333 = vld [vmem:[%s1 + $0x4c4] sm:$0xf]
  %v334 = vld [vmem:[%s1 + $0x4c8] sm:$0xf]
  %v335 = vld [vmem:[%s1 + $0x4cc] sm:$0xf]
  %v336 = vld [vmem:[%s1 + $0x4d0] sm:$0xf]
  %v337 = vld [vmem:[%s1 + $0x4d4] sm:$0xf]
  %v338 = vld [vmem:[%s1 + $0x4d8] sm:$0xf]
  %v339 = vld [vmem:[%s1 + $0x4dc] sm:$0xf]
  %v340 = vld [vmem:[%s1 + $0x4e0] sm:$0xf]
  %v341 = vld [vmem:[%s1 + $0x4e4] sm:$0xf]
  %v342 = vld [vmem:[%s1 + $0x4e8] sm:$0xf]
  %v343 = vld [vmem:[%s1 + $0x4ec] sm:$0xf]
  %v344 = vld [vmem:[%s1 + $0x4f0] sm:$0xf]
  %v345 = vld [vmem:[%s1 + $0x4f4] sm:$0xf]
  %v346 = vld [vmem:[%s1 + $0x4f8] sm:$0xf]
  %v347 = vld [vmem:[%s1 + $0x4fc] sm:$0xf]
  %v348 = vld [vmem:[%s1 + $0x500] sm:$0xf]
  %v349 = vld [vmem:[%s1 + $0x504] sm:$0xf]
  %v350 = vld [vmem:[%s1 + $0x508] sm:$0xf]
  %v351 = vld [vmem:[%s1 + $0x50c] sm:$0xf]
  %v352 = vld [vmem:[%s1 + $0x510] sm:$0xf]
  %v353 = vld [vmem:[%s1 + $0x514] sm:$0xf]
  %v354 = vld [vmem:[%s1 + $0x518] sm:$0xf]
  %v355 = vld [vmem:[%s1 + $0x51c] sm:$0xf]
  %v356 = vld [vmem:[%s1 + $0x520] sm:$0xf]
  %v357 = vld [vmem:[%s1 + $0x524] sm:$0xf]
  %v358 = vld [vmem:[%s1 + $0x528] sm:$0xf]
  %v359 = vld [vmem:[%s1 + $0x52c] sm:$0xf]
  %v360 = vld [vmem:[%s1 + $0x530] sm:$0xf]
  %v361 = vld [vmem:[%s1 + $0x534] sm:$0xf]
  %v362 = vld [vmem:[%s1 + $0x538] sm:$0xf]
  %v363 = vld [vmem:[%s1 + $0x53c] sm:$0xf]
  %v364 = vld [vmem:[%s1 + $0x540] sm:$0xf]
  %v365 = vld [vmem:[%s1 + $0x544] sm:$0xf]
  %v366 = vld [vmem:[%s1 + $0x548] sm:$0xf]
  %v367 = vld [vmem:[%s1 + $0x54c] sm:$0xf]
  %v368 = vld [vmem:[%s1 + $0x550] sm:$0xf]
  %v369 = vld [vmem:[%s1 + $0x554] sm:$0xf]
  %v370 = vld [vmem:[%s1 + $0x558] sm:$0xf]
  %v371 = vld [vmem:[%s1 + $0x55c] sm:$0xf]
  %v372 = vld [vmem:[%s1 + $0x560] sm:$0xf]
  %v373 = vld [vmem:[%s1 + $0x564] sm:$0xf]
  %v374 = vld [vmem:[%s1 + $0x568] sm:$0xf]
  %v375 = vld [vmem:[%s1 + $0x56c] sm:$0xf]
  %v376 = vld [vmem:[%s1 + $0x570] sm:$0xf]
  %v377 = vld [vmem:[%s1 + $0x574] sm:$0xf]
  %v378 = vld [vmem:[%s1 + $0x578] sm:$0xf]
  %v379 = vld [vmem:[%s1 + $0x57c] sm:$0xf]
  %v380 = vld [vmem:[%s1 + $0x580] sm:$0xf]
  %v381 = vld [vmem:[%s1 + $0x584] sm:$0xf]
  %v382 = vld [vmem:[%s1 + $0x588] sm:$0xf]
  %v383 = vld [vmem:[%s1 + $0x58c] sm:$0xf]
  %v384 = vld [vmem:[%s1 + $0x590] sm:$0xf]
  %v385 = vld [vmem:[%s1 + $0x594] sm:$0xf]
  %v386 = vld [vmem:[%s1 + $0x598] sm:$0xf]
  %v387 = vld [vmem:[%s1 + $0x59c] sm:$0xf]
  %v388 = vld [vmem:[%s1 + $0x5a0] sm:$0xf]
  %v389 = vld [vmem:[%s1 + $0x5a4] sm:$0xf]
  %v390 = vld [vmem:[%s1 + $0x5a8] sm:$0xf]
  %v391 = vld [vmem:[%s1 + $0x5ac] sm:$0xf]
  %v392 = vld [vmem:[%s1 + $0x5b0] sm:$0xf]
  %v393 = vld [vmem:[%s1 + $0x5b4] sm:$0xf]
  %v394 = vld [vmem:[%s1 + $0x5b8] sm:$0xf]
  %v395 = vld [vmem:[%s1 + $0x5bc] sm:$0xf]
  %v396 = vld [vmem:[%s1 + $0x5c0] sm:$0xf]
  %v397 = vld [vmem:[%s1 + $0x5c4] sm:$0xf]
  %v398 = vld [vmem:[%s1 + $0x5c8] sm:$0xf]
  %v399 = vld [vmem:[%s1 + $0x5cc] sm:$0xf]
  %v400 = vld [vmem:[%s1 + $0x5d0] sm:$0xf]
  %v401 = vld [vmem:[%s1 + $0x5d4] sm:$0xf]
  %v402 = vld [vmem:[%s1 + $0x5d8] sm:$0xf]
  %v403 = vld [vmem:[%s1 + $0x5dc] sm:$0xf]
  %v404 = vld [vmem:[%s1 + $0x5e0] sm:$0xf]
  %v405 = vld [vmem:[%s1 + $0x5e4] sm:$0xf]
  %v406 = vld [vmem:[%s1 + $0x5e8] sm:$0xf]
  %v407 = vld [vmem:[%s1 + $0x5ec] sm:$0xf]
  %v408 = vld [vmem:[%s1 + $0x5f0] sm:$0xf]
  %v409 = vld [vmem:[%s1 + $0x5f4] sm:$0xf]
  %v410 = vld [vmem:[%s1 + $0x5f8] sm:$0xf]
  %v411 = vld [vmem:[%s1 + $0x5fc] sm:$0xf]
  %v412 = vld [vmem:[%s1 + $0x600] sm:$0xf]
  %v413 = vld [vmem:[%s1 + $0x604] sm:$0xf]
  %v414 = vld [vmem:[%s1 + $0x608] sm:$0xf]
  %v415 = vld [vmem:[%s1 + $0x60c] sm:$0xf]
  %v416 = vld [vmem:[%s1 + $0x610] sm:$0xf]
  %v417 = vld [vmem:[%s1 + $0x614] sm:$0xf]
  %v418 = vld [vmem:[%s1 + $0x618] sm:$0xf]
  %v419 = vld [vmem:[%s1 + $0x61c] sm:$0xf]
  %v420 = vld [vmem:[%s2] sm:$0x1]
  %v422 = vlaneseq
  %v423 = vshrl.u32 %v422, 7
  %v424 = vsub.s32 0, %v423
  %v425 = vrot.slane %v420, %v424
  %v440 = vunpack.c.l.b16 %v15
  %v441 = vunpack.c.h.b16 %v15
  %v442 = vunpack.c.l.b16 %v16
  %v443 = vunpack.c.h.b16 %v16
  %v444 = vunpack.c.l.b16 %v17
  %v445 = vunpack.c.h.b16 %v17
  %v446 = vunpack.c.l.b16 %v18
  %v447 = vunpack.c.h.b16 %v18
  %v448 = vunpack.c.l.b16 %v19
  %v449 = vunpack.c.h.b16 %v19
  %v450 = vunpack.c.l.b16 %v20
  %v451 = vunpack.c.h.b16 %v20
  %v452 = vunpack.c.l.b16 %v21
  %v453 = vunpack.c.h.b16 %v21
  %v454 = vunpack.c.l.b16 %v22
  %v455 = vunpack.c.h.b16 %v22
  %v456 = vunpack.c.l.b16 %v23
  %v457 = vunpack.c.h.b16 %v23
  %v458 = vunpack.c.l.b16 %v24
  %v459 = vunpack.c.h.b16 %v24
  %v460 = vunpack.c.l.b16 %v25
  %v461 = vunpack.c.h.b16 %v25
  %v462 = vunpack.c.l.b16 %v26
  %v463 = vunpack.c.h.b16 %v26
  %v464 = vunpack.c.l.b16 %v27
  %v465 = vpack.c.b16 %v440, %v440
  %v466 = vpack.c.b16 %v441, %v441
  %v467 = vpack.c.b16 %v442, %v442
  %v468 = vpack.c.b16 %v443, %v443
  %v469 = vpack.c.b16 %v444, %v444
  %v470 = vpack.c.b16 %v445, %v445
  %v471 = vpack.c.b16 %v446, %v446
  %v472 = vpack.c.b16 %v447, %v447
  %v473 = vpack.c.b16 %v448, %v448
  %v474 = vpack.c.b16 %v449, %v449
  %v475 = vpack.c.b16 %v450, %v450
  %v476 = vpack.c.b16 %v451, %v451
  %v477 = vpack.c.b16 %v452, %v452
  %v478 = vpack.c.b16 %v453, %v453
  %v479 = vpack.c.b16 %v454, %v454
  %v480 = vpack.c.b16 %v455, %v455
  %v481 = vpack.c.b16 %v456, %v456
  %v482 = vpack.c.b16 %v457, %v457
  %v483 = vpack.c.b16 %v458, %v458
  %v484 = vpack.c.b16 %v459, %v459
  %v485 = vpack.c.b16 %v460, %v460
  %v486 = vpack.c.b16 %v461, %v461
  %v487 = vpack.c.b16 %v462, %v462
  %v488 = vpack.c.b16 %v463, %v463
  %v489 = vpack.c.b16 %v464, %v464
  %v906 = vunpack.c.l.b16 %v28
  %v907 = vunpack.c.l.b16 %v29
  %v908 = vunpack.c.l.b16 %v30
  %v909 = vunpack.c.l.b16 %v31
  %v910 = vunpack.c.l.b16 %v32
  %v911 = vunpack.c.l.b16 %v33
  %v912 = vunpack.c.l.b16 %v34
  %v913 = vunpack.c.l.b16 %v35
  %v914 = vunpack.c.l.b16 %v36
  %v915 = vunpack.c.l.b16 %v37
  %v916 = vunpack.c.l.b16 %v38
  %v917 = vunpack.c.l.b16 %v39
  %v918 = vunpack.c.l.b16 %v40
  %v919 = vunpack.c.l.b16 %v41
  %v920 = vunpack.c.l.b16 %v42
  %v921 = vunpack.c.l.b16 %v43
  %v922 = vunpack.c.l.b16 %v44
  %v923 = vunpack.c.l.b16 %v45
  %v924 = vunpack.c.l.b16 %v46
  %v925 = vunpack.c.l.b16 %v47
  %v926 = vunpack.c.l.b16 %v48
  %v927 = vunpack.c.l.b16 %v49
  %v928 = vunpack.c.l.b16 %v50
  %v929 = vunpack.c.l.b16 %v51
  %v930 = vunpack.c.l.b16 %v52
  %v931 = vunpack.c.l.b16 %v53
  %v932 = vunpack.c.l.b16 %v54
  %v933 = vunpack.c.l.b16 %v55
  %v934 = vunpack.c.l.b16 %v56
  %v935 = vunpack.c.l.b16 %v57
  %v936 = vunpack.c.l.b16 %v58
  %v937 = vunpack.c.l.b16 %v59
  %v938 = vunpack.c.l.b16 %v60
  %v939 = vunpack.c.l.b16 %v61
  %v940 = vunpack.c.l.b16 %v62
  %v941 = vunpack.c.l.b16 %v63
  %v942 = vunpack.c.l.b16 %v64
  %v943 = vunpack.c.l.b16 %v65
  %v944 = vunpack.c.l.b16 %v66
  %v945 = vunpack.c.l.b16 %v67
  %v946 = vunpack.c.l.b16 %v68
  %v947 = vunpack.c.l.b16 %v69
  %v948 = vunpack.c.l.b16 %v70
  %v949 = vunpack.c.l.b16 %v71
  %v950 = vunpack.c.l.b16 %v72
  %v951 = vunpack.c.l.b16 %v73
  %v952 = vunpack.c.l.b16 %v74
  %v953 = vunpack.c.l.b16 %v75
  %v954 = vunpack.c.l.b16 %v76
  %v955 = vunpack.c.l.b16 %v77
  %v956 = vunpack.c.l.b16 %v78
  %v957 = vunpack.c.l.b16 %v79
  %v958 = vunpack.c.l.b16 %v80
  %v959 = vunpack.c.l.b16 %v81
  %v960 = vunpack.c.l.b16 %v82
  %v961 = vunpack.c.l.b16 %v83
  %v962 = vunpack.c.l.b16 %v84
  %v963 = vunpack.c.l.b16 %v85
  %v964 = vunpack.c.l.b16 %v86
  %v965 = vunpack.c.l.b16 %v87
  %v966 = vunpack.c.l.b16 %v88
  %v967 = vunpack.c.l.b16 %v89
  %v968 = vunpack.c.l.b16 %v90
  %v969 = vunpack.c.l.b16 %v91
  %v970 = vunpack.c.l.b16 %v92
  %v971 = vunpack.c.l.b16 %v93
  %v972 = vunpack.c.l.b16 %v94
  %v973 = vunpack.c.l.b16 %v95
  %v974 = vunpack.c.l.b16 %v96
  %v975 = vunpack.c.l.b16 %v97
  %v976 = vunpack.c.l.b16 %v98
  %v977 = vunpack.c.l.b16 %v99
  %v978 = vunpack.c.l.b16 %v100
  %v979 = vunpack.c.l.b16 %v101
  %v980 = vunpack.c.l.b16 %v102
  %v981 = vunpack.c.l.b16 %v103
  %v982 = vunpack.c.l.b16 %v104
  %v983 = vunpack.c.l.b16 %v105
  %v984 = vunpack.c.l.b16 %v106
  %v985 = vunpack.c.l.b16 %v107
  %v986 = vunpack.c.l.b16 %v108
  %v987 = vunpack.c.l.b16 %v109
  %v988 = vunpack.c.l.b16 %v110
  %v989 = vunpack.c.l.b16 %v111
  %v990 = vunpack.c.l.b16 %v112
  %v991 = vunpack.c.l.b16 %v113
  %v992 = vunpack.c.l.b16 %v114
  %v993 = vunpack.c.l.b16 %v115
  %v994 = vunpack.c.l.b16 %v116
  %v995 = vunpack.c.l.b16 %v117
  %v996 = vunpack.c.l.b16 %v118
  %v997 = vunpack.c.l.b16 %v119
  %v998 = vunpack.c.l.b16 %v120
  %v999 = vunpack.c.l.b16 %v121
  %v1000 = vunpack.c.l.b16 %v122
  %v1001 = vunpack.c.l.b16 %v123
  %v1002 = vunpack.c.l.b16 %v124
  %v1003 = vunpack.c.l.b16 %v125
  %v1004 = vunpack.c.l.b16 %v126
  %v1005 = vunpack.c.l.b16 %v127
  %v1006 = vunpack.c.l.b16 %v128
  %v1007 = vunpack.c.l.b16 %v129
  %v1008 = vunpack.c.l.b16 %v130
  %v1009 = vunpack.c.l.b16 %v131
  %v1010 = vunpack.c.l.b16 %v132
  %v1011 = vunpack.c.l.b16 %v133
  %v1012 = vunpack.c.l.b16 %v134
  %v1013 = vunpack.c.l.b16 %v135
  %v1014 = vunpack.c.l.b16 %v136
  %v1015 = vunpack.c.l.b16 %v137
  %v1016 = vunpack.c.l.b16 %v138
  %v1017 = vunpack.c.l.b16 %v139
  %v1018 = vunpack.c.l.b16 %v140
  %v1019 = vunpack.c.l.b16 %v141
  %v1020 = vunpack.c.l.b16 %v142
  %v1021 = vunpack.c.l.b16 %v143
  %v1022 = vunpack.c.l.b16 %v144
  %v1023 = vunpack.c.l.b16 %v145
  %v1024 = vunpack.c.l.b16 %v146
  %v1025 = vunpack.c.l.b16 %v147
  %v1026 = vunpack.c.l.b16 %v148
  %v1027 = vunpack.c.l.b16 %v149
  %v1028 = vunpack.c.l.b16 %v150
  %v1029 = vunpack.c.l.b16 %v151
  %v1030 = vunpack.c.l.b16 %v152
  %v1031 = vunpack.c.l.b16 %v153
  %v1032 = vunpack.c.l.b16 %v154
  %v1033 = vunpack.c.l.b16 %v155
  %v1034 = vunpack.c.l.b16 %v156
  %v1035 = vunpack.c.l.b16 %v157
  %v1036 = vunpack.c.l.b16 %v158
  %v1037 = vunpack.c.l.b16 %v159
  %v1038 = vunpack.c.l.b16 %v160
  %v1039 = vunpack.c.l.b16 %v161
  %v1040 = vunpack.c.l.b16 %v162
  %v1041 = vunpack.c.l.b16 %v163
  %v1042 = vunpack.c.l.b16 %v164
  %v1043 = vunpack.c.l.b16 %v165
  %v1044 = vunpack.c.l.b16 %v166
  %v1045 = vunpack.c.l.b16 %v167
  %v1046 = vunpack.c.l.b16 %v168
  %v1047 = vunpack.c.l.b16 %v169
  %v1048 = vunpack.c.l.b16 %v170
  %v1049 = vunpack.c.l.b16 %v171
  %v1050 = vunpack.c.l.b16 %v172
  %v1051 = vunpack.c.l.b16 %v173
  %v1052 = vunpack.c.l.b16 %v174
  %v1053 = vunpack.c.l.b16 %v175
  %v1054 = vunpack.c.l.b16 %v176
  %v1055 = vunpack.c.l.b16 %v177
  %v1056 = vunpack.c.l.b16 %v178
  %v1057 = vunpack.c.l.b16 %v179
  %v1058 = vunpack.c.l.b16 %v180
  %v1059 = vunpack.c.l.b16 %v181
  %v1060 = vunpack.c.l.b16 %v182
  %v1061 = vunpack.c.l.b16 %v183
  %v1062 = vunpack.c.l.b16 %v184
  %v1063 = vunpack.c.l.b16 %v185
  %v1064 = vunpack.c.l.b16 %v186
  %v1065 = vunpack.c.l.b16 %v187
  %v1066 = vunpack.c.l.b16 %v188
  %v1067 = vunpack.c.l.b16 %v189
  %v1068 = vunpack.c.l.b16 %v190
  %v1069 = vunpack.c.l.b16 %v191
  %v1070 = vunpack.c.l.b16 %v192
  %v1071 = vunpack.c.l.b16 %v193
  %v1072 = vunpack.c.l.b16 %v194
  %v1073 = vunpack.c.l.b16 %v195
  %v1074 = vunpack.c.l.b16 %v196
  %v1075 = vunpack.c.l.b16 %v197
  %v1076 = vunpack.c.l.b16 %v198
  %v1077 = vunpack.c.l.b16 %v199
  %v1078 = vunpack.c.l.b16 %v200
  %v1079 = vunpack.c.l.b16 %v201
  %v1080 = vunpack.c.l.b16 %v202
  %v1081 = vunpack.c.l.b16 %v203
  %v1082 = vunpack.c.l.b16 %v204
  %v1083 = vunpack.c.l.b16 %v205
  %v1084 = vunpack.c.l.b16 %v206
  %v1085 = vunpack.c.l.b16 %v207
  %v1086 = vunpack.c.l.b16 %v208
  %v1087 = vunpack.c.l.b16 %v209
  %v1088 = vunpack.c.l.b16 %v210
  %v1089 = vunpack.c.l.b16 %v211
  %v1090 = vunpack.c.l.b16 %v212
  %v1091 = vunpack.c.l.b16 %v213
  %v1092 = vunpack.c.l.b16 %v214
  %v1093 = vunpack.c.l.b16 %v215
  %v1094 = vunpack.c.l.b16 %v216
  %v1095 = vunpack.c.l.b16 %v217
  %v1096 = vunpack.c.l.b16 %v218
  %v1097 = vunpack.c.l.b16 %v219
  %v1098 = vunpack.c.l.b16 %v220
  %v1099 = vunpack.c.l.b16 %v221
  %v1100 = vunpack.c.l.b16 %v222
  %v1101 = vunpack.c.l.b16 %v223
  %v1102 = vunpack.c.l.b16 %v224
  %v1103 = vunpack.c.l.b16 %v225
  %v1104 = vunpack.c.l.b16 %v226
  %v1105 = vunpack.c.l.b16 %v227
  %v1106 = vunpack.c.l.b16 %v228
  %v1107 = vunpack.c.l.b16 %v229
  %v1108 = vunpack.c.l.b16 %v230
  %v1109 = vunpack.c.l.b16 %v231
  %v1110 = vunpack.c.l.b16 %v232
  %v1111 = vunpack.c.l.b16 %v233
  %v1112 = vunpack.c.l.b16 %v234
  %v1113 = vunpack.c.l.b16 %v235
  %v1114 = vunpack.c.l.b16 %v236
  %v1115 = vunpack.c.l.b16 %v237
  %v1116 = vunpack.c.l.b16 %v238
  %v1117 = vunpack.c.l.b16 %v239
  %v1118 = vunpack.c.l.b16 %v240
  %v1119 = vunpack.c.l.b16 %v241
  %v1120 = vunpack.c.l.b16 %v242
  %v1121 = vunpack.c.l.b16 %v243
  %v1122 = vunpack.c.l.b16 %v244
  %v1123 = vunpack.c.l.b16 %v245
  %v1124 = vunpack.c.l.b16 %v246
  %v1125 = vunpack.c.l.b16 %v247
  %v1126 = vunpack.c.l.b16 %v248
  %v1127 = vunpack.c.l.b16 %v249
  %v1128 = vunpack.c.l.b16 %v250
  %v1129 = vunpack.c.l.b16 %v251
  %v1130 = vunpack.c.l.b16 %v252
  %v1131 = vunpack.c.l.b16 %v253
  %v1132 = vunpack.c.l.b16 %v254
  %v1133 = vunpack.c.l.b16 %v255
  %v1134 = vunpack.c.l.b16 %v256
  %v1135 = vunpack.c.l.b16 %v257
  %v1136 = vunpack.c.l.b16 %v258
  %v1137 = vunpack.c.l.b16 %v259
  %v1138 = vunpack.c.l.b16 %v260
  %v1139 = vunpack.c.l.b16 %v261
  %v1140 = vunpack.c.l.b16 %v262
  %v1141 = vunpack.c.l.b16 %v263
  %v1142 = vunpack.c.l.b16 %v264
  %v1143 = vunpack.c.l.b16 %v265
  %v1144 = vunpack.c.l.b16 %v266
  %v1145 = vunpack.c.l.b16 %v267
  %v1146 = vunpack.c.l.b16 %v268
  %v1147 = vunpack.c.l.b16 %v269
  %v1148 = vunpack.c.l.b16 %v270
  %v1149 = vunpack.c.l.b16 %v271
  %v1150 = vunpack.c.l.b16 %v272
  %v1151 = vunpack.c.l.b16 %v273
  %v1152 = vunpack.c.l.b16 %v274
  %v1153 = vunpack.c.l.b16 %v275
  %v1154 = vunpack.c.l.b16 %v276
  %v1155 = vunpack.c.l.b16 %v277
  %v1156 = vunpack.c.l.b16 %v278
  %v1157 = vunpack.c.l.b16 %v279
  %v1158 = vunpack.c.l.b16 %v280
  %v1159 = vunpack.c.l.b16 %v281
  %v1160 = vunpack.c.l.b16 %v282
  %v1161 = vunpack.c.l.b16 %v283
  %v1162 = vunpack.c.l.b16 %v284
  %v1163 = vunpack.c.l.b16 %v285
  %v1164 = vunpack.c.l.b16 %v286
  %v1165 = vunpack.c.l.b16 %v287
  %v1166 = vunpack.c.l.b16 %v288
  %v1167 = vunpack.c.l.b16 %v289
  %v1168 = vunpack.c.l.b16 %v290
  %v1169 = vunpack.c.l.b16 %v291
  %v1170 = vunpack.c.l.b16 %v292
  %v1171 = vunpack.c.l.b16 %v293
  %v1172 = vunpack.c.l.b16 %v294
  %v1173 = vunpack.c.l.b16 %v295
  %v1174 = vunpack.c.l.b16 %v296
  %v1175 = vunpack.c.l.b16 %v297
  %v1176 = vunpack.c.l.b16 %v298
  %v1177 = vunpack.c.l.b16 %v299
  %v1178 = vunpack.c.l.b16 %v300
  %v1179 = vunpack.c.l.b16 %v301
  %v1180 = vunpack.c.l.b16 %v302
  %v1181 = vunpack.c.l.b16 %v303
  %v1182 = vunpack.c.l.b16 %v304
  %v1183 = vunpack.c.l.b16 %v305
  %v1184 = vunpack.c.l.b16 %v306
  %v1185 = vunpack.c.l.b16 %v307
  %v1186 = vunpack.c.l.b16 %v308
  %v1187 = vunpack.c.l.b16 %v309
  %v1188 = vunpack.c.l.b16 %v310
  %v1189 = vunpack.c.l.b16 %v311
  %v1190 = vunpack.c.l.b16 %v312
  %v1191 = vunpack.c.l.b16 %v313
  %v1192 = vunpack.c.l.b16 %v314
  %v1193 = vunpack.c.l.b16 %v315
  %v1194 = vunpack.c.l.b16 %v316
  %v1195 = vunpack.c.l.b16 %v317
  %v1196 = vunpack.c.l.b16 %v318
  %v1197 = vunpack.c.l.b16 %v319
  %v1198 = vunpack.c.l.b16 %v320
  %v1199 = vunpack.c.l.b16 %v321
  %v1200 = vunpack.c.l.b16 %v322
  %v1201 = vunpack.c.l.b16 %v323
  %v1202 = vunpack.c.l.b16 %v324
  %v1203 = vunpack.c.l.b16 %v325
  %v1204 = vunpack.c.l.b16 %v326
  %v1205 = vunpack.c.l.b16 %v327
  %v1206 = vunpack.c.l.b16 %v328
  %v1207 = vunpack.c.l.b16 %v329
  %v1208 = vunpack.c.l.b16 %v330
  %v1209 = vunpack.c.l.b16 %v331
  %v1210 = vunpack.c.l.b16 %v332
  %v1211 = vunpack.c.l.b16 %v333
  %v1212 = vunpack.c.l.b16 %v334
  %v1213 = vunpack.c.l.b16 %v335
  %v1214 = vunpack.c.l.b16 %v336
  %v1215 = vunpack.c.l.b16 %v337
  %v1216 = vunpack.c.l.b16 %v338
  %v1217 = vunpack.c.l.b16 %v339
  %v1218 = vunpack.c.l.b16 %v340
  %v1219 = vunpack.c.l.b16 %v341
  %v1220 = vunpack.c.l.b16 %v342
  %v1221 = vunpack.c.l.b16 %v343
  %v1222 = vunpack.c.l.b16 %v344
  %v1223 = vunpack.c.l.b16 %v345
  %v1224 = vunpack.c.l.b16 %v346
  %v1225 = vunpack.c.l.b16 %v347
  %v1226 = vunpack.c.l.b16 %v348
  %v1227 = vunpack.c.l.b16 %v349
  %v1228 = vunpack.c.l.b16 %v350
  %v1229 = vunpack.c.l.b16 %v351
  %v1230 = vunpack.c.l.b16 %v352
  %v1231 = vunpack.c.l.b16 %v353
  %v1232 = vunpack.c.l.b16 %v354
  %v1233 = vunpack.c.l.b16 %v355
  %v1234 = vunpack.c.l.b16 %v356
  %v1235 = vunpack.c.l.b16 %v357
  %v1236 = vunpack.c.l.b16 %v358
  %v1237 = vunpack.c.l.b16 %v359
  %v1238 = vunpack.c.l.b16 %v360
  %v1239 = vunpack.c.l.b16 %v361
  %v1240 = vunpack.c.l.b16 %v362
  %v1241 = vunpack.c.l.b16 %v363
  %v1242 = vunpack.c.l.b16 %v364
  %v1243 = vunpack.c.l.b16 %v365
  %v1244 = vunpack.c.l.b16 %v366
  %v1245 = vunpack.c.l.b16 %v367
  %v1246 = vunpack.c.l.b16 %v368
  %v1247 = vunpack.c.l.b16 %v369
  %v1248 = vunpack.c.l.b16 %v370
  %v1249 = vunpack.c.l.b16 %v371
  %v1250 = vunpack.c.l.b16 %v372
  %v1251 = vunpack.c.l.b16 %v373
  %v1252 = vunpack.c.l.b16 %v374
  %v1253 = vunpack.c.l.b16 %v375
  %v1254 = vunpack.c.l.b16 %v376
  %v1255 = vunpack.c.l.b16 %v377
  %v1256 = vunpack.c.l.b16 %v378
  %v1257 = vunpack.c.l.b16 %v379
  %v1258 = vunpack.c.l.b16 %v380
  %v1259 = vunpack.c.l.b16 %v381
  %v1260 = vunpack.c.l.b16 %v382
  %v1261 = vunpack.c.l.b16 %v383
  %v1262 = vunpack.c.l.b16 %v384
  %v1263 = vunpack.c.l.b16 %v385
  %v1264 = vunpack.c.l.b16 %v386
  %v1265 = vunpack.c.l.b16 %v387
  %v1266 = vunpack.c.l.b16 %v388
  %v1267 = vunpack.c.l.b16 %v389
  %v1268 = vunpack.c.l.b16 %v390
  %v1269 = vunpack.c.l.b16 %v391
  %v1270 = vunpack.c.l.b16 %v392
  %v1271 = vunpack.c.l.b16 %v393
  %v1272 = vunpack.c.l.b16 %v394
  %v1273 = vunpack.c.l.b16 %v395
  %v1274 = vunpack.c.l.b16 %v396
  %v1275 = vunpack.c.l.b16 %v397
  %v1276 = vunpack.c.l.b16 %v398
  %v1277 = vunpack.c.l.b16 %v399
  %v1278 = vunpack.c.l.b16 %v400
  %v1279 = vunpack.c.l.b16 %v401
  %v1280 = vunpack.c.l.b16 %v402
  %v1281 = vunpack.c.l.b16 %v403
  %v1282 = vunpack.c.l.b16 %v404
  %v1283 = vunpack.c.l.b16 %v405
  %v1284 = vunpack.c.l.b16 %v406
  %v1285 = vunpack.c.l.b16 %v407
  %v1286 = vunpack.c.l.b16 %v408
  %v1287 = vunpack.c.l.b16 %v409
  %v1288 = vunpack.c.l.b16 %v410
  %v1289 = vunpack.c.l.b16 %v411
  %v1290 = vunpack.c.l.b16 %v412
  %v1291 = vunpack.c.l.b16 %v413
  %v1292 = vunpack.c.l.b16 %v414
  %v1293 = vunpack.c.l.b16 %v415
  %v1294 = vunpack.c.l.b16 %v416
  %v1295 = vunpack.c.l.b16 %v417
  %v1296 = vunpack.c.l.b16 %v418
  %v1297 = vunpack.c.l.b16 %v419
  %v1298 = vpack.c.b16 %v907, %v906
  %v1299 = vpack.c.b16 %v909, %v908
  %v1300 = vpack.c.b16 %v911, %v910
  %v1301 = vpack.c.b16 %v913, %v912
  %v1302 = vpack.c.b16 %v915, %v914
  %v1303 = vpack.c.b16 %v917, %v916
  %v1304 = vpack.c.b16 %v919, %v918
  %v1305 = vpack.c.b16 %v921, %v920
  %v1306 = vpack.c.b16 %v923, %v922
  %v1307 = vpack.c.b16 %v925, %v924
  %v1308 = vpack.c.b16 %v927, %v926
  %v1309 = vpack.c.b16 %v929, %v928
  %v1310 = vpack.c.b16 %v931, %v930
  %v1311 = vpack.c.b16 %v933, %v932
  %v1312 = vpack.c.b16 %v935, %v934
  %v1313 = vpack.c.b16 %v937, %v936
  %v1314 = vpack.c.b16 %v939, %v938
  %v1315 = vpack.c.b16 %v941, %v940
  %v1316 = vpack.c.b16 %v943, %v942
  %v1317 = vpack.c.b16 %v945, %v944
  %v1318 = vpack.c.b16 %v947, %v946
  %v1319 = vpack.c.b16 %v949, %v948
  %v1320 = vpack.c.b16 %v951, %v950
  %v1321 = vpack.c.b16 %v953, %v952
  %v1322 = vpack.c.b16 %v955, %v954
  %v1323 = vpack.c.b16 %v957, %v956
  %v1324 = vpack.c.b16 %v959, %v958
  %v1325 = vpack.c.b16 %v961, %v960
  %v1326 = vpack.c.b16 %v963, %v962
  %v1327 = vpack.c.b16 %v965, %v964
  %v1328 = vpack.c.b16 %v967, %v966
  %v1329 = vpack.c.b16 %v969, %v968
  %v1330 = vpack.c.b16 %v971, %v970
  %v1331 = vpack.c.b16 %v973, %v972
  %v1332 = vpack.c.b16 %v975, %v974
  %v1333 = vpack.c.b16 %v977, %v976
  %v1334 = vpack.c.b16 %v979, %v978
  %v1335 = vpack.c.b16 %v981, %v980
  %v1336 = vpack.c.b16 %v983, %v982
  %v1337 = vpack.c.b16 %v985, %v984
  %v1338 = vpack.c.b16 %v987, %v986
  %v1339 = vpack.c.b16 %v989, %v988
  %v1340 = vpack.c.b16 %v991, %v990
  %v1341 = vpack.c.b16 %v993, %v992
  %v1342 = vpack.c.b16 %v995, %v994
  %v1343 = vpack.c.b16 %v997, %v996
  %v1344 = vpack.c.b16 %v999, %v998
  %v1345 = vpack.c.b16 %v1001, %v1000
  %v1346 = vpack.c.b16 %v1003, %v1002
  %v1347 = vpack.c.b16 %v1005, %v1004
  %v1348 = vpack.c.b16 %v1007, %v1006
  %v1349 = vpack.c.b16 %v1009, %v1008
  %v1350 = vpack.c.b16 %v1011, %v1010
  %v1351 = vpack.c.b16 %v1013, %v1012
  %v1352 = vpack.c.b16 %v1015, %v1014
  %v1353 = vpack.c.b16 %v1017, %v1016
  %v1354 = vpack.c.b16 %v1019, %v1018
  %v1355 = vpack.c.b16 %v1021, %v1020
  %v1356 = vpack.c.b16 %v1023, %v1022
  %v1357 = vpack.c.b16 %v1025, %v1024
  %v1358 = vpack.c.b16 %v1027, %v1026
  %v1359 = vpack.c.b16 %v1029, %v1028
  %v1360 = vpack.c.b16 %v1031, %v1030
  %v1361 = vpack.c.b16 %v1033, %v1032
  %v1362 = vpack.c.b16 %v1035, %v1034
  %v1363 = vpack.c.b16 %v1037, %v1036
  %v1364 = vpack.c.b16 %v1039, %v1038
  %v1365 = vpack.c.b16 %v1041, %v1040
  %v1366 = vpack.c.b16 %v1043, %v1042
  %v1367 = vpack.c.b16 %v1045, %v1044
  %v1368 = vpack.c.b16 %v1047, %v1046
  %v1369 = vpack.c.b16 %v1049, %v1048
  %v1370 = vpack.c.b16 %v1051, %v1050
  %v1371 = vpack.c.b16 %v1053, %v1052
  %v1372 = vpack.c.b16 %v1055, %v1054
  %v1373 = vpack.c.b16 %v1057, %v1056
  %v1374 = vpack.c.b16 %v1059, %v1058
  %v1375 = vpack.c.b16 %v1061, %v1060
  %v1376 = vpack.c.b16 %v1063, %v1062
  %v1377 = vpack.c.b16 %v1065, %v1064
  %v1378 = vpack.c.b16 %v1067, %v1066
  %v1379 = vpack.c.b16 %v1069, %v1068
  %v1380 = vpack.c.b16 %v1071, %v1070
  %v1381 = vpack.c.b16 %v1073, %v1072
  %v1382 = vpack.c.b16 %v1075, %v1074
  %v1383 = vpack.c.b16 %v1077, %v1076
  %v1384 = vpack.c.b16 %v1079, %v1078
  %v1385 = vpack.c.b16 %v1081, %v1080
  %v1386 = vpack.c.b16 %v1083, %v1082
  %v1387 = vpack.c.b16 %v1085, %v1084
  %v1388 = vpack.c.b16 %v1087, %v1086
  %v1389 = vpack.c.b16 %v1089, %v1088
  %v1390 = vpack.c.b16 %v1091, %v1090
  %v1391 = vpack.c.b16 %v1093, %v1092
  %v1392 = vpack.c.b16 %v1095, %v1094
  %v1393 = vpack.c.b16 %v1097, %v1096
  %v1394 = vpack.c.b16 %v1099, %v1098
  %v1395 = vpack.c.b16 %v1101, %v1100
  %v1396 = vpack.c.b16 %v1103, %v1102
  %v1397 = vpack.c.b16 %v1105, %v1104
  %v1398 = vpack.c.b16 %v1107, %v1106
  %v1399 = vpack.c.b16 %v1109, %v1108
  %v1400 = vpack.c.b16 %v1111, %v1110
  %v1401 = vpack.c.b16 %v1113, %v1112
  %v1402 = vpack.c.b16 %v1115, %v1114
  %v1403 = vpack.c.b16 %v1117, %v1116
  %v1404 = vpack.c.b16 %v1119, %v1118
  %v1405 = vpack.c.b16 %v1121, %v1120
  %v1406 = vpack.c.b16 %v1123, %v1122
  %v1407 = vpack.c.b16 %v1125, %v1124
  %v1408 = vpack.c.b16 %v1127, %v1126
  %v1409 = vpack.c.b16 %v1129, %v1128
  %v1410 = vpack.c.b16 %v1131, %v1130
  %v1411 = vpack.c.b16 %v1133, %v1132
  %v1412 = vpack.c.b16 %v1135, %v1134
  %v1413 = vpack.c.b16 %v1137, %v1136
  %v1414 = vpack.c.b16 %v1139, %v1138
  %v1415 = vpack.c.b16 %v1141, %v1140
  %v1416 = vpack.c.b16 %v1143, %v1142
  %v1417 = vpack.c.b16 %v1145, %v1144
  %v1418 = vpack.c.b16 %v1147, %v1146
  %v1419 = vpack.c.b16 %v1149, %v1148
  %v1420 = vpack.c.b16 %v1151, %v1150
  %v1421 = vpack.c.b16 %v1153, %v1152
  %v1422 = vpack.c.b16 %v1155, %v1154
  %v1423 = vpack.c.b16 %v1157, %v1156
  %v1424 = vpack.c.b16 %v1159, %v1158
  %v1425 = vpack.c.b16 %v1161, %v1160
  %v1426 = vpack.c.b16 %v1163, %v1162
  %v1427 = vpack.c.b16 %v1165, %v1164
  %v1428 = vpack.c.b16 %v1167, %v1166
  %v1429 = vpack.c.b16 %v1169, %v1168
  %v1430 = vpack.c.b16 %v1171, %v1170
  %v1431 = vpack.c.b16 %v1173, %v1172
  %v1432 = vpack.c.b16 %v1175, %v1174
  %v1433 = vpack.c.b16 %v1177, %v1176
  %v1434 = vpack.c.b16 %v1179, %v1178
  %v1435 = vpack.c.b16 %v1181, %v1180
  %v1436 = vpack.c.b16 %v1183, %v1182
  %v1437 = vpack.c.b16 %v1185, %v1184
  %v1438 = vpack.c.b16 %v1187, %v1186
  %v1439 = vpack.c.b16 %v1189, %v1188
  %v1440 = vpack.c.b16 %v1191, %v1190
  %v1441 = vpack.c.b16 %v1193, %v1192
  %v1442 = vpack.c.b16 %v1195, %v1194
  %v1443 = vpack.c.b16 %v1197, %v1196
  %v1444 = vpack.c.b16 %v1199, %v1198
  %v1445 = vpack.c.b16 %v1201, %v1200
  %v1446 = vpack.c.b16 %v1203, %v1202
  %v1447 = vpack.c.b16 %v1205, %v1204
  %v1448 = vpack.c.b16 %v1207, %v1206
  %v1449 = vpack.c.b16 %v1209, %v1208
  %v1450 = vpack.c.b16 %v1211, %v1210
  %v1451 = vpack.c.b16 %v1213, %v1212
  %v1452 = vpack.c.b16 %v1215, %v1214
  %v1453 = vpack.c.b16 %v1217, %v1216
  %v1454 = vpack.c.b16 %v1219, %v1218
  %v1455 = vpack.c.b16 %v1221, %v1220
  %v1456 = vpack.c.b16 %v1223, %v1222
  %v1457 = vpack.c.b16 %v1225, %v1224
  %v1458 = vpack.c.b16 %v1227, %v1226
  %v1459 = vpack.c.b16 %v1229, %v1228
  %v1460 = vpack.c.b16 %v1231, %v1230
  %v1461 = vpack.c.b16 %v1233, %v1232
  %v1462 = vpack.c.b16 %v1235, %v1234
  %v1463 = vpack.c.b16 %v1237, %v1236
  %v1464 = vpack.c.b16 %v1239, %v1238
  %v1465 = vpack.c.b16 %v1241, %v1240
  %v1466 = vpack.c.b16 %v1243, %v1242
  %v1467 = vpack.c.b16 %v1245, %v1244
  %v1468 = vpack.c.b16 %v1247, %v1246
  %v1469 = vpack.c.b16 %v1249, %v1248
  %v1470 = vpack.c.b16 %v1251, %v1250
  %v1471 = vpack.c.b16 %v1253, %v1252
  %v1472 = vpack.c.b16 %v1255, %v1254
  %v1473 = vpack.c.b16 %v1257, %v1256
  %v1474 = vpack.c.b16 %v1259, %v1258
  %v1475 = vpack.c.b16 %v1261, %v1260
  %v1476 = vpack.c.b16 %v1263, %v1262
  %v1477 = vpack.c.b16 %v1265, %v1264
  %v1478 = vpack.c.b16 %v1267, %v1266
  %v1479 = vpack.c.b16 %v1269, %v1268
  %v1480 = vpack.c.b16 %v1271, %v1270
  %v1481 = vpack.c.b16 %v1273, %v1272
  %v1482 = vpack.c.b16 %v1275, %v1274
  %v1483 = vpack.c.b16 %v1277, %v1276
  %v1484 = vpack.c.b16 %v1279, %v1278
  %v1485 = vpack.c.b16 %v1281, %v1280
  %v1486 = vpack.c.b16 %v1283, %v1282
  %v1487 = vpack.c.b16 %v1285, %v1284
  %v1488 = vpack.c.b16 %v1287, %v1286
  %v1489 = vpack.c.b16 %v1289, %v1288
  %v1490 = vpack.c.b16 %v1291, %v1290
  %v1491 = vpack.c.b16 %v1293, %v1292
  %v1492 = vpack.c.b16 %v1295, %v1294
  %v1493 = vpack.c.b16 %v1297, %v1296
  %vm1690 = vcmask 523264
  %v1692 = vsel %vm1690, %v489, 0
  %1694 = vmatprep.subr.bf16.mxu0 0
  %1695 = vmatpush1.bf16.msra.mxu0 %v1298
  %1696 = vmatprep.subr.bf16.mxu0 0
  %1697 = vmatpush1.bf16.msra.mxu0 %v1299
  %1698 = vmatprep.subr.bf16.mxu0 0
  %1699 = vmatpush1.bf16.msra.mxu0 %v1300
  %1700 = vmatprep.subr.bf16.mxu0 0
  %1701 = vmatpush1.bf16.msra.mxu0 %v1301
  %1702 = vmatprep.subr.bf16.mxu0 0
  %1703 = vmatpush1.bf16.msra.mxu0 %v1302
  %1704 = vmatprep.subr.bf16.mxu0 0
  %1705 = vmatpush1.bf16.msra.mxu0 %v1303
  %1706 = vmatprep.subr.bf16.mxu0 0
  %1707 = vmatpush1.bf16.msra.mxu0 %v1304
  %1708 = vmatprep.subr.bf16.mxu0 0
  %1709 = vmatpush1.bf16.msra.mxu0 %v1305
  %1710 = vmatprep.subr.bf16.mxu0 0
  %1711 = vmatpush1.bf16.msra.mxu0 %v1306
  %1712 = vmatprep.subr.bf16.mxu0 0
  %1713 = vmatpush1.bf16.msra.mxu0 %v1307
  %1714 = vmatprep.subr.bf16.mxu0 0
  %1715 = vmatpush1.bf16.msra.mxu0 %v1308
  %1716 = vmatprep.subr.bf16.mxu0 0
  %1717 = vmatpush1.bf16.msra.mxu0 %v1309
  %1718 = vmatprep.subr.bf16.mxu0 0
  %1719 = vmatpush1.bf16.msra.mxu0 %v1310
  %1720 = vmatprep.subr.bf16.mxu0 0
  %1721 = vmatpush1.bf16.msra.mxu0 %v1311
  %1722 = vmatprep.subr.bf16.mxu0 0
  %1723 = vmatpush1.bf16.msra.mxu0 %v1312
  %1724 = vmatprep.subr.bf16.mxu0 0
  %1725 = vmatpush1.bf16.msra.mxu0 %v1313
  %1726 = vmatprep.mubr.bf16.mxu0 %v466
  %1727 = vmatmul.mubr.bf16.gmra.mrb[0].mxu0 %v465
  %v1728 = vpop.f32.mrb[0].mxu0
  %v1729 = vadd.f32 %v425, %v1728
  %v1730 = vpop.f32.mrb[0].mxu0
  %v1731 = vpop.f32.mrb[0].mxu0
  %v1732 = vpop.f32.mrb[0].mxu0
  %1733 = vdwg.mxu0
  %1734 = vmatprep.subr.bf16.mxu0 0
  %1735 = vmatpush1.bf16.msra.mxu0 %v1314
  %1736 = vmatprep.subr.bf16.mxu0 0
  %1737 = vmatpush1.bf16.msra.mxu0 %v1315
  %1738 = vmatprep.subr.bf16.mxu0 0
  %1739 = vmatpush1.bf16.msra.mxu0 %v1316
  %1740 = vmatprep.subr.bf16.mxu0 0
  %1741 = vmatpush1.bf16.msra.mxu0 %v1317
  %1742 = vmatprep.subr.bf16.mxu0 0
  %1743 = vmatpush1.bf16.msra.mxu0 %v1318
  %1744 = vmatprep.subr.bf16.mxu0 0
  %1745 = vmatpush1.bf16.msra.mxu0 %v1319
  %1746 = vmatprep.subr.bf16.mxu0 0
  %1747 = vmatpush1.bf16.msra.mxu0 %v1320
  %1748 = vmatprep.subr.bf16.mxu0 0
  %1749 = vmatpush1.bf16.msra.mxu0 %v1321
  %1750 = vmatprep.subr.bf16.mxu0 0
  %1751 = vmatpush1.bf16.msra.mxu0 %v1322
  %1752 = vmatprep.subr.bf16.mxu0 0
  %1753 = vmatpush1.bf16.msra.mxu0 %v1323
  %1754 = vmatprep.subr.bf16.mxu0 0
  %1755 = vmatpush1.bf16.msra.mxu0 %v1324
  %1756 = vmatprep.subr.bf16.mxu0 0
  %1757 = vmatpush1.bf16.msra.mxu0 %v1325
  %1758 = vmatprep.subr.bf16.mxu0 0
  %1759 = vmatpush1.bf16.msra.mxu0 %v1326
  %1760 = vmatprep.subr.bf16.mxu0 0
  %1761 = vmatpush1.bf16.msra.mxu0 %v1327
  %1762 = vmatprep.subr.bf16.mxu0 0
  %1763 = vmatpush1.bf16.msra.mxu0 %v1328
  %1764 = vmatprep.subr.bf16.mxu0 0
  %1765 = vmatpush1.bf16.msra.mxu0 %v1329
  %1766 = vmatprep.mubr.bf16.mxu0 %v468
  %1767 = vmatmul.mubr.bf16.gmra.mrb[0].mxu0 %v467
  %v1768 = vpop.f32.mrb[0].mxu0
  %v1769 = vadd.f32 %v1729, %v1768
  %v1770 = vpop.f32.mrb[0].mxu0
  %v1771 = vpop.f32.mrb[0].mxu0
  %v1772 = vpop.f32.mrb[0].mxu0
  %1773 = vdwg.mxu0
  %1774 = vmatprep.subr.bf16.mxu0 0
  %1775 = vmatpush1.bf16.msra.mxu0 %v1330
  %1776 = vmatprep.subr.bf16.mxu0 0
  %1777 = vmatpush1.bf16.msra.mxu0 %v1331
  %1778 = vmatprep.subr.bf16.mxu0 0
  %1779 = vmatpush1.bf16.msra.mxu0 %v1332
  %1780 = vmatprep.subr.bf16.mxu0 0
  %1781 = vmatpush1.bf16.msra.mxu0 %v1333
  %1782 = vmatprep.subr.bf16.mxu0 0
  %1783 = vmatpush1.bf16.msra.mxu0 %v1334
  %1784 = vmatprep.subr.bf16.mxu0 0
  %1785 = vmatpush1.bf16.msra.mxu0 %v1335
  %1786 = vmatprep.subr.bf16.mxu0 0
  %1787 = vmatpush1.bf16.msra.mxu0 %v1336
  %1788 = vmatprep.subr.bf16.mxu0 0
  %1789 = vmatpush1.bf16.msra.mxu0 %v1337
  %1790 = vmatprep.subr.bf16.mxu0 0
  %1791 = vmatpush1.bf16.msra.mxu0 %v1338
  %1792 = vmatprep.subr.bf16.mxu0 0
  %1793 = vmatpush1.bf16.msra.mxu0 %v1339
  %1794 = vmatprep.subr.bf16.mxu0 0
  %1795 = vmatpush1.bf16.msra.mxu0 %v1340
  %1796 = vmatprep.subr.bf16.mxu0 0
  %1797 = vmatpush1.bf16.msra.mxu0 %v1341
  %1798 = vmatprep.subr.bf16.mxu0 0
  %1799 = vmatpush1.bf16.msra.mxu0 %v1342
  %1800 = vmatprep.subr.bf16.mxu0 0
  %1801 = vmatpush1.bf16.msra.mxu0 %v1343
  %1802 = vmatprep.subr.bf16.mxu0 0
  %1803 = vmatpush1.bf16.msra.mxu0 %v1344
  %1804 = vmatprep.subr.bf16.mxu0 0
  %1805 = vmatpush1.bf16.msra.mxu0 %v1345
  %1806 = vmatprep.mubr.bf16.mxu0 %v470
  %1807 = vmatmul.mubr.bf16.gmra.mrb[0].mxu0 %v469
  %v1808 = vpop.f32.mrb[0].mxu0
  %v1809 = vadd.f32 %v1769, %v1808
  %v1810 = vpop.f32.mrb[0].mxu0
  %v1811 = vpop.f32.mrb[0].mxu0
  %v1812 = vpop.f32.mrb[0].mxu0
  %1813 = vdwg.mxu0
  %1814 = vmatprep.subr.bf16.mxu0 0
  %1815 = vmatpush1.bf16.msra.mxu0 %v1346
  %1816 = vmatprep.subr.bf16.mxu0 0
  %1817 = vmatpush1.bf16.msra.mxu0 %v1347
  %1818 = vmatprep.subr.bf16.mxu0 0
  %1819 = vmatpush1.bf16.msra.mxu0 %v1348
  %1820 = vmatprep.subr.bf16.mxu0 0
  %1821 = vmatpush1.bf16.msra.mxu0 %v1349
  %1822 = vmatprep.subr.bf16.mxu0 0
  %1823 = vmatpush1.bf16.msra.mxu0 %v1350
  %1824 = vmatprep.subr.bf16.mxu0 0
  %1825 = vmatpush1.bf16.msra.mxu0 %v1351
  %1826 = vmatprep.subr.bf16.mxu0 0
  %1827 = vmatpush1.bf16.msra.mxu0 %v1352
  %1828 = vmatprep.subr.bf16.mxu0 0
  %1829 = vmatpush1.bf16.msra.mxu0 %v1353
  %1830 = vmatprep.subr.bf16.mxu0 0
  %1831 = vmatpush1.bf16.msra.mxu0 %v1354
  %1832 = vmatprep.subr.bf16.mxu0 0
  %1833 = vmatpush1.bf16.msra.mxu0 %v1355
  %1834 = vmatprep.subr.bf16.mxu0 0
  %1835 = vmatpush1.bf16.msra.mxu0 %v1356
  %1836 = vmatprep.subr.bf16.mxu0 0
  %1837 = vmatpush1.bf16.msra.mxu0 %v1357
  %1838 = vmatprep.subr.bf16.mxu0 0
  %1839 = vmatpush1.bf16.msra.mxu0 %v1358
  %1840 = vmatprep.subr.bf16.mxu0 0
  %1841 = vmatpush1.bf16.msra.mxu0 %v1359
  %1842 = vmatprep.subr.bf16.mxu0 0
  %1843 = vmatpush1.bf16.msra.mxu0 %v1360
  %1844 = vmatprep.subr.bf16.mxu0 0
  %1845 = vmatpush1.bf16.msra.mxu0 %v1361
  %1846 = vmatprep.mubr.bf16.mxu0 %v472
  %1847 = vmatmul.mubr.bf16.gmra.mrb[0].mxu0 %v471
  %v1848 = vpop.f32.mrb[0].mxu0
  %v1849 = vadd.f32 %v1809, %v1848
  %v1850 = vpop.f32.mrb[0].mxu0
  %v1851 = vpop.f32.mrb[0].mxu0
  %v1852 = vpop.f32.mrb[0].mxu0
  %1853 = vdwg.mxu0
  %1854 = vmatprep.subr.bf16.mxu0 0
  %1855 = vmatpush1.bf16.msra.mxu0 %v1362
  %1856 = vmatprep.subr.bf16.mxu0 0
  %1857 = vmatpush1.bf16.msra.mxu0 %v1363
  %1858 = vmatprep.subr.bf16.mxu0 0
  %1859 = vmatpush1.bf16.msra.mxu0 %v1364
  %1860 = vmatprep.subr.bf16.mxu0 0
  %1861 = vmatpush1.bf16.msra.mxu0 %v1365
  %1862 = vmatprep.subr.bf16.mxu0 0
  %1863 = vmatpush1.bf16.msra.mxu0 %v1366
  %1864 = vmatprep.subr.bf16.mxu0 0
  %1865 = vmatpush1.bf16.msra.mxu0 %v1367
  %1866 = vmatprep.subr.bf16.mxu0 0
  %1867 = vmatpush1.bf16.msra.mxu0 %v1368
  %1868 = vmatprep.subr.bf16.mxu0 0
  %1869 = vmatpush1.bf16.msra.mxu0 %v1369
  %1870 = vmatprep.subr.bf16.mxu0 0
  %1871 = vmatpush1.bf16.msra.mxu0 %v1370
  %1872 = vmatprep.subr.bf16.mxu0 0
  %1873 = vmatpush1.bf16.msra.mxu0 %v1371
  %1874 = vmatprep.subr.bf16.mxu0 0
  %1875 = vmatpush1.bf16.msra.mxu0 %v1372
  %1876 = vmatprep.subr.bf16.mxu0 0
  %1877 = vmatpush1.bf16.msra.mxu0 %v1373
  %1878 = vmatprep.subr.bf16.mxu0 0
  %1879 = vmatpush1.bf16.msra.mxu0 %v1374
  %1880 = vmatprep.subr.bf16.mxu0 0
  %1881 = vmatpush1.bf16.msra.mxu0 %v1375
  %1882 = vmatprep.subr.bf16.mxu0 0
  %1883 = vmatpush1.bf16.msra.mxu0 %v1376
  %1884 = vmatprep.subr.bf16.mxu0 0
  %1885 = vmatpush1.bf16.msra.mxu0 %v1377
  %1886 = vmatprep.mubr.bf16.mxu0 %v474
  %1887 = vmatmul.mubr.bf16.gmra.mrb[0].mxu0 %v473
  %v1888 = vpop.f32.mrb[0].mxu0
  %v1889 = vadd.f32 %v1849, %v1888
  %v1890 = vpop.f32.mrb[0].mxu0
  %v1891 = vpop.f32.mrb[0].mxu0
  %v1892 = vpop.f32.mrb[0].mxu0
  %1893 = vdwg.mxu0
  %1894 = vmatprep.subr.bf16.mxu0 0
  %1895 = vmatpush1.bf16.msra.mxu0 %v1378
  %1896 = vmatprep.subr.bf16.mxu0 0
  %1897 = vmatpush1.bf16.msra.mxu0 %v1379
  %1898 = vmatprep.subr.bf16.mxu0 0
  %1899 = vmatpush1.bf16.msra.mxu0 %v1380
  %1900 = vmatprep.subr.bf16.mxu0 0
  %1901 = vmatpush1.bf16.msra.mxu0 %v1381
  %1902 = vmatprep.subr.bf16.mxu0 0
  %1903 = vmatpush1.bf16.msra.mxu0 %v1382
  %1904 = vmatprep.subr.bf16.mxu0 0
  %1905 = vmatpush1.bf16.msra.mxu0 %v1383
  %1906 = vmatprep.subr.bf16.mxu0 0
  %1907 = vmatpush1.bf16.msra.mxu0 %v1384
  %1908 = vmatprep.subr.bf16.mxu0 0
  %1909 = vmatpush1.bf16.msra.mxu0 %v1385
  %1910 = vmatprep.subr.bf16.mxu0 0
  %1911 = vmatpush1.bf16.msra.mxu0 %v1386
  %1912 = vmatprep.subr.bf16.mxu0 0
  %1913 = vmatpush1.bf16.msra.mxu0 %v1387
  %1914 = vmatprep.subr.bf16.mxu0 0
  %1915 = vmatpush1.bf16.msra.mxu0 %v1388
  %1916 = vmatprep.subr.bf16.mxu0 0
  %1917 = vmatpush1.bf16.msra.mxu0 %v1389
  %1918 = vmatprep.subr.bf16.mxu0 0
  %1919 = vmatpush1.bf16.msra.mxu0 %v1390
  %1920 = vmatprep.subr.bf16.mxu0 0
  %1921 = vmatpush1.bf16.msra.mxu0 %v1391
  %1922 = vmatprep.subr.bf16.mxu0 0
  %1923 = vmatpush1.bf16.msra.mxu0 %v1392
  %1924 = vmatprep.subr.bf16.mxu0 0
  %1925 = vmatpush1.bf16.msra.mxu0 %v1393
  %1926 = vmatprep.mubr.bf16.mxu0 %v476
  %1927 = vmatmul.mubr.bf16.gmra.mrb[0].mxu0 %v475
  %v1928 = vpop.f32.mrb[0].mxu0
  %v1929 = vadd.f32 %v1889, %v1928
  %v1930 = vpop.f32.mrb[0].mxu0
  %v1931 = vpop.f32.mrb[0].mxu0
  %v1932 = vpop.f32.mrb[0].mxu0
  %1933 = vdwg.mxu0
  %1934 = vmatprep.subr.bf16.mxu0 0
  %1935 = vmatpush1.bf16.msra.mxu0 %v1394
  %1936 = vmatprep.subr.bf16.mxu0 0
  %1937 = vmatpush1.bf16.msra.mxu0 %v1395
  %1938 = vmatprep.subr.bf16.mxu0 0
  %1939 = vmatpush1.bf16.msra.mxu0 %v1396
  %1940 = vmatprep.subr.bf16.mxu0 0
  %1941 = vmatpush1.bf16.msra.mxu0 %v1397
  %1942 = vmatprep.subr.bf16.mxu0 0
  %1943 = vmatpush1.bf16.msra.mxu0 %v1398
  %1944 = vmatprep.subr.bf16.mxu0 0
  %1945 = vmatpush1.bf16.msra.mxu0 %v1399
  %1946 = vmatprep.subr.bf16.mxu0 0
  %1947 = vmatpush1.bf16.msra.mxu0 %v1400
  %1948 = vmatprep.subr.bf16.mxu0 0
  %1949 = vmatpush1.bf16.msra.mxu0 %v1401
  %1950 = vmatprep.subr.bf16.mxu0 0
  %1951 = vmatpush1.bf16.msra.mxu0 %v1402
  %1952 = vmatprep.subr.bf16.mxu0 0
  %1953 = vmatpush1.bf16.msra.mxu0 %v1403
  %1954 = vmatprep.subr.bf16.mxu0 0
  %1955 = vmatpush1.bf16.msra.mxu0 %v1404
  %1956 = vmatprep.subr.bf16.mxu0 0
  %1957 = vmatpush1.bf16.msra.mxu0 %v1405
  %1958 = vmatprep.subr.bf16.mxu0 0
  %1959 = vmatpush1.bf16.msra.mxu0 %v1406
  %1960 = vmatprep.subr.bf16.mxu0 0
  %1961 = vmatpush1.bf16.msra.mxu0 %v1407
  %1962 = vmatprep.subr.bf16.mxu0 0
  %1963 = vmatpush1.bf16.msra.mxu0 %v1408
  %1964 = vmatprep.subr.bf16.mxu0 0
  %1965 = vmatpush1.bf16.msra.mxu0 %v1409
  %1966 = vmatprep.mubr.bf16.mxu0 %v478
  %1967 = vmatmul.mubr.bf16.gmra.mrb[0].mxu0 %v477
  %v1968 = vpop.f32.mrb[0].mxu0
  %v1969 = vadd.f32 %v1929, %v1968
  %v1970 = vpop.f32.mrb[0].mxu0
  %v1971 = vpop.f32.mrb[0].mxu0
  %v1972 = vpop.f32.mrb[0].mxu0
  %1973 = vdwg.mxu0
  %1974 = vmatprep.subr.bf16.mxu0 0
  %1975 = vmatpush1.bf16.msra.mxu0 %v1410
  %1976 = vmatprep.subr.bf16.mxu0 0
  %1977 = vmatpush1.bf16.msra.mxu0 %v1411
  %1978 = vmatprep.subr.bf16.mxu0 0
  %1979 = vmatpush1.bf16.msra.mxu0 %v1412
  %1980 = vmatprep.subr.bf16.mxu0 0
  %1981 = vmatpush1.bf16.msra.mxu0 %v1413
  %1982 = vmatprep.subr.bf16.mxu0 0
  %1983 = vmatpush1.bf16.msra.mxu0 %v1414
  %1984 = vmatprep.subr.bf16.mxu0 0
  %1985 = vmatpush1.bf16.msra.mxu0 %v1415
  %1986 = vmatprep.subr.bf16.mxu0 0
  %1987 = vmatpush1.bf16.msra.mxu0 %v1416
  %1988 = vmatprep.subr.bf16.mxu0 0
  %1989 = vmatpush1.bf16.msra.mxu0 %v1417
  %1990 = vmatprep.subr.bf16.mxu0 0
  %1991 = vmatpush1.bf16.msra.mxu0 %v1418
  %1992 = vmatprep.subr.bf16.mxu0 0
  %1993 = vmatpush1.bf16.msra.mxu0 %v1419
  %1994 = vmatprep.subr.bf16.mxu0 0
  %1995 = vmatpush1.bf16.msra.mxu0 %v1420
  %1996 = vmatprep.subr.bf16.mxu0 0
  %1997 = vmatpush1.bf16.msra.mxu0 %v1421
  %1998 = vmatprep.subr.bf16.mxu0 0
  %1999 = vmatpush1.bf16.msra.mxu0 %v1422
  %2000 = vmatprep.subr.bf16.mxu0 0
  %2001 = vmatpush1.bf16.msra.mxu0 %v1423
  %2002 = vmatprep.subr.bf16.mxu0 0
  %2003 = vmatpush1.bf16.msra.mxu0 %v1424
  %2004 = vmatprep.subr.bf16.mxu0 0
  %2005 = vmatpush1.bf16.msra.mxu0 %v1425
  %2006 = vmatprep.mubr.bf16.mxu0 %v480
  %2007 = vmatmul.mubr.bf16.gmra.mrb[0].mxu0 %v479
  %v2008 = vpop.f32.mrb[0].mxu0
  %v2009 = vadd.f32 %v1969, %v2008
  %v2010 = vpop.f32.mrb[0].mxu0
  %v2011 = vpop.f32.mrb[0].mxu0
  %v2012 = vpop.f32.mrb[0].mxu0
  %2013 = vdwg.mxu0
  %2014 = vmatprep.subr.bf16.mxu0 0
  %2015 = vmatpush1.bf16.msra.mxu0 %v1426
  %2016 = vmatprep.subr.bf16.mxu0 0
  %2017 = vmatpush1.bf16.msra.mxu0 %v1427
  %2018 = vmatprep.subr.bf16.mxu0 0
  %2019 = vmatpush1.bf16.msra.mxu0 %v1428
  %2020 = vmatprep.subr.bf16.mxu0 0
  %2021 = vmatpush1.bf16.msra.mxu0 %v1429
  %2022 = vmatprep.subr.bf16.mxu0 0
  %2023 = vmatpush1.bf16.msra.mxu0 %v1430
  %2024 = vmatprep.subr.bf16.mxu0 0
  %2025 = vmatpush1.bf16.msra.mxu0 %v1431
  %2026 = vmatprep.subr.bf16.mxu0 0
  %2027 = vmatpush1.bf16.msra.mxu0 %v1432
  %2028 = vmatprep.subr.bf16.mxu0 0
  %2029 = vmatpush1.bf16.msra.mxu0 %v1433
  %2030 = vmatprep.subr.bf16.mxu0 0
  %2031 = vmatpush1.bf16.msra.mxu0 %v1434
  %2032 = vmatprep.subr.bf16.mxu0 0
  %2033 = vmatpush1.bf16.msra.mxu0 %v1435
  %2034 = vmatprep.subr.bf16.mxu0 0
  %2035 = vmatpush1.bf16.msra.mxu0 %v1436
  %2036 = vmatprep.subr.bf16.mxu0 0
  %2037 = vmatpush1.bf16.msra.mxu0 %v1437
  %2038 = vmatprep.subr.bf16.mxu0 0
  %2039 = vmatpush1.bf16.msra.mxu0 %v1438
  %2040 = vmatprep.subr.bf16.mxu0 0
  %2041 = vmatpush1.bf16.msra.mxu0 %v1439
  %2042 = vmatprep.subr.bf16.mxu0 0
  %2043 = vmatpush1.bf16.msra.mxu0 %v1440
  %2044 = vmatprep.subr.bf16.mxu0 0
  %2045 = vmatpush1.bf16.msra.mxu0 %v1441
  %2046 = vmatprep.mubr.bf16.mxu0 %v482
  %2047 = vmatmul.mubr.bf16.gmra.mrb[0].mxu0 %v481
  %v2048 = vpop.f32.mrb[0].mxu0
  %v2049 = vadd.f32 %v2009, %v2048
  %v2050 = vpop.f32.mrb[0].mxu0
  %v2051 = vpop.f32.mrb[0].mxu0
  %v2052 = vpop.f32.mrb[0].mxu0
  %2053 = vdwg.mxu0
  %2054 = vmatprep.subr.bf16.mxu0 0
  %2055 = vmatpush1.bf16.msra.mxu0 %v1442
  %2056 = vmatprep.subr.bf16.mxu0 0
  %2057 = vmatpush1.bf16.msra.mxu0 %v1443
  %2058 = vmatprep.subr.bf16.mxu0 0
  %2059 = vmatpush1.bf16.msra.mxu0 %v1444
  %2060 = vmatprep.subr.bf16.mxu0 0
  %2061 = vmatpush1.bf16.msra.mxu0 %v1445
  %2062 = vmatprep.subr.bf16.mxu0 0
  %2063 = vmatpush1.bf16.msra.mxu0 %v1446
  %2064 = vmatprep.subr.bf16.mxu0 0
  %2065 = vmatpush1.bf16.msra.mxu0 %v1447
  %2066 = vmatprep.subr.bf16.mxu0 0
  %2067 = vmatpush1.bf16.msra.mxu0 %v1448
  %2068 = vmatprep.subr.bf16.mxu0 0
  %2069 = vmatpush1.bf16.msra.mxu0 %v1449
  %2070 = vmatprep.subr.bf16.mxu0 0
  %2071 = vmatpush1.bf16.msra.mxu0 %v1450
  %2072 = vmatprep.subr.bf16.mxu0 0
  %2073 = vmatpush1.bf16.msra.mxu0 %v1451
  %2074 = vmatprep.subr.bf16.mxu0 0
  %2075 = vmatpush1.bf16.msra.mxu0 %v1452
  %2076 = vmatprep.subr.bf16.mxu0 0
  %2077 = vmatpush1.bf16.msra.mxu0 %v1453
  %2078 = vmatprep.subr.bf16.mxu0 0
  %2079 = vmatpush1.bf16.msra.mxu0 %v1454
  %2080 = vmatprep.subr.bf16.mxu0 0
  %2081 = vmatpush1.bf16.msra.mxu0 %v1455
  %2082 = vmatprep.subr.bf16.mxu0 0
  %2083 = vmatpush1.bf16.msra.mxu0 %v1456
  %2084 = vmatprep.subr.bf16.mxu0 0
  %2085 = vmatpush1.bf16.msra.mxu0 %v1457
  %2086 = vmatprep.mubr.bf16.mxu0 %v484
  %2087 = vmatmul.mubr.bf16.gmra.mrb[0].mxu0 %v483
  %v2088 = vpop.f32.mrb[0].mxu0
  %v2089 = vadd.f32 %v2049, %v2088
  %v2090 = vpop.f32.mrb[0].mxu0
  %v2091 = vpop.f32.mrb[0].mxu0
  %v2092 = vpop.f32.mrb[0].mxu0
  %2093 = vdwg.mxu0
  %2094 = vmatprep.subr.bf16.mxu0 0
  %2095 = vmatpush1.bf16.msra.mxu0 %v1458
  %2096 = vmatprep.subr.bf16.mxu0 0
  %2097 = vmatpush1.bf16.msra.mxu0 %v1459
  %2098 = vmatprep.subr.bf16.mxu0 0
  %2099 = vmatpush1.bf16.msra.mxu0 %v1460
  %2100 = vmatprep.subr.bf16.mxu0 0
  %2101 = vmatpush1.bf16.msra.mxu0 %v1461
  %2102 = vmatprep.subr.bf16.mxu0 0
  %2103 = vmatpush1.bf16.msra.mxu0 %v1462
  %2104 = vmatprep.subr.bf16.mxu0 0
  %2105 = vmatpush1.bf16.msra.mxu0 %v1463
  %2106 = vmatprep.subr.bf16.mxu0 0
  %2107 = vmatpush1.bf16.msra.mxu0 %v1464
  %2108 = vmatprep.subr.bf16.mxu0 0
  %2109 = vmatpush1.bf16.msra.mxu0 %v1465
  %2110 = vmatprep.subr.bf16.mxu0 0
  %2111 = vmatpush1.bf16.msra.mxu0 %v1466
  %2112 = vmatprep.subr.bf16.mxu0 0
  %2113 = vmatpush1.bf16.msra.mxu0 %v1467
  %2114 = vmatprep.subr.bf16.mxu0 0
  %2115 = vmatpush1.bf16.msra.mxu0 %v1468
  %2116 = vmatprep.subr.bf16.mxu0 0
  %2117 = vmatpush1.bf16.msra.mxu0 %v1469
  %2118 = vmatprep.subr.bf16.mxu0 0
  %2119 = vmatpush1.bf16.msra.mxu0 %v1470
  %2120 = vmatprep.subr.bf16.mxu0 0
  %2121 = vmatpush1.bf16.msra.mxu0 %v1471
  %2122 = vmatprep.subr.bf16.mxu0 0
  %2123 = vmatpush1.bf16.msra.mxu0 %v1472
  %2124 = vmatprep.subr.bf16.mxu0 0
  %2125 = vmatpush1.bf16.msra.mxu0 %v1473
  %2126 = vmatprep.mubr.bf16.mxu0 %v486
  %2127 = vmatmul.mubr.bf16.gmra.mrb[0].mxu0 %v485
  %v2128 = vpop.f32.mrb[0].mxu0
  %v2129 = vadd.f32 %v2089, %v2128
  %v2130 = vpop.f32.mrb[0].mxu0
  %v2131 = vpop.f32.mrb[0].mxu0
  %v2132 = vpop.f32.mrb[0].mxu0
  %2133 = vdwg.mxu0
  %2134 = vmatprep.subr.bf16.mxu0 0
  %2135 = vmatpush1.bf16.msra.mxu0 %v1474
  %2136 = vmatprep.subr.bf16.mxu0 0
  %2137 = vmatpush1.bf16.msra.mxu0 %v1475
  %2138 = vmatprep.subr.bf16.mxu0 0
  %2139 = vmatpush1.bf16.msra.mxu0 %v1476
  %2140 = vmatprep.subr.bf16.mxu0 0
  %2141 = vmatpush1.bf16.msra.mxu0 %v1477
  %2142 = vmatprep.subr.bf16.mxu0 0
  %2143 = vmatpush1.bf16.msra.mxu0 %v1478
  %2144 = vmatprep.subr.bf16.mxu0 0
  %2145 = vmatpush1.bf16.msra.mxu0 %v1479
  %2146 = vmatprep.subr.bf16.mxu0 0
  %2147 = vmatpush1.bf16.msra.mxu0 %v1480
  %2148 = vmatprep.subr.bf16.mxu0 0
  %2149 = vmatpush1.bf16.msra.mxu0 %v1481
  %2150 = vmatprep.subr.bf16.mxu0 0
  %2151 = vmatpush1.bf16.msra.mxu0 %v1482
  %2152 = vmatprep.subr.bf16.mxu0 0
  %2153 = vmatpush1.bf16.msra.mxu0 %v1483
  %2154 = vmatprep.subr.bf16.mxu0 0
  %2155 = vmatpush1.bf16.msra.mxu0 %v1484
  %2156 = vmatprep.subr.bf16.mxu0 0
  %2157 = vmatpush1.bf16.msra.mxu0 %v1485
  %2158 = vmatprep.subr.bf16.mxu0 0
  %2159 = vmatpush1.bf16.msra.mxu0 %v1486
  %2160 = vmatprep.subr.bf16.mxu0 0
  %2161 = vmatpush1.bf16.msra.mxu0 %v1487
  %2162 = vmatprep.subr.bf16.mxu0 0
  %2163 = vmatpush1.bf16.msra.mxu0 %v1488
  %2164 = vmatprep.subr.bf16.mxu0 0
  %2165 = vmatpush1.bf16.msra.mxu0 %v1489
  %2166 = vmatprep.mubr.bf16.mxu0 %v488
  %2167 = vmatmul.mubr.bf16.gmra.mrb[0].mxu0 %v487
  %v2168 = vpop.f32.mrb[0].mxu0
  %v2169 = vadd.f32 %v2129, %v2168
  %v2170 = vpop.f32.mrb[0].mxu0
  %v2171 = vpop.f32.mrb[0].mxu0
  %v2172 = vpop.f32.mrb[0].mxu0
  %2173 = vdwg.mxu0
  %2174 = vmatprep.subr.bf16.mxu0 0
  %2175 = vmatpush1.bf16.msra.mxu0 %v1490
  %2176 = vmatprep.subr.bf16.mxu0 0
  %2177 = vmatpush1.bf16.msra.mxu0 %v1491
  %2178 = vmatprep.subr.bf16.mxu0 0
  %2179 = vmatpush1.bf16.msra.mxu0 %v1492
  %2180 = vmatprep.subr.bf16.mxu0 0
  %2181 = vmatpush1.bf16.msra.mxu0 %v1493
  %2182 = vmatprep.subr.bf16.mxu0 0
  %2183 = vmatpush1.bf16.msra.mxu0 0
  %2184 = vmatprep.subr.bf16.mxu0 0
  %2185 = vmatpush1.bf16.msra.mxu0 0
  %2186 = vmatprep.subr.bf16.mxu0 0
  %2187 = vmatpush1.bf16.msra.mxu0 0
  %2188 = vmatprep.subr.bf16.mxu0 0
  %2189 = vmatpush1.bf16.msra.mxu0 0
  %2190 = vmatprep.subr.bf16.mxu0 0
  %2191 = vmatpush1.bf16.msra.mxu0 0
  %2192 = vmatprep.subr.bf16.mxu0 0
  %2193 = vmatpush1.bf16.msra.mxu0 0
  %2194 = vmatprep.subr.bf16.mxu0 0
  %2195 = vmatpush1.bf16.msra.mxu0 0
  %2196 = vmatprep.subr.bf16.mxu0 0
  %2197 = vmatpush1.bf16.msra.mxu0 0
  %2198 = vmatprep.subr.bf16.mxu0 0
  %2199 = vmatpush1.bf16.msra.mxu0 0
  %2200 = vmatprep.subr.bf16.mxu0 0
  %2201 = vmatpush1.bf16.msra.mxu0 0
  %2202 = vmatprep.subr.bf16.mxu0 0
  %2203 = vmatpush1.bf16.msra.mxu0 0
  %2204 = vmatprep.subr.bf16.mxu0 0
  %2205 = vmatpush1.bf16.msra.mxu0 0
  %2206 = vmatprep.mubr.bf16.mxu0 0
  %2207 = vmatmul.mubr.bf16.gmra.mrb[0].mxu0 %v1692
  %v2208 = vpop.f32.mrb[0].mxu0
  %v2209 = vadd.f32 %v2169, %v2208
  %v2210 = vpop.f32.mrb[0].mxu0
  %v2211 = vpop.f32.mrb[0].mxu0
  %v2212 = vpop.f32.mrb[0].mxu0
  %2213 = vdwg.mxu0
  %2214 = vst [vmem:[%s3] sm:$0xff] %v2209
  // Predicated region
  $region14: #{lenet_forward.3} parent=0 // pred_check
    _
  $region15: #{lenet_forward.3} parent=0 // pred_check_branch
    %2216 = sbr.rel (0) target = $region17
  $region16: #{lenet_forward.3} parent=0 // pred_region
    _
  $region17: #{lenet_forward.3} parent=0 // pred_fallthru
    _
  // Predicated region
  $region18: #{lenet_forward.3} parent=0 // pred_check
    _
  $region19: #{lenet_forward.3} parent=0 // pred_check_branch
    %2218 = sbr.rel (0) target = $region21
  $region20: #{lenet_forward.3} parent=0 // pred_region
    _
  $region21: #{lenet_forward.3} parent=0 // pred_fallthru
    _

</llo_original>
